<compile_context>
chip_gen: v7x
topology: tpu7x:2x2x1
jax: 0.10.0
libtpu: 0.0.40
codegen_flags: <defaults>
</compile_context>

<pallas_src>
import functools

import jax
import jax.numpy as jnp
from jax.experimental import pallas as pl
from jax.experimental.pallas import tpu as pltpu


EMBEDDING_DIM = 10      # embedding_dim in the module
FEATURE_COUNT = 13      # stand-in for self._sparse.feature_count (schema file)
VOCAB = 1000            # synthetic vocabulary size per table
HIDDEN = (1024, 512, 256)
EPS = 1e-5


def _wdl_kernel(x2_ref, x1_ref,
                w1_ref, b1_ref, w2_ref, b2_ref, w3_ref, b3_ref, w4row_ref,
                o_ref):
    """One batch tile: (norm folded into w1/b1) -> MLP -> +wide -> sigmoid."""
    # Linear(D, 1024) + ReLU   (bf16 operands, f32 accumulate/elementwise)
    h = jnp.dot(x2_ref[...], w1_ref[...],
                preferred_element_type=jnp.float32) + b1_ref[...]
    h = jnp.maximum(h, 0.0)

    # Linear(1024, 512) + ReLU
    h = jnp.dot(h.astype(jnp.bfloat16), w2_ref[...],
                preferred_element_type=jnp.float32) + b2_ref[...]
    h = jnp.maximum(h, 0.0)

    # Linear(512, 256) + ReLU
    h = jnp.dot(h.astype(jnp.bfloat16), w3_ref[...],
                preferred_element_type=jnp.float32) + b3_ref[...]
    h = jnp.maximum(h, 0.0)

    # Linear(256, 1) as VPU multiply + lane reduction (avoid N=1 MXU dot).
    logit = jnp.sum(h * w4row_ref[...], axis=-1, keepdims=True)

    # wide logit (already includes b4) + deep logit, then Sigmoid.
    logit = logit + x1_ref[...]
    o_ref[...] = jax.nn.sigmoid(logit)


def _auto_tile_b(B):
    """Batch tile: >= ~4 grid steps (keeps both v7x TCs busy and pipelined),
    floor 256 (amortize per-step overhead), cap 1024 (VMEM headroom)."""
    t = -(-B // 4)                   # cdiv(B, 4)
    t = ((t + 127) // 128) * 128     # round up to a lane/sublane-friendly size
    return max(256, min(1024, t))


def prepare_params(params):
    """One-time weight prep, hoisted out of the per-call forward:
    fold Normalization into Linear #1, cast MXU weights to bf16, pre-cast the
    sparse embedding table to bf16, and keep only lr_table[:, 0] (the only
    element the original forward uses) with b4 handled separately."""
    s = jax.lax.rsqrt(params["norm_var"] + EPS)                 # (1, D)
    w1_eff = (s.T * params["w1"]).astype(jnp.bfloat16)          # (D, 1024)
    b1_eff = params["b1"] - (params["norm_mean"] * s) @ params["w1"]
    return {
        "sparse_table": params["sparse_table"].astype(jnp.bfloat16),
        "lr_col0": params["lr_table"][:, 0],                    # (VOCAB,) f32
        "w1": w1_eff, "b1": b1_eff,
        "w2": params["w2"].astype(jnp.bfloat16), "b2": params["b2"],
        "w3": params["w3"].astype(jnp.bfloat16), "b3": params["b3"],
        "w4row": params["w4"].T,                                # (1, 256) f32
        "b4": params["b4"],                                     # (1, 1) f32
    }


@functools.partial(jax.jit, static_argnames=("tile_b",))
def wide_deep_forward(x_ids, prep, *, tile_b=None):
    """Full WideDeep forward. x_ids: int32 [B, F]; prep from prepare_params."""
    B, F = x_ids.shape
    D = F * EMBEDDING_DIM
    if tile_b is None:
        tile_b = _auto_tile_b(B)

    # ---- glue: embedding gather + concat (EmbeddingSumConcat stand-in) -----
    # Table is pre-cast to bf16, so the gather output is already the matmul
    # operand dtype (no extra f32 pad/cast round-trip through HBM).
    x2 = jnp.take(prep["sparse_table"], x_ids, axis=0).reshape(B, D)
    # Wide branch keeps only lr_out[:, 0:1]; fold the scalar bias b4 here.
    x1 = jnp.take(prep["lr_col0"], x_ids[:, 0], axis=0)[:, None] + prep["b4"]

    # ---- pad batch to a multiple of the batch tile --------------------------
    Bp = pl.cdiv(B, tile_b) * tile_b
    if Bp != B:
        x2 = jnp.pad(x2, ((0, Bp - B), (0, 0)))
        x1 = jnp.pad(x1, ((0, Bp - B), (0, 0)))
    grid = (Bp // tile_b,)

    rep = lambda shape: pl.BlockSpec(shape, lambda i: tuple(0 for _ in shape))

    w_bytes = (D * HIDDEN[0] + HIDDEN[0] * HIDDEN[1] + HIDDEN[1] * HIDDEN[2]) * 2 \
              + (HIDDEN[0] + HIDDEN[1] + 2 * HIDDEN[2]) * 4
    cost = pl.CostEstimate(
        flops=2 * Bp * (D * HIDDEN[0] + HIDDEN[0] * HIDDEN[1]
                        + HIDDEN[1] * HIDDEN[2] + HIDDEN[2]),
        transcendentals=Bp,                         # sigmoid
        bytes_accessed=Bp * D * 2 + Bp * 4 + w_bytes + Bp * 4,
    )

    out = pl.pallas_call(
        _wdl_kernel,
        out_shape=jax.ShapeDtypeStruct((Bp, 1), jnp.float32),
        grid=grid,
        in_specs=[
            pl.BlockSpec((tile_b, D), lambda i: (i, 0)),       # sparse concat embedding (bf16)
            pl.BlockSpec((tile_b, 1), lambda i: (i, 0)),       # wide logit x1 + b4 (f32)
            rep((D, HIDDEN[0])), rep((1, HIDDEN[0])),          # Linear(D, 1024)
            rep((HIDDEN[0], HIDDEN[1])), rep((1, HIDDEN[1])),  # Linear(1024, 512)
            rep((HIDDEN[1], HIDDEN[2])), rep((1, HIDDEN[2])),  # Linear(512, 256)
            rep((1, HIDDEN[2])),                               # Linear(256, 1) weight row (f32)
        ],
        out_specs=pl.BlockSpec((tile_b, 1), lambda i: (i, 0)),
        compiler_params=pltpu.CompilerParams(
            dimension_semantics=("parallel",),       # v7x: shard batch over both TCs
            vmem_limit_bytes=48 * 1024 * 1024),      # > v5e 16 MiB default, <= v7x ceiling
        cost_estimate=cost,
    )(x2, x1, prep["w1"], prep["b1"], prep["w2"], prep["b2"],
      prep["w3"], prep["b3"], prep["w4row"])
    return out[:B]


def init_params(key):
    """Deterministic parameter init (shapes per WideDeep.__init__), all f32."""
    D = FEATURE_COUNT * EMBEDDING_DIM
    ks = jax.random.split(key, 12)

    def linear(kw, kb, fan_in, fan_out):
        bound = 1.0 / jnp.sqrt(fan_in)
        w = jax.random.uniform(kw, (fan_in, fan_out), jnp.float32, -bound, bound)
        b = jax.random.uniform(kb, (1, fan_out), jnp.float32, -bound, bound)
        return w, b

    w1, b1 = linear(ks[0], ks[1], D, HIDDEN[0])
    w2, b2 = linear(ks[2], ks[3], HIDDEN[0], HIDDEN[1])
    w3, b3 = linear(ks[4], ks[5], HIDDEN[1], HIDDEN[2])
    w4, b4 = linear(ks[6], ks[7], HIDDEN[2], 1)

    return {
        # ms.NormalTensorInitializer(var=0.01) -> std = 0.1
        "sparse_table": 0.1 * jax.random.normal(ks[8], (VOCAB, EMBEDDING_DIM), jnp.float32),
        "lr_table": 0.1 * jax.random.normal(ks[9], (VOCAB, EMBEDDING_DIM), jnp.float32),
        "norm_mean": jnp.zeros((1, D), jnp.float32),
        "norm_var": jnp.ones((1, D), jnp.float32),
        "w1": w1, "b1": b1, "w2": w2, "b2": b2,
        "w3": w3, "b3": b3, "w4": w4, "b4": b4,
    }


def _reference(x_ids, params):
    """Plain f32 JAX reference of the same forward, for validation."""
    B, F = x_ids.shape
    D = F * EMBEDDING_DIM
    lr_out = jnp.take(params["lr_table"], x_ids, axis=0).reshape(B, D)
    sp = jnp.take(params["sparse_table"], x_ids, axis=0).reshape(B, D)
    x1 = lr_out[:, 0:1]
    h = (sp - params["norm_mean"]) / jnp.sqrt(params["norm_var"] + EPS)
    h = jnp.maximum(h @ params["w1"] + params["b1"], 0.0)
    h = jnp.maximum(h @ params["w2"] + params["b2"], 0.0)
    h = jnp.maximum(h @ params["w3"] + params["b3"], 0.0)
    logit = h @ params["w4"] + params["b4"] + x1
    return jax.nn.sigmoid(logit)


if __name__ == "__main__":
    key = jax.random.PRNGKey(0)
    kp, kx = jax.random.split(key)
    params = init_params(kp)
    prep = prepare_params(params)          # one-time weight prep (model load)

    B = 512   # two grid steps at the auto-selected tile_b=256
    x_ids = jax.random.randint(kx, (B, FEATURE_COUNT), 0, VOCAB, dtype=jnp.int32)

    out = wide_deep_forward(x_ids, prep)
    out = jax.block_until_ready(out)

    ref = _reference(x_ids, params)
    assert out.shape == (B, 1)
    # bf16 matmul operands with f32 accumulation: validate with a loose tol.
    assert jnp.allclose(out, ref, atol=2e-2, rtol=0.0), "mismatch vs reference"

    print("KERNEL_OK")
</pallas_src>

<mosaic_0001>
module attributes {stable_mosaic.version = 11 : i64} {
  func.func @_wdl_kernel(%arg0: i32, %arg1: memref<256x130xbf16, #tpu.memory_space<vmem>>, %arg2: memref<256x1xf32, #tpu.memory_space<vmem>>, %arg3: memref<130x1024xbf16, #tpu.memory_space<vmem>>, %arg4: memref<1x1024xf32, #tpu.memory_space<vmem>>, %arg5: memref<1024x512xbf16, #tpu.memory_space<vmem>>, %arg6: memref<1x512xf32, #tpu.memory_space<vmem>>, %arg7: memref<512x256xbf16, #tpu.memory_space<vmem>>, %arg8: memref<1x256xf32, #tpu.memory_space<vmem>>, %arg9: memref<1x256xf32, #tpu.memory_space<vmem>>, %arg10: memref<256x1xf32, #tpu.memory_space<vmem>>) attributes {dimension_semantics = [#tpu.dimension_semantics<parallel>], iteration_bounds = array<i64: 2>, scalar_prefetch = 0 : i64, scratch_operands = 0 : i64, tpu.core_type = #tpu.core_type<tc>, window_params = [{transform_indices = @transform_0, window_bounds = array<i64: 256, 130>}, {transform_indices = @transform_1, window_bounds = array<i64: 256, 1>}, {pipeline_mode = #tpu.pipeline_mode<synchronous>, transform_indices = @transform_2, window_bounds = array<i64: 130, 1024>}, {pipeline_mode = #tpu.pipeline_mode<synchronous>, transform_indices = @transform_3, window_bounds = array<i64: 1, 1024>}, {pipeline_mode = #tpu.pipeline_mode<synchronous>, transform_indices = @transform_4, window_bounds = array<i64: 1024, 512>}, {pipeline_mode = #tpu.pipeline_mode<synchronous>, transform_indices = @transform_5, window_bounds = array<i64: 1, 512>}, {pipeline_mode = #tpu.pipeline_mode<synchronous>, transform_indices = @transform_6, window_bounds = array<i64: 512, 256>}, {pipeline_mode = #tpu.pipeline_mode<synchronous>, transform_indices = @transform_7, window_bounds = array<i64: 1, 256>}, {pipeline_mode = #tpu.pipeline_mode<synchronous>, transform_indices = @transform_8, window_bounds = array<i64: 1, 256>}, {transform_indices = @transform_9, window_bounds = array<i64: 256, 1>}]} {
    %c0 = arith.constant 0 : index
    %c0_0 = arith.constant 0 : index
    %0 = vector.load %arg1[%c0, %c0_0] : memref<256x130xbf16, #tpu.memory_space<vmem>>, vector<256x130xbf16>
    %c0_1 = arith.constant 0 : index
    %c0_2 = arith.constant 0 : index
    %1 = vector.load %arg3[%c0_1, %c0_2] : memref<130x1024xbf16, #tpu.memory_space<vmem>>, vector<130x1024xbf16>
    %cst = arith.constant dense<0.000000e+00> : vector<256x1024xf32>
    %2 = tpu.matmul %0, %1, %cst {dimension_numbers = #tpu.dot_dimension_numbers<[1], [0], [0], [1], [0, 0, 1, 1], [], []>} : vector<256x130xbf16>, vector<130x1024xbf16>, vector<256x1024xf32> -> vector<256x1024xf32>
    %c0_3 = arith.constant 0 : index
    %c0_4 = arith.constant 0 : index
    %3 = vector.load %arg4[%c0_3, %c0_4] : memref<1x1024xf32, #tpu.memory_space<vmem>>, vector<1x1024xf32>
    %4 = vector.broadcast %3 : vector<1x1024xf32> to vector<256x1024xf32>
    %5 = arith.addf %2, %4 : vector<256x1024xf32>
    %cst_5 = arith.constant 0.000000e+00 : f32
    %6 = vector.broadcast %cst_5 : f32 to vector<256x1024xf32>
    %7 = arith.maximumf %5, %6 : vector<256x1024xf32>
    %8 = arith.truncf %7 : vector<256x1024xf32> to vector<256x1024xbf16>
    %c0_6 = arith.constant 0 : index
    %c0_7 = arith.constant 0 : index
    %9 = vector.load %arg5[%c0_6, %c0_7] : memref<1024x512xbf16, #tpu.memory_space<vmem>>, vector<1024x512xbf16>
    %cst_8 = arith.constant dense<0.000000e+00> : vector<256x512xf32>
    %10 = tpu.matmul %8, %9, %cst_8 {dimension_numbers = #tpu.dot_dimension_numbers<[1], [0], [0], [1], [0, 0, 1, 1], [], []>} : vector<256x1024xbf16>, vector<1024x512xbf16>, vector<256x512xf32> -> vector<256x512xf32>
    %c0_9 = arith.constant 0 : index
    %c0_10 = arith.constant 0 : index
    %11 = vector.load %arg6[%c0_9, %c0_10] : memref<1x512xf32, #tpu.memory_space<vmem>>, vector<1x512xf32>
    %12 = vector.broadcast %11 : vector<1x512xf32> to vector<256x512xf32>
    %13 = arith.addf %10, %12 : vector<256x512xf32>
    %cst_11 = arith.constant 0.000000e+00 : f32
    %14 = vector.broadcast %cst_11 : f32 to vector<256x512xf32>
    %15 = arith.maximumf %13, %14 : vector<256x512xf32>
    %16 = arith.truncf %15 : vector<256x512xf32> to vector<256x512xbf16>
    %c0_12 = arith.constant 0 : index
    %c0_13 = arith.constant 0 : index
    %17 = vector.load %arg7[%c0_12, %c0_13] : memref<512x256xbf16, #tpu.memory_space<vmem>>, vector<512x256xbf16>
    %cst_14 = arith.constant dense<0.000000e+00> : vector<256x256xf32>
    %18 = tpu.matmul %16, %17, %cst_14 {dimension_numbers = #tpu.dot_dimension_numbers<[1], [0], [0], [1], [0, 0, 1, 1], [], []>} : vector<256x512xbf16>, vector<512x256xbf16>, vector<256x256xf32> -> vector<256x256xf32>
    %c0_15 = arith.constant 0 : index
    %c0_16 = arith.constant 0 : index
    %19 = vector.load %arg8[%c0_15, %c0_16] : memref<1x256xf32, #tpu.memory_space<vmem>>, vector<1x256xf32>
    %20 = vector.broadcast %19 : vector<1x256xf32> to vector<256x256xf32>
    %21 = arith.addf %18, %20 : vector<256x256xf32>
    %cst_17 = arith.constant 0.000000e+00 : f32
    %22 = vector.broadcast %cst_17 : f32 to vector<256x256xf32>
    %23 = arith.maximumf %21, %22 : vector<256x256xf32>
    %c0_18 = arith.constant 0 : index
    %c0_19 = arith.constant 0 : index
    %24 = vector.load %arg9[%c0_18, %c0_19] : memref<1x256xf32, #tpu.memory_space<vmem>>, vector<1x256xf32>
    %25 = vector.broadcast %24 : vector<1x256xf32> to vector<256x256xf32>
    %26 = arith.mulf %23, %25 : vector<256x256xf32>
    %cst_20 = arith.constant dense<0.000000e+00> : vector<256xf32>
    %27 = vector.multi_reduction <add>, %26, %cst_20 [1] : vector<256x256xf32> to vector<256xf32>
    %28 = vector.shape_cast %27 : vector<256xf32> to vector<256x1xf32>
    %c0_21 = arith.constant 0 : index
    %c0_22 = arith.constant 0 : index
    %29 = vector.load %arg2[%c0_21, %c0_22] : memref<256x1xf32, #tpu.memory_space<vmem>>, vector<256x1xf32>
    %30 = arith.addf %28, %29 : vector<256x1xf32>
    %31 = arith.negf %30 : vector<256x1xf32>
    %32 = math.exp %31 : vector<256x1xf32>
    %cst_23 = arith.constant 1.000000e+00 : f32
    %33 = vector.broadcast %cst_23 : f32 to vector<256x1xf32>
    %34 = arith.addf %33, %32 : vector<256x1xf32>
    %35 = arith.divf %33, %34 : vector<256x1xf32>
    %c0_24 = arith.constant 0 : index
    %c0_25 = arith.constant 0 : index
    %36 = vector.load %arg10[%c0_24, %c0_25] : memref<256x1xf32, #tpu.memory_space<vmem>>, vector<256x1xf32>
    tpu.vector_store %arg10[%c0_24, %c0_25], %35 {strides = array<i32>} : memref<256x1xf32, #tpu.memory_space<vmem>>, vector<256x1xf32>,
    return
  }
  func.func @transform_0(%arg0: i32) -> (i32, i32) {
    %c0_i32 = arith.constant 0 : i32
    %c0_i32_0 = arith.constant 0 : i32
    return %arg0, %c0_i32 : i32, i32
  }
  func.func @transform_1(%arg0: i32) -> (i32, i32) {
    %c0_i32 = arith.constant 0 : i32
    %c0_i32_0 = arith.constant 0 : i32
    return %arg0, %c0_i32 : i32, i32
  }
  func.func @transform_2(%arg0: i32) -> (i32, i32) {
    %c0_i32 = arith.constant 0 : i32
    %c0_i32_0 = arith.constant 0 : i32
    %c0_i32_1 = arith.constant 0 : i32
    return %c0_i32, %c0_i32_0 : i32, i32
  }
  func.func @transform_3(%arg0: i32) -> (i32, i32) {
    %c0_i32 = arith.constant 0 : i32
    %c0_i32_0 = arith.constant 0 : i32
    %c0_i32_1 = arith.constant 0 : i32
    return %c0_i32, %c0_i32_0 : i32, i32
  }
  func.func @transform_4(%arg0: i32) -> (i32, i32) {
    %c0_i32 = arith.constant 0 : i32
    %c0_i32_0 = arith.constant 0 : i32
    %c0_i32_1 = arith.constant 0 : i32
    return %c0_i32, %c0_i32_0 : i32, i32
  }
  func.func @transform_5(%arg0: i32) -> (i32, i32) {
    %c0_i32 = arith.constant 0 : i32
    %c0_i32_0 = arith.constant 0 : i32
    %c0_i32_1 = arith.constant 0 : i32
    return %c0_i32, %c0_i32_0 : i32, i32
  }
  func.func @transform_6(%arg0: i32) -> (i32, i32) {
    %c0_i32 = arith.constant 0 : i32
    %c0_i32_0 = arith.constant 0 : i32
    %c0_i32_1 = arith.constant 0 : i32
    return %c0_i32, %c0_i32_0 : i32, i32
  }
  func.func @transform_7(%arg0: i32) -> (i32, i32) {
    %c0_i32 = arith.constant 0 : i32
    %c0_i32_0 = arith.constant 0 : i32
    %c0_i32_1 = arith.constant 0 : i32
    return %c0_i32, %c0_i32_0 : i32, i32
  }
  func.func @transform_8(%arg0: i32) -> (i32, i32) {
    %c0_i32 = arith.constant 0 : i32
    %c0_i32_0 = arith.constant 0 : i32
    %c0_i32_1 = arith.constant 0 : i32
    return %c0_i32, %c0_i32_0 : i32, i32
  }
  func.func @transform_9(%arg0: i32) -> (i32, i32) {
    %c0_i32 = arith.constant 0 : i32
    %c0_i32_0 = arith.constant 0 : i32
    return %arg0, %c0_i32 : i32, i32
  }
}

</mosaic_0001>

<llo_original>
// kernel: wide_deep_forward.1
$region0: #{wide_deep_forward.1}
  #allocation0 [shape = 'u32[]', space=smem, size = 0x4, offset = 0x4, fixed_abs, tag = 'smem constant byte address 0x4 - core index']
  #allocation1 [shape = 'u32[144,128]{1,0:T(1,128)}', space=vmem, size = 0x12000, scoped, tag = 'internal scratch']
  %s0 = inlined_call_operand.vmem [shape: bf16[512,130], index: 0, kind: input, shape index: {}]
  %s1 = inlined_call_operand.vmem [shape: f32[512,1], index: 1, kind: input, shape index: {}]
  %s2 = inlined_call_operand.vmem [shape: bf16[130,1024], index: 2, kind: input, shape index: {}]
  %s3 = inlined_call_operand.vmem [shape: f32[1,1024], index: 3, kind: input, shape index: {}]
  %s4 = inlined_call_operand.vmem [shape: bf16[1024,512], index: 4, kind: input, shape index: {}]
  %s5 = inlined_call_operand.vmem [shape: f32[1,512], index: 5, kind: input, shape index: {}]
  %s6 = inlined_call_operand.vmem [shape: bf16[512,256], index: 6, kind: input, shape index: {}]
  %s7 = inlined_call_operand.vmem [shape: f32[1,256], index: 7, kind: input, shape index: {}]
  %s8 = inlined_call_operand.vmem [shape: f32[1,256], index: 8, kind: input, shape index: {}]
  %s9 = inlined_call_operand.vmem [shape: f32[512,1], index: 9, kind: output, shape index: {}]
  %s10 = sld [smem:[#allocation0]]
  $region69: #{wide_deep_forward.1} parent=0
    _
  %s12 = ssub.s32 1, %s10
  %s13 = scalar_select 0, %s12, %s10
  loop: start=0, step=1, limit=4
  $region2: #{wide_deep_forward.1} parent=0 // loop_pre_header
    _
  $region3: #{wide_deep_forward.1} parent=0 // loop_header
    %s15 = sphi 0, %s19
    %p16 = scmp.ge.s32.totalorder %s15, 4
    %s25 = sphi 0, %s27
    %s28 = sphi 0, %s25
    %s29 = sphi 0, %s28
    %s45 = sphi 0, %s29
    %s51 = sphi 0, %s53
    %s54 = sphi 0, %s51
    %s55 = sphi 0, %s54
    %s71 = sphi 0, %s55
    %s75 = sphi 0, %s75
    %s77 = sphi 0, %s75
    %s78 = sphi 0, %s77
    %s92 = sphi 0, %s78
    %s96 = sphi 0, %s96
    %s98 = sphi 0, %s96
    %s99 = sphi 0, %s98
    %s113 = sphi 0, %s99
    %s117 = sphi 0, %s117
    %s119 = sphi 0, %s117
    %s120 = sphi 0, %s119
    %s134 = sphi 0, %s120
    %s138 = sphi 0, %s138
    %s140 = sphi 0, %s138
    %s141 = sphi 0, %s140
    %s155 = sphi 0, %s141
    %s159 = sphi 0, %s159
    %s161 = sphi 0, %s159
    %s162 = sphi 0, %s161
    %s176 = sphi 0, %s162
    %s180 = sphi 0, %s180
    %s182 = sphi 0, %s180
    %s183 = sphi 0, %s182
    %s197 = sphi 0, %s183
    %s201 = sphi 0, %s201
    %s203 = sphi 0, %s201
    %s204 = sphi 0, %s203
    %s218 = sphi 0, %s204
    %s224 = sphi 0, %s226
    %s227 = sphi 0, %s224
    %s228 = sphi 0, %s227
    %s244 = sphi 0, %s228
  $region4: #{wide_deep_forward.1} parent=0 // loop_header_branch
    %18 = sbr.rel (%p16) target = $region8
  $region5: #{wide_deep_forward.1} parent=0 // loop_body
    %s20 = ssub.s32 %s15, 1
    %s21 = ssub.s32 %s15, 2
    %s22 = sadd.s32 %s15, 1
    %s23 = ssub.s32 %s15, %s22
    %p24 = scmp.eq.s32.totalorder %s23, 0
    %s26 = sadd.s32 %s25, 1
    %s27 = scalar_select %p24, %s25, %s26
    %p30 = pneg %p24
    %p31 = scmp.eq.s32.totalorder %s15, 1
    %p32 = por %p30, %p31
    %p33 = scmp.ne.s32.totalorder %s25, %s28
    %p34 = scmp.eq.s32.totalorder %s15, 0
    %p35 = por %p33, %p34
    %p36 = scmp.ne.s32.totalorder %s25, %s28
    %p37 = scmp.eq.s32.totalorder %s20, 1
    %p38 = por %p36, %p37
    %p39 = scmp.ne.s32.totalorder %s28, %s29
    %p40 = scmp.eq.s32.totalorder %s20, 0
    %p41 = por %p39, %p40
    %p42 = scmp.ne.s32.totalorder %s28, %s29
    %p43 = scmp.eq.s32.totalorder %s21, 1
    %p44 = por %p42, %p43
    %p46 = scmp.ne.s32.totalorder %s29, %s45
    %p47 = scmp.eq.s32.totalorder %s21, 0
    %p48 = por %p46, %p47
    %s49 = ssub.s32 %s15, %s22
    %p50 = scmp.eq.s32.totalorder %s49, 0
    %s52 = sadd.s32 %s51, 1
    %s53 = scalar_select %p50, %s51, %s52
    %p56 = pneg %p50
    %p57 = scmp.eq.s32.totalorder %s15, 1
    %p58 = por %p56, %p57
    %p59 = scmp.ne.s32.totalorder %s51, %s54
    %p60 = scmp.eq.s32.totalorder %s15, 0
    %p61 = por %p59, %p60
    %p62 = scmp.ne.s32.totalorder %s51, %s54
    %p63 = scmp.eq.s32.totalorder %s20, 1
    %p64 = por %p62, %p63
    %p65 = scmp.ne.s32.totalorder %s54, %s55
    %p66 = scmp.eq.s32.totalorder %s20, 0
    %p67 = por %p65, %p66
    %p68 = scmp.ne.s32.totalorder %s54, %s55
    %p69 = scmp.eq.s32.totalorder %s21, 1
    %p70 = por %p68, %p69
    %p72 = scmp.ne.s32.totalorder %s55, %s71
    %p73 = scmp.eq.s32.totalorder %s21, 0
    %p74 = por %p72, %p73
    %s76 = sadd.s32 %s75, 1
    %p79 = scmp.eq.s32.totalorder %s15, 1
    %p80 = scmp.ne.s32.totalorder %s75, %s77
    %p81 = scmp.eq.s32.totalorder %s15, 0
    %p82 = por %p80, %p81
    %p83 = scmp.ne.s32.totalorder %s75, %s77
    %p84 = scmp.eq.s32.totalorder %s20, 1
    %p85 = por %p83, %p84
    %p86 = scmp.ne.s32.totalorder %s77, %s78
    %p87 = scmp.eq.s32.totalorder %s20, 0
    %p88 = por %p86, %p87
    %p89 = scmp.ne.s32.totalorder %s77, %s78
    %p90 = scmp.eq.s32.totalorder %s21, 1
    %p91 = por %p89, %p90
    %p93 = scmp.ne.s32.totalorder %s78, %s92
    %p94 = scmp.eq.s32.totalorder %s21, 0
    %p95 = por %p93, %p94
    %s97 = sadd.s32 %s96, 1
    %p100 = scmp.eq.s32.totalorder %s15, 1
    %p101 = scmp.ne.s32.totalorder %s96, %s98
    %p102 = scmp.eq.s32.totalorder %s15, 0
    %p103 = por %p101, %p102
    %p104 = scmp.ne.s32.totalorder %s96, %s98
    %p105 = scmp.eq.s32.totalorder %s20, 1
    %p106 = por %p104, %p105
    %p107 = scmp.ne.s32.totalorder %s98, %s99
    %p108 = scmp.eq.s32.totalorder %s20, 0
    %p109 = por %p107, %p108
    %p110 = scmp.ne.s32.totalorder %s98, %s99
    %p111 = scmp.eq.s32.totalorder %s21, 1
    %p112 = por %p110, %p111
    %p114 = scmp.ne.s32.totalorder %s99, %s113
    %p115 = scmp.eq.s32.totalorder %s21, 0
    %p116 = por %p114, %p115
    %s118 = sadd.s32 %s117, 1
    %p121 = scmp.eq.s32.totalorder %s15, 1
    %p122 = scmp.ne.s32.totalorder %s117, %s119
    %p123 = scmp.eq.s32.totalorder %s15, 0
    %p124 = por %p122, %p123
    %p125 = scmp.ne.s32.totalorder %s117, %s119
    %p126 = scmp.eq.s32.totalorder %s20, 1
    %p127 = por %p125, %p126
    %p128 = scmp.ne.s32.totalorder %s119, %s120
    %p129 = scmp.eq.s32.totalorder %s20, 0
    %p130 = por %p128, %p129
    %p131 = scmp.ne.s32.totalorder %s119, %s120
    %p132 = scmp.eq.s32.totalorder %s21, 1
    %p133 = por %p131, %p132
    %p135 = scmp.ne.s32.totalorder %s120, %s134
    %p136 = scmp.eq.s32.totalorder %s21, 0
    %p137 = por %p135, %p136
    %s139 = sadd.s32 %s138, 1
    %p142 = scmp.eq.s32.totalorder %s15, 1
    %p143 = scmp.ne.s32.totalorder %s138, %s140
    %p144 = scmp.eq.s32.totalorder %s15, 0
    %p145 = por %p143, %p144
    %p146 = scmp.ne.s32.totalorder %s138, %s140
    %p147 = scmp.eq.s32.totalorder %s20, 1
    %p148 = por %p146, %p147
    %p149 = scmp.ne.s32.totalorder %s140, %s141
    %p150 = scmp.eq.s32.totalorder %s20, 0
    %p151 = por %p149, %p150
    %p152 = scmp.ne.s32.totalorder %s140, %s141
    %p153 = scmp.eq.s32.totalorder %s21, 1
    %p154 = por %p152, %p153
    %p156 = scmp.ne.s32.totalorder %s141, %s155
    %p157 = scmp.eq.s32.totalorder %s21, 0
    %p158 = por %p156, %p157
    %s160 = sadd.s32 %s159, 1
    %p163 = scmp.eq.s32.totalorder %s15, 1
    %p164 = scmp.ne.s32.totalorder %s159, %s161
    %p165 = scmp.eq.s32.totalorder %s15, 0
    %p166 = por %p164, %p165
    %p167 = scmp.ne.s32.totalorder %s159, %s161
    %p168 = scmp.eq.s32.totalorder %s20, 1
    %p169 = por %p167, %p168
    %p170 = scmp.ne.s32.totalorder %s161, %s162
    %p171 = scmp.eq.s32.totalorder %s20, 0
    %p172 = por %p170, %p171
    %p173 = scmp.ne.s32.totalorder %s161, %s162
    %p174 = scmp.eq.s32.totalorder %s21, 1
    %p175 = por %p173, %p174
    %p177 = scmp.ne.s32.totalorder %s162, %s176
    %p178 = scmp.eq.s32.totalorder %s21, 0
    %p179 = por %p177, %p178
    %s181 = sadd.s32 %s180, 1
    %p184 = scmp.eq.s32.totalorder %s15, 1
    %p185 = scmp.ne.s32.totalorder %s180, %s182
    %p186 = scmp.eq.s32.totalorder %s15, 0
    %p187 = por %p185, %p186
    %p188 = scmp.ne.s32.totalorder %s180, %s182
    %p189 = scmp.eq.s32.totalorder %s20, 1
    %p190 = por %p188, %p189
    %p191 = scmp.ne.s32.totalorder %s182, %s183
    %p192 = scmp.eq.s32.totalorder %s20, 0
    %p193 = por %p191, %p192
    %p194 = scmp.ne.s32.totalorder %s182, %s183
    %p195 = scmp.eq.s32.totalorder %s21, 1
    %p196 = por %p194, %p195
    %p198 = scmp.ne.s32.totalorder %s183, %s197
    %p199 = scmp.eq.s32.totalorder %s21, 0
    %p200 = por %p198, %p199
    %s202 = sadd.s32 %s201, 1
    %p205 = scmp.eq.s32.totalorder %s15, 1
    %p206 = scmp.ne.s32.totalorder %s201, %s203
    %p207 = scmp.eq.s32.totalorder %s15, 0
    %p208 = por %p206, %p207
    %p209 = scmp.ne.s32.totalorder %s201, %s203
    %p210 = scmp.eq.s32.totalorder %s20, 1
    %p211 = por %p209, %p210
    %p212 = scmp.ne.s32.totalorder %s203, %s204
    %p213 = scmp.eq.s32.totalorder %s20, 0
    %p214 = por %p212, %p213
    %p215 = scmp.ne.s32.totalorder %s203, %s204
    %p216 = scmp.eq.s32.totalorder %s21, 1
    %p217 = por %p215, %p216
    %p219 = scmp.ne.s32.totalorder %s204, %s218
    %p220 = scmp.eq.s32.totalorder %s21, 0
    %p221 = por %p219, %p220
    %s222 = ssub.s32 %s15, %s22
    %p223 = scmp.eq.s32.totalorder %s222, 0
    %s225 = sadd.s32 %s224, 1
    %s226 = scalar_select %p223, %s224, %s225
    %p229 = pneg %p223
    %p230 = scmp.eq.s32.totalorder %s15, 1
    %p231 = por %p229, %p230
    %p232 = scmp.ne.s32.totalorder %s224, %s227
    %p233 = scmp.eq.s32.totalorder %s15, 0
    %p234 = por %p232, %p233
    %p235 = scmp.ne.s32.totalorder %s224, %s227
    %p236 = scmp.eq.s32.totalorder %s20, 1
    %p237 = por %p235, %p236
    %p238 = scmp.ne.s32.totalorder %s227, %s228
    %p239 = scmp.eq.s32.totalorder %s20, 0
    %p240 = por %p238, %p239
    %p241 = scmp.ne.s32.totalorder %s227, %s228
    %p242 = scmp.eq.s32.totalorder %s21, 1
    %p243 = por %p241, %p242
    %p245 = scmp.ne.s32.totalorder %s228, %s244
    %p246 = scmp.eq.s32.totalorder %s21, 0
    %p247 = por %p245, %p246
    %p248 = scmp.le.s32.totalorder 1, %s15
    %p249 = scmp.lt.s32.totalorder %s15, 3
    %p250 = pnand %p248, %p249
    %p251 = pneg %p250
    // Predicated region
    $region9: #{wide_deep_forward.1} parent=5 // pred_check
      _
    $region10: #{wide_deep_forward.1} parent=5 // pred_check_branch
      %253 = sbr.rel (%p250) target = $region12
    $region11: #{wide_deep_forward.1} parent=5 // pred_region
      %s254 = ssub.s32 %s15, 1
      // Predicated region
      $region13: #{wide_deep_forward.1} parent=11 // pred_check
        %p255 = pneg %p88
      $region14: #{wide_deep_forward.1} parent=11 // pred_check_branch
        %257 = sbr.rel (%p255) target = $region16
      $region15: #{wide_deep_forward.1} parent=11 // pred_region
        _
      $region16: #{wide_deep_forward.1} parent=11 // pred_fallthru
        _
      // Predicated region
      $region17: #{wide_deep_forward.1} parent=11 // pred_check
        %p258 = pneg %p109
      $region18: #{wide_deep_forward.1} parent=11 // pred_check_branch
        %260 = sbr.rel (%p258) target = $region20
      $region19: #{wide_deep_forward.1} parent=11 // pred_region
        _
      $region20: #{wide_deep_forward.1} parent=11 // pred_fallthru
        _
      // Predicated region
      $region21: #{wide_deep_forward.1} parent=11 // pred_check
        %p261 = pneg %p130
      $region22: #{wide_deep_forward.1} parent=11 // pred_check_branch
        %263 = sbr.rel (%p261) target = $region24
      $region23: #{wide_deep_forward.1} parent=11 // pred_region
        _
      $region24: #{wide_deep_forward.1} parent=11 // pred_fallthru
        _
      // Predicated region
      $region25: #{wide_deep_forward.1} parent=11 // pred_check
        %p264 = pneg %p151
      $region26: #{wide_deep_forward.1} parent=11 // pred_check_branch
        %266 = sbr.rel (%p264) target = $region28
      $region27: #{wide_deep_forward.1} parent=11 // pred_region
        _
      $region28: #{wide_deep_forward.1} parent=11 // pred_fallthru
        _
      // Predicated region
      $region29: #{wide_deep_forward.1} parent=11 // pred_check
        %p267 = pneg %p172
      $region30: #{wide_deep_forward.1} parent=11 // pred_check_branch
        %269 = sbr.rel (%p267) target = $region32
      $region31: #{wide_deep_forward.1} parent=11 // pred_region
        _
      $region32: #{wide_deep_forward.1} parent=11 // pred_fallthru
        _
      // Predicated region
      $region33: #{wide_deep_forward.1} parent=11 // pred_check
        %p270 = pneg %p193
      $region34: #{wide_deep_forward.1} parent=11 // pred_check_branch
        %272 = sbr.rel (%p270) target = $region36
      $region35: #{wide_deep_forward.1} parent=11 // pred_region
        _
      $region36: #{wide_deep_forward.1} parent=11 // pred_fallthru
        _
      // Predicated region
      $region37: #{wide_deep_forward.1} parent=11 // pred_check
        %p273 = pneg %p214
      $region38: #{wide_deep_forward.1} parent=11 // pred_check_branch
        %275 = sbr.rel (%p273) target = $region40
      $region39: #{wide_deep_forward.1} parent=11 // pred_region
        _
      $region40: #{wide_deep_forward.1} parent=11 // pred_fallthru
        _
    $region12: #{wide_deep_forward.1} parent=5 // pred_fallthru
      _
    %p276 = scmp.lt.s32.totalorder %s15, 2
    // Predicated region
    $region41: #{wide_deep_forward.1} parent=5 // pred_check
      %p277 = pneg %p276
    $region42: #{wide_deep_forward.1} parent=5 // pred_check_branch
      %279 = sbr.rel (%p277) target = $region44
    $region43: #{wide_deep_forward.1} parent=5 // pred_region
      // Predicated region
      $region45: #{wide_deep_forward.1} parent=43 // pred_check
        %p280 = pneg %p35
      $region46: #{wide_deep_forward.1} parent=43 // pred_check_branch
        %282 = sbr.rel (%p280) target = $region48
      $region47: #{wide_deep_forward.1} parent=43 // pred_region
        %s283 = smul.u32 32, %s15
        %p284 = scmp.lt.s32.totalorder %s283, 63
        %s285 = scalar_select %p284, %s283, 63
        %s286 = smul.addr %s285, 2
        %s287 = smul.addr %s286, 4
        %s288 = scalar_lea.vmem %s0, %s287
        %s289 = smul.u32 32, %s15
      $region48: #{wide_deep_forward.1} parent=43 // pred_fallthru
        _
      // Predicated region
      $region49: #{wide_deep_forward.1} parent=43 // pred_check
        %p290 = pneg %p61
      $region50: #{wide_deep_forward.1} parent=43 // pred_check_branch
        %292 = sbr.rel (%p290) target = $region52
      $region51: #{wide_deep_forward.1} parent=43 // pred_region
        %s293 = smul.u32 32, %s15
        %p294 = scmp.lt.s32.totalorder %s293, 63
        %s295 = scalar_select %p294, %s293, 63
        %s296 = smul.addr %s295, 8
        %s297 = scalar_lea.vmem %s1, %s296
        %s298 = smul.u32 32, %s15
      $region52: #{wide_deep_forward.1} parent=43 // pred_fallthru
        _
    $region44: #{wide_deep_forward.1} parent=5 // pred_fallthru
      _
    %p299 = scmp.le.s32.totalorder 1, %s15
    %p300 = scmp.lt.s32.totalorder %s15, 3
    %p301 = pnand %p299, %p300
    %p302 = pneg %p301
    // Predicated region
    $region53: #{wide_deep_forward.1} parent=5 // pred_check
      _
    $region54: #{wide_deep_forward.1} parent=5 // pred_check_branch
      %304 = sbr.rel (%p301) target = $region56
    $region55: #{wide_deep_forward.1} parent=5 // pred_region
      %s305 = ssub.s32 %s15, 1
      %s306 = smul.u32 32, %s20
      %p307 = scmp.lt.s32.totalorder %s306, 63
      %s308 = scalar_select %p307, %s306, 63
      %s309 = smul.addr %s308, 2
      %s310 = smul.addr %s309, 4
      %s311 = scalar_lea.vmem %s0, %s310
      %p312 = pneg %p41
      %p313 = pneg %p38
      %s314 = smul.u32 32, %s20
      %p315 = scmp.lt.s32.totalorder %s314, 63
      %s316 = scalar_select %p315, %s314, 63
      %s317 = smul.addr %s316, 8
      %s318 = scalar_lea.vmem %s1, %s317
      %p319 = pneg %p67
      %p320 = pneg %p64
      %p321 = pneg %p88
      %p322 = pneg %p85
      %p323 = pneg %p109
      %p324 = pneg %p106
      %p325 = pneg %p130
      %p326 = pneg %p127
      %p327 = pneg %p151
      %p328 = pneg %p148
      %p329 = pneg %p172
      %p330 = pneg %p169
      %p331 = pneg %p193
      %p332 = pneg %p190
      %p333 = pneg %p214
      %p334 = pneg %p211
      %p335 = pneg %p240
      %p336 = pneg %p237
      %s337 = smul.u32 32, %s20
      %p338 = scmp.lt.s32.totalorder %s337, 63
      %s339 = scalar_select %p338, %s337, 63
      %s340 = smul.addr %s339, 8
      %s341 = scalar_lea.vmem %s9, %s340
      %s342 = smul.u32 32, %s20
      %p343 = scmp.lt.s32.totalorder %s342, 63
      %s344 = scalar_select %p343, %s342, 63
      %s345 = smul.addr %s344, 2
      %s346 = smul.addr %s345, 4
      %s347 = scalar_lea.vmem %s0, %s346
      %s348 = smul.u32 32, %s20
      %s349 = smul.u32 32, %s20
      %p350 = scmp.lt.s32.totalorder %s349, 63
      %s351 = scalar_select %p350, %s349, 63
      %s352 = smul.addr %s351, 8
      %s353 = scalar_lea.vmem %s1, %s352
      %s354 = smul.u32 32, %s20
      %s355 = smul.u32 32, %s20
      %p356 = scmp.lt.s32.totalorder %s355, 63
      %s357 = scalar_select %p356, %s355, 63
      %s358 = smul.addr %s357, 8
      %s359 = scalar_lea.vmem %s9, %s358
      %s360 = smul.u32 32, %s20
      %v362 = vld [vmem:[%s347] sm:$0xff]
      %v363 = vld [vmem:[%s347 + $0x8] sm:$0xff]
      %v364 = vld [vmem:[%s347 + $0x10] sm:$0xff]
      %v365 = vld [vmem:[%s347 + $0x18] sm:$0xff]
      %v366 = vld [vmem:[%s347 + $0x20] sm:$0xff]
      %v367 = vld [vmem:[%s347 + $0x28] sm:$0xff]
      %v368 = vld [vmem:[%s347 + $0x30] sm:$0xff]
      %v369 = vld [vmem:[%s347 + $0x38] sm:$0xff]
      %v370 = vld [vmem:[%s347 + $0x40] sm:$0xff]
      %v371 = vld [vmem:[%s347 + $0x48] sm:$0xff]
      %v372 = vld [vmem:[%s347 + $0x50] sm:$0xff]
      %v373 = vld [vmem:[%s347 + $0x58] sm:$0xff]
      %v374 = vld [vmem:[%s347 + $0x60] sm:$0xff]
      %v375 = vld [vmem:[%s347 + $0x68] sm:$0xff]
      %v376 = vld [vmem:[%s347 + $0x70] sm:$0xff]
      %v377 = vld [vmem:[%s347 + $0x78] sm:$0xff]
      %v378 = vld [vmem:[%s347 + $0x80] sm:$0xff]
      %v379 = vld [vmem:[%s347 + $0x88] sm:$0xff]
      %v380 = vld [vmem:[%s347 + $0x90] sm:$0xff]
      %v381 = vld [vmem:[%s347 + $0x98] sm:$0xff]
      %v382 = vld [vmem:[%s347 + $0xa0] sm:$0xff]
      %v383 = vld [vmem:[%s347 + $0xa8] sm:$0xff]
      %v384 = vld [vmem:[%s347 + $0xb0] sm:$0xff]
      %v385 = vld [vmem:[%s347 + $0xb8] sm:$0xff]
      %v386 = vld [vmem:[%s347 + $0xc0] sm:$0xff]
      %v387 = vld [vmem:[%s347 + $0xc8] sm:$0xff]
      %v388 = vld [vmem:[%s347 + $0xd0] sm:$0xff]
      %v389 = vld [vmem:[%s347 + $0xd8] sm:$0xff]
      %v390 = vld [vmem:[%s347 + $0xe0] sm:$0xff]
      %v391 = vld [vmem:[%s347 + $0xe8] sm:$0xff]
      %v392 = vld [vmem:[%s347 + $0xf0] sm:$0xff]
      %v393 = vld [vmem:[%s347 + $0xf8] sm:$0xff]
      %v394 = vld [vmem:[%s2] sm:$0xff]
      %v395 = vld [vmem:[%s2 + $0x8] sm:$0xff]
      %v396 = vld [vmem:[%s2 + $0x10] sm:$0xff]
      %v397 = vld [vmem:[%s2 + $0x18] sm:$0xff]
      %v398 = vld [vmem:[%s2 + $0x20] sm:$0xff]
      %v399 = vld [vmem:[%s2 + $0x28] sm:$0xff]
      %v400 = vld [vmem:[%s2 + $0x30] sm:$0xff]
      %v401 = vld [vmem:[%s2 + $0x38] sm:$0xff]
      %v402 = vld [vmem:[%s2 + $0x40] sm:$0xff]
      %v403 = vld [vmem:[%s2 + $0x48] sm:$0xff]
      %v404 = vld [vmem:[%s2 + $0x50] sm:$0xff]
      %v405 = vld [vmem:[%s2 + $0x58] sm:$0xff]
      %v406 = vld [vmem:[%s2 + $0x60] sm:$0xff]
      %v407 = vld [vmem:[%s2 + $0x68] sm:$0xff]
      %v408 = vld [vmem:[%s2 + $0x70] sm:$0xff]
      %v409 = vld [vmem:[%s2 + $0x78] sm:$0xff]
      %v410 = vld [vmem:[%s2 + $0x80] sm:$0xff]
      %v411 = vld [vmem:[%s2 + $0x88] sm:$0xff]
      %v412 = vld [vmem:[%s2 + $0x90] sm:$0xff]
      %v413 = vld [vmem:[%s2 + $0x98] sm:$0xff]
      %v414 = vld [vmem:[%s2 + $0xa0] sm:$0xff]
      %v415 = vld [vmem:[%s2 + $0xa8] sm:$0xff]
      %v416 = vld [vmem:[%s2 + $0xb0] sm:$0xff]
      %v417 = vld [vmem:[%s2 + $0xb8] sm:$0xff]
      %v418 = vld [vmem:[%s2 + $0xc0] sm:$0xff]
      %v419 = vld [vmem:[%s2 + $0xc8] sm:$0xff]
      %v420 = vld [vmem:[%s2 + $0xd0] sm:$0xff]
      %v421 = vld [vmem:[%s2 + $0xd8] sm:$0xff]
      %v422 = vld [vmem:[%s2 + $0xe0] sm:$0xff]
      %v423 = vld [vmem:[%s2 + $0xe8] sm:$0xff]
      %v424 = vld [vmem:[%s2 + $0xf0] sm:$0xff]
      %v425 = vld [vmem:[%s2 + $0xf8] sm:$0xff]
      %v426 = vld [vmem:[%s2 + $0x100] sm:$0xff]
      %v427 = vld [vmem:[%s2 + $0x108] sm:$0xff]
      %v428 = vld [vmem:[%s2 + $0x110] sm:$0xff]
      %v429 = vld [vmem:[%s2 + $0x118] sm:$0xff]
      %v430 = vld [vmem:[%s2 + $0x120] sm:$0xff]
      %v431 = vld [vmem:[%s2 + $0x128] sm:$0xff]
      %v432 = vld [vmem:[%s2 + $0x130] sm:$0xff]
      %v433 = vld [vmem:[%s2 + $0x138] sm:$0xff]
      %v434 = vld [vmem:[%s2 + $0x140] sm:$0xff]
      %v435 = vld [vmem:[%s2 + $0x148] sm:$0xff]
      %v436 = vld [vmem:[%s2 + $0x150] sm:$0xff]
      %v437 = vld [vmem:[%s2 + $0x158] sm:$0xff]
      %v438 = vld [vmem:[%s2 + $0x160] sm:$0xff]
      %v439 = vld [vmem:[%s2 + $0x168] sm:$0xff]
      %v440 = vld [vmem:[%s2 + $0x170] sm:$0xff]
      %v441 = vld [vmem:[%s2 + $0x178] sm:$0xff]
      %v442 = vld [vmem:[%s2 + $0x180] sm:$0xff]
      %v443 = vld [vmem:[%s2 + $0x188] sm:$0xff]
      %v444 = vld [vmem:[%s2 + $0x190] sm:$0xff]
      %v445 = vld [vmem:[%s2 + $0x198] sm:$0xff]
      %v446 = vld [vmem:[%s2 + $0x1a0] sm:$0xff]
      %v447 = vld [vmem:[%s2 + $0x1a8] sm:$0xff]
      %v448 = vld [vmem:[%s2 + $0x1b0] sm:$0xff]
      %v449 = vld [vmem:[%s2 + $0x1b8] sm:$0xff]
      %v450 = vld [vmem:[%s2 + $0x1c0] sm:$0xff]
      %v451 = vld [vmem:[%s2 + $0x1c8] sm:$0xff]
      %v452 = vld [vmem:[%s2 + $0x1d0] sm:$0xff]
      %v453 = vld [vmem:[%s2 + $0x1d8] sm:$0xff]
      %v454 = vld [vmem:[%s2 + $0x1e0] sm:$0xff]
      %v455 = vld [vmem:[%s2 + $0x1e8] sm:$0xff]
      %v456 = vld [vmem:[%s2 + $0x1f0] sm:$0xff]
      %v457 = vld [vmem:[%s2 + $0x1f8] sm:$0xff]
      %v458 = vld [vmem:[%s2 + $0x200] sm:$0x11]
      %v459 = vld [vmem:[%s2 + $0x208] sm:$0x11]
      %v460 = vld [vmem:[%s2 + $0x210] sm:$0x11]
      %v461 = vld [vmem:[%s2 + $0x218] sm:$0x11]
      %v462 = vld [vmem:[%s3] sm:$0xff]
      %v464 = vlaneseq
      %v465 = vshrl.u32 %v464, 7
      %v466 = vsub.s32 0, %v465
      %v467 = vrot.slane %v462, %v466
      %v468 = vlaneseq
      %v469 = vshrl.u32 %v468, 7
      %v470 = vsub.s32 1, %v469
      %v471 = vrot.slane %v462, %v470
      %v472 = vlaneseq
      %v473 = vshrl.u32 %v472, 7
      %v474 = vsub.s32 2, %v473
      %v475 = vrot.slane %v462, %v474
      %v476 = vlaneseq
      %v477 = vshrl.u32 %v476, 7
      %v478 = vsub.s32 3, %v477
      %v479 = vrot.slane %v462, %v478
      %v480 = vlaneseq
      %v481 = vshrl.u32 %v480, 7
      %v482 = vsub.s32 4, %v481
      %v483 = vrot.slane %v462, %v482
      %v484 = vlaneseq
      %v485 = vshrl.u32 %v484, 7
      %v486 = vsub.s32 5, %v485
      %v487 = vrot.slane %v462, %v486
      %v488 = vlaneseq
      %v489 = vshrl.u32 %v488, 7
      %v490 = vsub.s32 6, %v489
      %v491 = vrot.slane %v462, %v490
      %v492 = vlaneseq
      %v493 = vshrl.u32 %v492, 7
      %v494 = vsub.s32 7, %v493
      %v495 = vrot.slane %v462, %v494
      %v536 = vunpack.c.l.b16 %v362
      %v537 = vunpack.c.h.b16 %v362
      %v538 = vunpack.c.l.b16 %v363
      %v539 = vunpack.c.h.b16 %v363
      %v540 = vunpack.c.l.b16 %v364
      %v541 = vunpack.c.h.b16 %v364
      %v542 = vunpack.c.l.b16 %v365
      %v543 = vunpack.c.h.b16 %v365
      %v544 = vunpack.c.l.b16 %v366
      %v545 = vunpack.c.h.b16 %v366
      %v546 = vunpack.c.l.b16 %v367
      %v547 = vunpack.c.h.b16 %v367
      %v548 = vunpack.c.l.b16 %v368
      %v549 = vunpack.c.h.b16 %v368
      %v550 = vunpack.c.l.b16 %v369
      %v551 = vunpack.c.h.b16 %v369
      %v552 = vunpack.c.l.b16 %v370
      %v553 = vunpack.c.h.b16 %v370
      %v554 = vunpack.c.l.b16 %v371
      %v555 = vunpack.c.h.b16 %v371
      %v556 = vunpack.c.l.b16 %v372
      %v557 = vunpack.c.h.b16 %v372
      %v558 = vunpack.c.l.b16 %v373
      %v559 = vunpack.c.h.b16 %v373
      %v560 = vunpack.c.l.b16 %v374
      %v561 = vunpack.c.h.b16 %v374
      %v562 = vunpack.c.l.b16 %v375
      %v563 = vunpack.c.h.b16 %v375
      %v564 = vunpack.c.l.b16 %v376
      %v565 = vunpack.c.h.b16 %v376
      %v566 = vunpack.c.l.b16 %v377
      %v567 = vunpack.c.h.b16 %v377
      %v568 = vunpack.c.l.b16 %v378
      %v569 = vunpack.c.h.b16 %v378
      %v570 = vunpack.c.l.b16 %v379
      %v571 = vunpack.c.h.b16 %v379
      %v572 = vunpack.c.l.b16 %v380
      %v573 = vunpack.c.h.b16 %v380
      %v574 = vunpack.c.l.b16 %v381
      %v575 = vunpack.c.h.b16 %v381
      %v576 = vunpack.c.l.b16 %v382
      %v577 = vunpack.c.h.b16 %v382
      %v578 = vunpack.c.l.b16 %v383
      %v579 = vunpack.c.h.b16 %v383
      %v580 = vunpack.c.l.b16 %v384
      %v581 = vunpack.c.h.b16 %v384
      %v582 = vunpack.c.l.b16 %v385
      %v583 = vunpack.c.h.b16 %v385
      %v584 = vunpack.c.l.b16 %v386
      %v585 = vunpack.c.h.b16 %v386
      %v586 = vunpack.c.l.b16 %v387
      %v587 = vunpack.c.h.b16 %v387
      %v588 = vunpack.c.l.b16 %v388
      %v589 = vunpack.c.h.b16 %v388
      %v590 = vunpack.c.l.b16 %v389
      %v591 = vunpack.c.h.b16 %v389
      %v592 = vunpack.c.l.b16 %v390
      %v593 = vunpack.c.h.b16 %v390
      %v594 = vunpack.c.l.b16 %v391
      %v595 = vunpack.c.h.b16 %v391
      %v596 = vunpack.c.l.b16 %v392
      %v597 = vunpack.c.h.b16 %v392
      %v598 = vunpack.c.l.b16 %v393
      %v599 = vunpack.c.h.b16 %v393
      %v600 = vpack.c.b16 %v538, %v536
      %v601 = vpack.c.b16 %v539, %v537
      %v602 = vpack.c.b16 %v542, %v540
      %v603 = vpack.c.b16 %v543, %v541
      %v604 = vpack.c.b16 %v546, %v544
      %v605 = vpack.c.b16 %v547, %v545
      %v606 = vpack.c.b16 %v550, %v548
      %v607 = vpack.c.b16 %v551, %v549
      %v608 = vpack.c.b16 %v554, %v552
      %v609 = vpack.c.b16 %v555, %v553
      %v610 = vpack.c.b16 %v558, %v556
      %v611 = vpack.c.b16 %v559, %v557
      %v612 = vpack.c.b16 %v562, %v560
      %v613 = vpack.c.b16 %v563, %v561
      %v614 = vpack.c.b16 %v566, %v564
      %v615 = vpack.c.b16 %v567, %v565
      %v616 = vpack.c.b16 %v570, %v568
      %v617 = vpack.c.b16 %v571, %v569
      %v618 = vpack.c.b16 %v574, %v572
      %v619 = vpack.c.b16 %v575, %v573
      %v620 = vpack.c.b16 %v578, %v576
      %v621 = vpack.c.b16 %v579, %v577
      %v622 = vpack.c.b16 %v582, %v580
      %v623 = vpack.c.b16 %v583, %v581
      %v624 = vpack.c.b16 %v586, %v584
      %v625 = vpack.c.b16 %v587, %v585
      %v626 = vpack.c.b16 %v590, %v588
      %v627 = vpack.c.b16 %v591, %v589
      %v628 = vpack.c.b16 %v594, %v592
      %v629 = vpack.c.b16 %v595, %v593
      %v630 = vpack.c.b16 %v598, %v596
      %v631 = vpack.c.b16 %v599, %v597
      %v716 = vunpack.c.l.b16 %v394
      %v717 = vunpack.c.h.b16 %v394
      %v718 = vunpack.c.l.b16 %v395
      %v719 = vunpack.c.h.b16 %v395
      %v720 = vunpack.c.l.b16 %v396
      %v721 = vunpack.c.h.b16 %v396
      %v722 = vunpack.c.l.b16 %v397
      %v723 = vunpack.c.h.b16 %v397
      %v724 = vunpack.c.l.b16 %v398
      %v725 = vunpack.c.h.b16 %v398
      %v726 = vunpack.c.l.b16 %v399
      %v727 = vunpack.c.h.b16 %v399
      %v728 = vunpack.c.l.b16 %v400
      %v729 = vunpack.c.h.b16 %v400
      %v730 = vunpack.c.l.b16 %v401
      %v731 = vunpack.c.h.b16 %v401
      %v732 = vunpack.c.l.b16 %v402
      %v733 = vunpack.c.h.b16 %v402
      %v734 = vunpack.c.l.b16 %v403
      %v735 = vunpack.c.h.b16 %v403
      %v736 = vunpack.c.l.b16 %v404
      %v737 = vunpack.c.h.b16 %v404
      %v738 = vunpack.c.l.b16 %v405
      %v739 = vunpack.c.h.b16 %v405
      %v740 = vunpack.c.l.b16 %v406
      %v741 = vunpack.c.h.b16 %v406
      %v742 = vunpack.c.l.b16 %v407
      %v743 = vunpack.c.h.b16 %v407
      %v744 = vunpack.c.l.b16 %v408
      %v745 = vunpack.c.h.b16 %v408
      %v746 = vunpack.c.l.b16 %v409
      %v747 = vunpack.c.h.b16 %v409
      %v748 = vunpack.c.l.b16 %v410
      %v749 = vunpack.c.h.b16 %v410
      %v750 = vunpack.c.l.b16 %v411
      %v751 = vunpack.c.h.b16 %v411
      %v752 = vunpack.c.l.b16 %v412
      %v753 = vunpack.c.h.b16 %v412
      %v754 = vunpack.c.l.b16 %v413
      %v755 = vunpack.c.h.b16 %v413
      %v756 = vunpack.c.l.b16 %v414
      %v757 = vunpack.c.h.b16 %v414
      %v758 = vunpack.c.l.b16 %v415
      %v759 = vunpack.c.h.b16 %v415
      %v760 = vunpack.c.l.b16 %v416
      %v761 = vunpack.c.h.b16 %v416
      %v762 = vunpack.c.l.b16 %v417
      %v763 = vunpack.c.h.b16 %v417
      %v764 = vunpack.c.l.b16 %v418
      %v765 = vunpack.c.h.b16 %v418
      %v766 = vunpack.c.l.b16 %v419
      %v767 = vunpack.c.h.b16 %v419
      %v768 = vunpack.c.l.b16 %v420
      %v769 = vunpack.c.h.b16 %v420
      %v770 = vunpack.c.l.b16 %v421
      %v771 = vunpack.c.h.b16 %v421
      %v772 = vunpack.c.l.b16 %v422
      %v773 = vunpack.c.h.b16 %v422
      %v774 = vunpack.c.l.b16 %v423
      %v775 = vunpack.c.h.b16 %v423
      %v776 = vunpack.c.l.b16 %v424
      %v777 = vunpack.c.h.b16 %v424
      %v778 = vunpack.c.l.b16 %v425
      %v779 = vunpack.c.h.b16 %v425
      %v780 = vunpack.c.l.b16 %v426
      %v781 = vunpack.c.h.b16 %v426
      %v782 = vunpack.c.l.b16 %v427
      %v783 = vunpack.c.h.b16 %v427
      %v784 = vunpack.c.l.b16 %v428
      %v785 = vunpack.c.h.b16 %v428
      %v786 = vunpack.c.l.b16 %v429
      %v787 = vunpack.c.h.b16 %v429
      %v788 = vunpack.c.l.b16 %v430
      %v789 = vunpack.c.h.b16 %v430
      %v790 = vunpack.c.l.b16 %v431
      %v791 = vunpack.c.h.b16 %v431
      %v792 = vunpack.c.l.b16 %v432
      %v793 = vunpack.c.h.b16 %v432
      %v794 = vunpack.c.l.b16 %v433
      %v795 = vunpack.c.h.b16 %v433
      %v796 = vunpack.c.l.b16 %v434
      %v797 = vunpack.c.h.b16 %v434
      %v798 = vunpack.c.l.b16 %v435
      %v799 = vunpack.c.h.b16 %v435
      %v800 = vunpack.c.l.b16 %v436
      %v801 = vunpack.c.h.b16 %v436
      %v802 = vunpack.c.l.b16 %v437
      %v803 = vunpack.c.h.b16 %v437
      %v804 = vunpack.c.l.b16 %v438
      %v805 = vunpack.c.h.b16 %v438
      %v806 = vunpack.c.l.b16 %v439
      %v807 = vunpack.c.h.b16 %v439
      %v808 = vunpack.c.l.b16 %v440
      %v809 = vunpack.c.h.b16 %v440
      %v810 = vunpack.c.l.b16 %v441
      %v811 = vunpack.c.h.b16 %v441
      %v812 = vunpack.c.l.b16 %v442
      %v813 = vunpack.c.h.b16 %v442
      %v814 = vunpack.c.l.b16 %v443
      %v815 = vunpack.c.h.b16 %v443
      %v816 = vunpack.c.l.b16 %v444
      %v817 = vunpack.c.h.b16 %v444
      %v818 = vunpack.c.l.b16 %v445
      %v819 = vunpack.c.h.b16 %v445
      %v820 = vunpack.c.l.b16 %v446
      %v821 = vunpack.c.h.b16 %v446
      %v822 = vunpack.c.l.b16 %v447
      %v823 = vunpack.c.h.b16 %v447
      %v824 = vunpack.c.l.b16 %v448
      %v825 = vunpack.c.h.b16 %v448
      %v826 = vunpack.c.l.b16 %v449
      %v827 = vunpack.c.h.b16 %v449
      %v828 = vunpack.c.l.b16 %v450
      %v829 = vunpack.c.h.b16 %v450
      %v830 = vunpack.c.l.b16 %v451
      %v831 = vunpack.c.h.b16 %v451
      %v832 = vunpack.c.l.b16 %v452
      %v833 = vunpack.c.h.b16 %v452
      %v834 = vunpack.c.l.b16 %v453
      %v835 = vunpack.c.h.b16 %v453
      %v836 = vunpack.c.l.b16 %v454
      %v837 = vunpack.c.h.b16 %v454
      %v838 = vunpack.c.l.b16 %v455
      %v839 = vunpack.c.h.b16 %v455
      %v840 = vunpack.c.l.b16 %v456
      %v841 = vunpack.c.h.b16 %v456
      %v842 = vunpack.c.l.b16 %v457
      %v843 = vunpack.c.h.b16 %v457
      %v844 = vunpack.c.l.b16 %v458
      %v845 = vunpack.c.h.b16 %v458
      %v846 = vunpack.c.l.b16 %v459
      %v847 = vunpack.c.h.b16 %v459
      %v848 = vunpack.c.l.b16 %v460
      %v849 = vunpack.c.h.b16 %v460
      %v850 = vunpack.c.l.b16 %v461
      %v851 = vunpack.c.h.b16 %v461
      %v852 = vpack.c.b16 %v724, %v716
      %v853 = vpack.c.b16 %v725, %v717
      %v854 = vpack.c.b16 %v726, %v718
      %v855 = vpack.c.b16 %v727, %v719
      %v856 = vpack.c.b16 %v728, %v720
      %v857 = vpack.c.b16 %v729, %v721
      %v858 = vpack.c.b16 %v730, %v722
      %v859 = vpack.c.b16 %v731, %v723
      %v860 = vpack.c.b16 %v740, %v732
      %v861 = vpack.c.b16 %v741, %v733
      %v862 = vpack.c.b16 %v742, %v734
      %v863 = vpack.c.b16 %v743, %v735
      %v864 = vpack.c.b16 %v744, %v736
      %v865 = vpack.c.b16 %v745, %v737
      %v866 = vpack.c.b16 %v746, %v738
      %v867 = vpack.c.b16 %v747, %v739
      %v868 = vpack.c.b16 %v756, %v748
      %v869 = vpack.c.b16 %v757, %v749
      %v870 = vpack.c.b16 %v758, %v750
      %v871 = vpack.c.b16 %v759, %v751
      %v872 = vpack.c.b16 %v760, %v752
      %v873 = vpack.c.b16 %v761, %v753
      %v874 = vpack.c.b16 %v762, %v754
      %v875 = vpack.c.b16 %v763, %v755
      %v876 = vpack.c.b16 %v772, %v764
      %v877 = vpack.c.b16 %v773, %v765
      %v878 = vpack.c.b16 %v774, %v766
      %v879 = vpack.c.b16 %v775, %v767
      %v880 = vpack.c.b16 %v776, %v768
      %v881 = vpack.c.b16 %v777, %v769
      %v882 = vpack.c.b16 %v778, %v770
      %v883 = vpack.c.b16 %v779, %v771
      %v884 = vpack.c.b16 %v788, %v780
      %v885 = vpack.c.b16 %v789, %v781
      %v886 = vpack.c.b16 %v790, %v782
      %v887 = vpack.c.b16 %v791, %v783
      %v888 = vpack.c.b16 %v792, %v784
      %v889 = vpack.c.b16 %v793, %v785
      %v890 = vpack.c.b16 %v794, %v786
      %v891 = vpack.c.b16 %v795, %v787
      %v892 = vpack.c.b16 %v804, %v796
      %v893 = vpack.c.b16 %v805, %v797
      %v894 = vpack.c.b16 %v806, %v798
      %v895 = vpack.c.b16 %v807, %v799
      %v896 = vpack.c.b16 %v808, %v800
      %v897 = vpack.c.b16 %v809, %v801
      %v898 = vpack.c.b16 %v810, %v802
      %v899 = vpack.c.b16 %v811, %v803
      %v900 = vpack.c.b16 %v820, %v812
      %v901 = vpack.c.b16 %v821, %v813
      %v902 = vpack.c.b16 %v822, %v814
      %v903 = vpack.c.b16 %v823, %v815
      %v904 = vpack.c.b16 %v824, %v816
      %v905 = vpack.c.b16 %v825, %v817
      %v906 = vpack.c.b16 %v826, %v818
      %v907 = vpack.c.b16 %v827, %v819
      %v908 = vpack.c.b16 %v836, %v828
      %v909 = vpack.c.b16 %v837, %v829
      %v910 = vpack.c.b16 %v838, %v830
      %v911 = vpack.c.b16 %v839, %v831
      %v912 = vpack.c.b16 %v840, %v832
      %v913 = vpack.c.b16 %v841, %v833
      %v914 = vpack.c.b16 %v842, %v834
      %v915 = vpack.c.b16 %v843, %v835
      %v916 = vpack.c.b16 %v844, %v844
      %v917 = vpack.c.b16 %v845, %v845
      %v918 = vpack.c.b16 %v846, %v846
      %v919 = vpack.c.b16 %v847, %v847
      %v920 = vpack.c.b16 %v848, %v848
      %v921 = vpack.c.b16 %v849, %v849
      %v922 = vpack.c.b16 %v850, %v850
      %v923 = vpack.c.b16 %v851, %v851
      %vm988 = vcmask 15360
      %v990 = vsel %vm988, %v601, 0
      %v993 = vsel %vm988, %v603, 0
      %v996 = vsel %vm988, %v605, 0
      %v999 = vsel %vm988, %v607, 0
      %v1002 = vsel %vm988, %v609, 0
      %v1005 = vsel %vm988, %v611, 0
      %v1008 = vsel %vm988, %v613, 0
      %v1011 = vsel %vm988, %v615, 0
      %v1014 = vsel %vm988, %v617, 0
      %v1017 = vsel %vm988, %v619, 0
      %v1020 = vsel %vm988, %v621, 0
      %v1023 = vsel %vm988, %v623, 0
      %v1026 = vsel %vm988, %v625, 0
      %v1029 = vsel %vm988, %v627, 0
      %v1032 = vsel %vm988, %v629, 0
      %v1035 = vsel %vm988, %v631, 0
      %vm1037 = vcmask 1040384
      %v1039 = vsel %vm1037, %v916, 0
      %v1042 = vsel %vm1037, %v917, 0
      %v1045 = vsel %vm1037, %v918, 0
      %v1048 = vsel %vm1037, %v919, 0
      %v1051 = vsel %vm1037, %v920, 0
      %v1054 = vsel %vm1037, %v921, 0
      %v1057 = vsel %vm1037, %v922, 0
      %v1060 = vsel %vm1037, %v923, 0
      %1062 = vmatprep.subr.bf16.mxu0 %v853
      %1063 = vmatpush1.bf16.msra.mxu0 %v852
      %1064 = vmatprep.subr.bf16.mxu0 %v861
      %1065 = vmatpush1.bf16.msra.mxu0 %v860
      %1066 = vmatprep.subr.bf16.mxu0 %v869
      %1067 = vmatpush1.bf16.msra.mxu0 %v868
      %1068 = vmatprep.subr.bf16.mxu0 %v877
      %1069 = vmatpush1.bf16.msra.mxu0 %v876
      %1070 = vmatprep.subr.bf16.mxu0 %v885
      %1071 = vmatpush1.bf16.msra.mxu0 %v884
      %1072 = vmatprep.subr.bf16.mxu0 %v893
      %1073 = vmatpush1.bf16.msra.mxu0 %v892
      %1074 = vmatprep.subr.bf16.mxu0 %v901
      %1075 = vmatpush1.bf16.msra.mxu0 %v900
      %1076 = vmatprep.subr.bf16.mxu0 %v909
      %1077 = vmatpush1.bf16.msra.mxu0 %v908
      %1078 = vmatprep.subr.bf16.mxu0 %v1042
      %1079 = vmatpush1.bf16.msra.mxu0 %v1039
      %1080 = vmatprep.subr.bf16.mxu0 0
      %1081 = vmatpush1.bf16.msra.mxu0 0
      %1082 = vmatprep.subr.bf16.mxu0 0
      %1083 = vmatpush1.bf16.msra.mxu0 0
      %1084 = vmatprep.subr.bf16.mxu0 0
      %1085 = vmatpush1.bf16.msra.mxu0 0
      %1086 = vmatprep.subr.bf16.mxu0 0
      %1087 = vmatpush1.bf16.msra.mxu0 0
      %1088 = vmatprep.subr.bf16.mxu0 0
      %1089 = vmatpush1.bf16.msra.mxu0 0
      %1090 = vmatprep.subr.bf16.mxu0 0
      %1091 = vmatpush1.bf16.msra.mxu0 0
      %1092 = vmatprep.subr.bf16.mxu0 0
      %1093 = vmatpush1.bf16.msra.mxu0 0
      %1094 = vmatprep.mubr.bf16.mxu0 %v990
      %1095 = vmatmul.mubr.bf16.gmra.mrb[0].mxu0 %v600
      %v1096 = vpop.f32.mrb[0].mxu0
      %v1097 = vadd.f32 %v467, %v1096
      %v1098 = vpop.f32.mrb[0].mxu0
      %v1099 = vadd.f32 %v471, %v1098
      %v1100 = vpop.f32.mrb[0].mxu0
      %v1101 = vadd.f32 %v467, %v1100
      %v1102 = vpop.f32.mrb[0].mxu0
      %v1103 = vadd.f32 %v471, %v1102
      %1104 = vmatprep.mubr.bf16.mxu0 %v993
      %1105 = vmatmul.mubr.bf16.gmra.mrb[0].mxu0 %v602
      %v1106 = vpop.f32.mrb[0].mxu0
      %v1107 = vadd.f32 %v467, %v1106
      %v1108 = vpop.f32.mrb[0].mxu0
      %v1109 = vadd.f32 %v471, %v1108
      %v1110 = vpop.f32.mrb[0].mxu0
      %v1111 = vadd.f32 %v467, %v1110
      %v1112 = vpop.f32.mrb[0].mxu0
      %v1113 = vadd.f32 %v471, %v1112
      %1114 = vmatprep.mubr.bf16.mxu0 %v996
      %1115 = vmatmul.mubr.bf16.gmra.mrb[0].mxu0 %v604
      %v1116 = vpop.f32.mrb[0].mxu0
      %v1117 = vadd.f32 %v467, %v1116
      %v1118 = vpop.f32.mrb[0].mxu0
      %v1119 = vadd.f32 %v471, %v1118
      %v1120 = vpop.f32.mrb[0].mxu0
      %v1121 = vadd.f32 %v467, %v1120
      %v1122 = vpop.f32.mrb[0].mxu0
      %v1123 = vadd.f32 %v471, %v1122
      %1124 = vmatprep.mubr.bf16.mxu0 %v999
      %1125 = vmatmul.mubr.bf16.gmra.mrb[0].mxu0 %v606
      %v1126 = vpop.f32.mrb[0].mxu0
      %v1127 = vadd.f32 %v467, %v1126
      %v1128 = vpop.f32.mrb[0].mxu0
      %v1129 = vadd.f32 %v471, %v1128
      %v1130 = vpop.f32.mrb[0].mxu0
      %v1131 = vadd.f32 %v467, %v1130
      %v1132 = vpop.f32.mrb[0].mxu0
      %v1133 = vadd.f32 %v471, %v1132
      %1134 = vmatprep.mubr.bf16.mxu0 %v1002
      %1135 = vmatmul.mubr.bf16.gmra.mrb[0].mxu0 %v608
      %v1136 = vpop.f32.mrb[0].mxu0
      %v1137 = vadd.f32 %v467, %v1136
      %v1138 = vpop.f32.mrb[0].mxu0
      %v1139 = vadd.f32 %v471, %v1138
      %v1140 = vpop.f32.mrb[0].mxu0
      %v1141 = vadd.f32 %v467, %v1140
      %v1142 = vpop.f32.mrb[0].mxu0
      %v1143 = vadd.f32 %v471, %v1142
      %1144 = vmatprep.mubr.bf16.mxu0 %v1005
      %1145 = vmatmul.mubr.bf16.gmra.mrb[0].mxu0 %v610
      %v1146 = vpop.f32.mrb[0].mxu0
      %v1147 = vadd.f32 %v467, %v1146
      %v1148 = vpop.f32.mrb[0].mxu0
      %v1149 = vadd.f32 %v471, %v1148
      %v1150 = vpop.f32.mrb[0].mxu0
      %v1151 = vadd.f32 %v467, %v1150
      %v1152 = vpop.f32.mrb[0].mxu0
      %v1153 = vadd.f32 %v471, %v1152
      %1154 = vmatprep.mubr.bf16.mxu0 %v1008
      %1155 = vmatmul.mubr.bf16.gmra.mrb[0].mxu0 %v612
      %v1156 = vpop.f32.mrb[0].mxu0
      %v1157 = vadd.f32 %v467, %v1156
      %v1158 = vpop.f32.mrb[0].mxu0
      %v1159 = vadd.f32 %v471, %v1158
      %v1160 = vpop.f32.mrb[0].mxu0
      %v1161 = vadd.f32 %v467, %v1160
      %v1162 = vpop.f32.mrb[0].mxu0
      %v1163 = vadd.f32 %v471, %v1162
      %1164 = vmatprep.mubr.bf16.mxu0 %v1011
      %1165 = vmatmul.mubr.bf16.gmra.mrb[0].mxu0 %v614
      %v1166 = vpop.f32.mrb[0].mxu0
      %v1167 = vadd.f32 %v467, %v1166
      %v1168 = vpop.f32.mrb[0].mxu0
      %v1169 = vadd.f32 %v471, %v1168
      %v1170 = vpop.f32.mrb[0].mxu0
      %v1171 = vadd.f32 %v467, %v1170
      %v1172 = vpop.f32.mrb[0].mxu0
      %v1173 = vadd.f32 %v471, %v1172
      %1174 = vmatprep.mubr.bf16.mxu0 %v1014
      %1175 = vmatmul.mubr.bf16.gmra.mrb[0].mxu0 %v616
      %v1176 = vpop.f32.mrb[0].mxu0
      %v1177 = vadd.f32 %v467, %v1176
      %v1178 = vpop.f32.mrb[0].mxu0
      %v1179 = vadd.f32 %v471, %v1178
      %v1180 = vpop.f32.mrb[0].mxu0
      %v1181 = vadd.f32 %v467, %v1180
      %v1182 = vpop.f32.mrb[0].mxu0
      %v1183 = vadd.f32 %v471, %v1182
      %1184 = vmatprep.mubr.bf16.mxu0 %v1017
      %1185 = vmatmul.mubr.bf16.gmra.mrb[0].mxu0 %v618
      %v1186 = vpop.f32.mrb[0].mxu0
      %v1187 = vadd.f32 %v467, %v1186
      %v1188 = vpop.f32.mrb[0].mxu0
      %v1189 = vadd.f32 %v471, %v1188
      %v1190 = vpop.f32.mrb[0].mxu0
      %v1191 = vadd.f32 %v467, %v1190
      %v1192 = vpop.f32.mrb[0].mxu0
      %v1193 = vadd.f32 %v471, %v1192
      %1194 = vmatprep.mubr.bf16.mxu0 %v1020
      %1195 = vmatmul.mubr.bf16.gmra.mrb[0].mxu0 %v620
      %v1196 = vpop.f32.mrb[0].mxu0
      %v1197 = vadd.f32 %v467, %v1196
      %v1198 = vpop.f32.mrb[0].mxu0
      %v1199 = vadd.f32 %v471, %v1198
      %v1200 = vpop.f32.mrb[0].mxu0
      %v1201 = vadd.f32 %v467, %v1200
      %v1202 = vpop.f32.mrb[0].mxu0
      %v1203 = vadd.f32 %v471, %v1202
      %1204 = vmatprep.mubr.bf16.mxu0 %v1023
      %1205 = vmatmul.mubr.bf16.gmra.mrb[0].mxu0 %v622
      %v1206 = vpop.f32.mrb[0].mxu0
      %v1207 = vadd.f32 %v467, %v1206
      %v1208 = vpop.f32.mrb[0].mxu0
      %v1209 = vadd.f32 %v471, %v1208
      %v1210 = vpop.f32.mrb[0].mxu0
      %v1211 = vadd.f32 %v467, %v1210
      %v1212 = vpop.f32.mrb[0].mxu0
      %v1213 = vadd.f32 %v471, %v1212
      %1214 = vmatprep.mubr.bf16.mxu0 %v1026
      %1215 = vmatmul.mubr.bf16.gmra.mrb[0].mxu0 %v624
      %v1216 = vpop.f32.mrb[0].mxu0
      %v1217 = vadd.f32 %v467, %v1216
      %v1218 = vpop.f32.mrb[0].mxu0
      %v1219 = vadd.f32 %v471, %v1218
      %v1220 = vpop.f32.mrb[0].mxu0
      %v1221 = vadd.f32 %v467, %v1220
      %v1222 = vpop.f32.mrb[0].mxu0
      %v1223 = vadd.f32 %v471, %v1222
      %1224 = vmatprep.mubr.bf16.mxu0 %v1029
      %1225 = vmatmul.mubr.bf16.gmra.mrb[0].mxu0 %v626
      %v1226 = vpop.f32.mrb[0].mxu0
      %v1227 = vadd.f32 %v467, %v1226
      %v1228 = vpop.f32.mrb[0].mxu0
      %v1229 = vadd.f32 %v471, %v1228
      %v1230 = vpop.f32.mrb[0].mxu0
      %v1231 = vadd.f32 %v467, %v1230
      %v1232 = vpop.f32.mrb[0].mxu0
      %v1233 = vadd.f32 %v471, %v1232
      %1234 = vmatprep.mubr.bf16.mxu0 %v1032
      %1235 = vmatmul.mubr.bf16.gmra.mrb[0].mxu0 %v628
      %v1236 = vpop.f32.mrb[0].mxu0
      %v1237 = vadd.f32 %v467, %v1236
      %v1238 = vpop.f32.mrb[0].mxu0
      %v1239 = vadd.f32 %v471, %v1238
      %v1240 = vpop.f32.mrb[0].mxu0
      %v1241 = vadd.f32 %v467, %v1240
      %v1242 = vpop.f32.mrb[0].mxu0
      %v1243 = vadd.f32 %v471, %v1242
      %1244 = vmatprep.mubr.bf16.mxu0 %v1035
      %1245 = vmatmul.mubr.bf16.gmra.mrb[0].mxu0 %v630
      %v1246 = vpop.f32.mrb[0].mxu0
      %v1247 = vadd.f32 %v467, %v1246
      %v1248 = vpop.f32.mrb[0].mxu0
      %v1249 = vadd.f32 %v471, %v1248
      %v1250 = vpop.f32.mrb[0].mxu0
      %v1251 = vadd.f32 %v467, %v1250
      %v1252 = vpop.f32.mrb[0].mxu0
      %v1253 = vadd.f32 %v471, %v1252
      %1254 = vdwg.mxu0
      %1255 = vmatprep.subr.bf16.mxu0 %v855
      %1256 = vmatpush1.bf16.msra.mxu0 %v854
      %1257 = vmatprep.subr.bf16.mxu0 %v863
      %1258 = vmatpush1.bf16.msra.mxu0 %v862
      %1259 = vmatprep.subr.bf16.mxu0 %v871
      %1260 = vmatpush1.bf16.msra.mxu0 %v870
      %1261 = vmatprep.subr.bf16.mxu0 %v879
      %1262 = vmatpush1.bf16.msra.mxu0 %v878
      %1263 = vmatprep.subr.bf16.mxu0 %v887
      %1264 = vmatpush1.bf16.msra.mxu0 %v886
      %1265 = vmatprep.subr.bf16.mxu0 %v895
      %1266 = vmatpush1.bf16.msra.mxu0 %v894
      %1267 = vmatprep.subr.bf16.mxu0 %v903
      %1268 = vmatpush1.bf16.msra.mxu0 %v902
      %1269 = vmatprep.subr.bf16.mxu0 %v911
      %1270 = vmatpush1.bf16.msra.mxu0 %v910
      %1271 = vmatprep.subr.bf16.mxu0 %v1048
      %1272 = vmatpush1.bf16.msra.mxu0 %v1045
      %1273 = vmatprep.subr.bf16.mxu0 0
      %1274 = vmatpush1.bf16.msra.mxu0 0
      %1275 = vmatprep.subr.bf16.mxu0 0
      %1276 = vmatpush1.bf16.msra.mxu0 0
      %1277 = vmatprep.subr.bf16.mxu0 0
      %1278 = vmatpush1.bf16.msra.mxu0 0
      %1279 = vmatprep.subr.bf16.mxu0 0
      %1280 = vmatpush1.bf16.msra.mxu0 0
      %1281 = vmatprep.subr.bf16.mxu0 0
      %1282 = vmatpush1.bf16.msra.mxu0 0
      %1283 = vmatprep.subr.bf16.mxu0 0
      %1284 = vmatpush1.bf16.msra.mxu0 0
      %1285 = vmatprep.subr.bf16.mxu0 0
      %1286 = vmatpush1.bf16.msra.mxu0 0
      %1287 = vmatprep.mubr.bf16.mxu0 %v990
      %1288 = vmatmul.mubr.bf16.gmra.mrb[0].mxu0 %v600
      %v1289 = vpop.f32.mrb[0].mxu0
      %v1290 = vadd.f32 %v475, %v1289
      %v1291 = vpop.f32.mrb[0].mxu0
      %v1292 = vadd.f32 %v479, %v1291
      %v1293 = vpop.f32.mrb[0].mxu0
      %v1294 = vadd.f32 %v475, %v1293
      %v1295 = vpop.f32.mrb[0].mxu0
      %v1296 = vadd.f32 %v479, %v1295
      %1297 = vmatprep.mubr.bf16.mxu0 %v993
      %1298 = vmatmul.mubr.bf16.gmra.mrb[0].mxu0 %v602
      %v1299 = vpop.f32.mrb[0].mxu0
      %v1300 = vadd.f32 %v475, %v1299
      %v1301 = vpop.f32.mrb[0].mxu0
      %v1302 = vadd.f32 %v479, %v1301
      %v1303 = vpop.f32.mrb[0].mxu0
      %v1304 = vadd.f32 %v475, %v1303
      %v1305 = vpop.f32.mrb[0].mxu0
      %v1306 = vadd.f32 %v479, %v1305
      %1307 = vmatprep.mubr.bf16.mxu0 %v996
      %1308 = vmatmul.mubr.bf16.gmra.mrb[0].mxu0 %v604
      %v1309 = vpop.f32.mrb[0].mxu0
      %v1310 = vadd.f32 %v475, %v1309
      %v1311 = vpop.f32.mrb[0].mxu0
      %v1312 = vadd.f32 %v479, %v1311
      %v1313 = vpop.f32.mrb[0].mxu0
      %v1314 = vadd.f32 %v475, %v1313
      %v1315 = vpop.f32.mrb[0].mxu0
      %v1316 = vadd.f32 %v479, %v1315
      %1317 = vmatprep.mubr.bf16.mxu0 %v999
      %1318 = vmatmul.mubr.bf16.gmra.mrb[0].mxu0 %v606
      %v1319 = vpop.f32.mrb[0].mxu0
      %v1320 = vadd.f32 %v475, %v1319
      %v1321 = vpop.f32.mrb[0].mxu0
      %v1322 = vadd.f32 %v479, %v1321
      %v1323 = vpop.f32.mrb[0].mxu0
      %v1324 = vadd.f32 %v475, %v1323
      %v1325 = vpop.f32.mrb[0].mxu0
      %v1326 = vadd.f32 %v479, %v1325
      %1327 = vmatprep.mubr.bf16.mxu0 %v1002
      %1328 = vmatmul.mubr.bf16.gmra.mrb[0].mxu0 %v608
      %v1329 = vpop.f32.mrb[0].mxu0
      %v1330 = vadd.f32 %v475, %v1329
      %v1331 = vpop.f32.mrb[0].mxu0
      %v1332 = vadd.f32 %v479, %v1331
      %v1333 = vpop.f32.mrb[0].mxu0
      %v1334 = vadd.f32 %v475, %v1333
      %v1335 = vpop.f32.mrb[0].mxu0
      %v1336 = vadd.f32 %v479, %v1335
      %1337 = vmatprep.mubr.bf16.mxu0 %v1005
      %1338 = vmatmul.mubr.bf16.gmra.mrb[0].mxu0 %v610
      %v1339 = vpop.f32.mrb[0].mxu0
      %v1340 = vadd.f32 %v475, %v1339
      %v1341 = vpop.f32.mrb[0].mxu0
      %v1342 = vadd.f32 %v479, %v1341
      %v1343 = vpop.f32.mrb[0].mxu0
      %v1344 = vadd.f32 %v475, %v1343
      %v1345 = vpop.f32.mrb[0].mxu0
      %v1346 = vadd.f32 %v479, %v1345
      %1347 = vmatprep.mubr.bf16.mxu0 %v1008
      %1348 = vmatmul.mubr.bf16.gmra.mrb[0].mxu0 %v612
      %v1349 = vpop.f32.mrb[0].mxu0
      %v1350 = vadd.f32 %v475, %v1349
      %v1351 = vpop.f32.mrb[0].mxu0
      %v1352 = vadd.f32 %v479, %v1351
      %v1353 = vpop.f32.mrb[0].mxu0
      %v1354 = vadd.f32 %v475, %v1353
      %v1355 = vpop.f32.mrb[0].mxu0
      %v1356 = vadd.f32 %v479, %v1355
      %1357 = vmatprep.mubr.bf16.mxu0 %v1011
      %1358 = vmatmul.mubr.bf16.gmra.mrb[0].mxu0 %v614
      %v1359 = vpop.f32.mrb[0].mxu0
      %v1360 = vadd.f32 %v475, %v1359
      %v1361 = vpop.f32.mrb[0].mxu0
      %v1362 = vadd.f32 %v479, %v1361
      %v1363 = vpop.f32.mrb[0].mxu0
      %v1364 = vadd.f32 %v475, %v1363
      %v1365 = vpop.f32.mrb[0].mxu0
      %v1366 = vadd.f32 %v479, %v1365
      %1367 = vmatprep.mubr.bf16.mxu0 %v1014
      %1368 = vmatmul.mubr.bf16.gmra.mrb[0].mxu0 %v616
      %v1369 = vpop.f32.mrb[0].mxu0
      %v1370 = vadd.f32 %v475, %v1369
      %v1371 = vpop.f32.mrb[0].mxu0
      %v1372 = vadd.f32 %v479, %v1371
      %v1373 = vpop.f32.mrb[0].mxu0
      %v1374 = vadd.f32 %v475, %v1373
      %v1375 = vpop.f32.mrb[0].mxu0
      %v1376 = vadd.f32 %v479, %v1375
      %1377 = vmatprep.mubr.bf16.mxu0 %v1017
      %1378 = vmatmul.mubr.bf16.gmra.mrb[0].mxu0 %v618
      %v1379 = vpop.f32.mrb[0].mxu0
      %v1380 = vadd.f32 %v475, %v1379
      %v1381 = vpop.f32.mrb[0].mxu0
      %v1382 = vadd.f32 %v479, %v1381
      %v1383 = vpop.f32.mrb[0].mxu0
      %v1384 = vadd.f32 %v475, %v1383
      %v1385 = vpop.f32.mrb[0].mxu0
      %v1386 = vadd.f32 %v479, %v1385
      %1387 = vmatprep.mubr.bf16.mxu0 %v1020
      %1388 = vmatmul.mubr.bf16.gmra.mrb[0].mxu0 %v620
      %v1389 = vpop.f32.mrb[0].mxu0
      %v1390 = vadd.f32 %v475, %v1389
      %v1391 = vpop.f32.mrb[0].mxu0
      %v1392 = vadd.f32 %v479, %v1391
      %v1393 = vpop.f32.mrb[0].mxu0
      %v1394 = vadd.f32 %v475, %v1393
      %v1395 = vpop.f32.mrb[0].mxu0
      %v1396 = vadd.f32 %v479, %v1395
      %1397 = vmatprep.mubr.bf16.mxu0 %v1023
      %1398 = vmatmul.mubr.bf16.gmra.mrb[0].mxu0 %v622
      %v1399 = vpop.f32.mrb[0].mxu0
      %v1400 = vadd.f32 %v475, %v1399
      %v1401 = vpop.f32.mrb[0].mxu0
      %v1402 = vadd.f32 %v479, %v1401
      %v1403 = vpop.f32.mrb[0].mxu0
      %v1404 = vadd.f32 %v475, %v1403
      %v1405 = vpop.f32.mrb[0].mxu0
      %v1406 = vadd.f32 %v479, %v1405
      %1407 = vmatprep.mubr.bf16.mxu0 %v1026
      %1408 = vmatmul.mubr.bf16.gmra.mrb[0].mxu0 %v624
      %v1409 = vpop.f32.mrb[0].mxu0
      %v1410 = vadd.f32 %v475, %v1409
      %v1411 = vpop.f32.mrb[0].mxu0
      %v1412 = vadd.f32 %v479, %v1411
      %v1413 = vpop.f32.mrb[0].mxu0
      %v1414 = vadd.f32 %v475, %v1413
      %v1415 = vpop.f32.mrb[0].mxu0
      %v1416 = vadd.f32 %v479, %v1415
      %1417 = vmatprep.mubr.bf16.mxu0 %v1029
      %1418 = vmatmul.mubr.bf16.gmra.mrb[0].mxu0 %v626
      %v1419 = vpop.f32.mrb[0].mxu0
      %v1420 = vadd.f32 %v475, %v1419
      %v1421 = vpop.f32.mrb[0].mxu0
      %v1422 = vadd.f32 %v479, %v1421
      %v1423 = vpop.f32.mrb[0].mxu0
      %v1424 = vadd.f32 %v475, %v1423
      %v1425 = vpop.f32.mrb[0].mxu0
      %v1426 = vadd.f32 %v479, %v1425
      %1427 = vmatprep.mubr.bf16.mxu0 %v1032
      %1428 = vmatmul.mubr.bf16.gmra.mrb[0].mxu0 %v628
      %v1429 = vpop.f32.mrb[0].mxu0
      %v1430 = vadd.f32 %v475, %v1429
      %v1431 = vpop.f32.mrb[0].mxu0
      %v1432 = vadd.f32 %v479, %v1431
      %v1433 = vpop.f32.mrb[0].mxu0
      %v1434 = vadd.f32 %v475, %v1433
      %v1435 = vpop.f32.mrb[0].mxu0
      %v1436 = vadd.f32 %v479, %v1435
      %1437 = vmatprep.mubr.bf16.mxu0 %v1035
      %1438 = vmatmul.mubr.bf16.gmra.mrb[0].mxu0 %v630
      %v1439 = vpop.f32.mrb[0].mxu0
      %v1440 = vadd.f32 %v475, %v1439
      %v1441 = vpop.f32.mrb[0].mxu0
      %v1442 = vadd.f32 %v479, %v1441
      %v1443 = vpop.f32.mrb[0].mxu0
      %v1444 = vadd.f32 %v475, %v1443
      %v1445 = vpop.f32.mrb[0].mxu0
      %v1446 = vadd.f32 %v479, %v1445
      %1447 = vdwg.mxu0
      %1448 = vmatprep.subr.bf16.mxu0 %v857
      %1449 = vmatpush1.bf16.msra.mxu0 %v856
      %1450 = vmatprep.subr.bf16.mxu0 %v865
      %1451 = vmatpush1.bf16.msra.mxu0 %v864
      %1452 = vmatprep.subr.bf16.mxu0 %v873
      %1453 = vmatpush1.bf16.msra.mxu0 %v872
      %1454 = vmatprep.subr.bf16.mxu0 %v881
      %1455 = vmatpush1.bf16.msra.mxu0 %v880
      %1456 = vmatprep.subr.bf16.mxu0 %v889
      %1457 = vmatpush1.bf16.msra.mxu0 %v888
      %1458 = vmatprep.subr.bf16.mxu0 %v897
      %1459 = vmatpush1.bf16.msra.mxu0 %v896
      %1460 = vmatprep.subr.bf16.mxu0 %v905
      %1461 = vmatpush1.bf16.msra.mxu0 %v904
      %1462 = vmatprep.subr.bf16.mxu0 %v913
      %1463 = vmatpush1.bf16.msra.mxu0 %v912
      %1464 = vmatprep.subr.bf16.mxu0 %v1054
      %1465 = vmatpush1.bf16.msra.mxu0 %v1051
      %1466 = vmatprep.subr.bf16.mxu0 0
      %1467 = vmatpush1.bf16.msra.mxu0 0
      %1468 = vmatprep.subr.bf16.mxu0 0
      %1469 = vmatpush1.bf16.msra.mxu0 0
      %1470 = vmatprep.subr.bf16.mxu0 0
      %1471 = vmatpush1.bf16.msra.mxu0 0
      %1472 = vmatprep.subr.bf16.mxu0 0
      %1473 = vmatpush1.bf16.msra.mxu0 0
      %1474 = vmatprep.subr.bf16.mxu0 0
      %1475 = vmatpush1.bf16.msra.mxu0 0
      %1476 = vmatprep.subr.bf16.mxu0 0
      %1477 = vmatpush1.bf16.msra.mxu0 0
      %1478 = vmatprep.subr.bf16.mxu0 0
      %1479 = vmatpush1.bf16.msra.mxu0 0
      %1480 = vmatprep.mubr.bf16.mxu0 %v990
      %1481 = vmatmul.mubr.bf16.gmra.mrb[0].mxu0 %v600
      %v1482 = vpop.f32.mrb[0].mxu0
      %v1483 = vadd.f32 %v483, %v1482
      %v1484 = vpop.f32.mrb[0].mxu0
      %v1485 = vadd.f32 %v487, %v1484
      %v1486 = vpop.f32.mrb[0].mxu0
      %v1487 = vadd.f32 %v483, %v1486
      %v1488 = vpop.f32.mrb[0].mxu0
      %v1489 = vadd.f32 %v487, %v1488
      %1490 = vmatprep.mubr.bf16.mxu0 %v993
      %1491 = vmatmul.mubr.bf16.gmra.mrb[0].mxu0 %v602
      %v1492 = vpop.f32.mrb[0].mxu0
      %v1493 = vadd.f32 %v483, %v1492
      %v1494 = vpop.f32.mrb[0].mxu0
      %v1495 = vadd.f32 %v487, %v1494
      %v1496 = vpop.f32.mrb[0].mxu0
      %v1497 = vadd.f32 %v483, %v1496
      %v1498 = vpop.f32.mrb[0].mxu0
      %v1499 = vadd.f32 %v487, %v1498
      %1500 = vmatprep.mubr.bf16.mxu0 %v996
      %1501 = vmatmul.mubr.bf16.gmra.mrb[0].mxu0 %v604
      %v1502 = vpop.f32.mrb[0].mxu0
      %v1503 = vadd.f32 %v483, %v1502
      %v1504 = vpop.f32.mrb[0].mxu0
      %v1505 = vadd.f32 %v487, %v1504
      %v1506 = vpop.f32.mrb[0].mxu0
      %v1507 = vadd.f32 %v483, %v1506
      %v1508 = vpop.f32.mrb[0].mxu0
      %v1509 = vadd.f32 %v487, %v1508
      %1510 = vmatprep.mubr.bf16.mxu0 %v999
      %1511 = vmatmul.mubr.bf16.gmra.mrb[0].mxu0 %v606
      %v1512 = vpop.f32.mrb[0].mxu0
      %v1513 = vadd.f32 %v483, %v1512
      %v1514 = vpop.f32.mrb[0].mxu0
      %v1515 = vadd.f32 %v487, %v1514
      %v1516 = vpop.f32.mrb[0].mxu0
      %v1517 = vadd.f32 %v483, %v1516
      %v1518 = vpop.f32.mrb[0].mxu0
      %v1519 = vadd.f32 %v487, %v1518
      %1520 = vmatprep.mubr.bf16.mxu0 %v1002
      %1521 = vmatmul.mubr.bf16.gmra.mrb[0].mxu0 %v608
      %v1522 = vpop.f32.mrb[0].mxu0
      %v1523 = vadd.f32 %v483, %v1522
      %v1524 = vpop.f32.mrb[0].mxu0
      %v1525 = vadd.f32 %v487, %v1524
      %v1526 = vpop.f32.mrb[0].mxu0
      %v1527 = vadd.f32 %v483, %v1526
      %v1528 = vpop.f32.mrb[0].mxu0
      %v1529 = vadd.f32 %v487, %v1528
      %1530 = vmatprep.mubr.bf16.mxu0 %v1005
      %1531 = vmatmul.mubr.bf16.gmra.mrb[0].mxu0 %v610
      %v1532 = vpop.f32.mrb[0].mxu0
      %v1533 = vadd.f32 %v483, %v1532
      %v1534 = vpop.f32.mrb[0].mxu0
      %v1535 = vadd.f32 %v487, %v1534
      %v1536 = vpop.f32.mrb[0].mxu0
      %v1537 = vadd.f32 %v483, %v1536
      %v1538 = vpop.f32.mrb[0].mxu0
      %v1539 = vadd.f32 %v487, %v1538
      %1540 = vmatprep.mubr.bf16.mxu0 %v1008
      %1541 = vmatmul.mubr.bf16.gmra.mrb[0].mxu0 %v612
      %v1542 = vpop.f32.mrb[0].mxu0
      %v1543 = vadd.f32 %v483, %v1542
      %v1544 = vpop.f32.mrb[0].mxu0
      %v1545 = vadd.f32 %v487, %v1544
      %v1546 = vpop.f32.mrb[0].mxu0
      %v1547 = vadd.f32 %v483, %v1546
      %v1548 = vpop.f32.mrb[0].mxu0
      %v1549 = vadd.f32 %v487, %v1548
      %1550 = vmatprep.mubr.bf16.mxu0 %v1011
      %1551 = vmatmul.mubr.bf16.gmra.mrb[0].mxu0 %v614
      %v1552 = vpop.f32.mrb[0].mxu0
      %v1553 = vadd.f32 %v483, %v1552
      %v1554 = vpop.f32.mrb[0].mxu0
      %v1555 = vadd.f32 %v487, %v1554
      %v1556 = vpop.f32.mrb[0].mxu0
      %v1557 = vadd.f32 %v483, %v1556
      %v1558 = vpop.f32.mrb[0].mxu0
      %v1559 = vadd.f32 %v487, %v1558
      %1560 = vmatprep.mubr.bf16.mxu0 %v1014
      %1561 = vmatmul.mubr.bf16.gmra.mrb[0].mxu0 %v616
      %v1562 = vpop.f32.mrb[0].mxu0
      %v1563 = vadd.f32 %v483, %v1562
      %v1564 = vpop.f32.mrb[0].mxu0
      %v1565 = vadd.f32 %v487, %v1564
      %v1566 = vpop.f32.mrb[0].mxu0
      %v1567 = vadd.f32 %v483, %v1566
      %v1568 = vpop.f32.mrb[0].mxu0
      %v1569 = vadd.f32 %v487, %v1568
      %1570 = vmatprep.mubr.bf16.mxu0 %v1017
      %1571 = vmatmul.mubr.bf16.gmra.mrb[0].mxu0 %v618
      %v1572 = vpop.f32.mrb[0].mxu0
      %v1573 = vadd.f32 %v483, %v1572
      %v1574 = vpop.f32.mrb[0].mxu0
      %v1575 = vadd.f32 %v487, %v1574
      %v1576 = vpop.f32.mrb[0].mxu0
      %v1577 = vadd.f32 %v483, %v1576
      %v1578 = vpop.f32.mrb[0].mxu0
      %v1579 = vadd.f32 %v487, %v1578
      %1580 = vmatprep.mubr.bf16.mxu0 %v1020
      %1581 = vmatmul.mubr.bf16.gmra.mrb[0].mxu0 %v620
      %v1582 = vpop.f32.mrb[0].mxu0
      %v1583 = vadd.f32 %v483, %v1582
      %v1584 = vpop.f32.mrb[0].mxu0
      %v1585 = vadd.f32 %v487, %v1584
      %v1586 = vpop.f32.mrb[0].mxu0
      %v1587 = vadd.f32 %v483, %v1586
      %v1588 = vpop.f32.mrb[0].mxu0
      %v1589 = vadd.f32 %v487, %v1588
      %1590 = vmatprep.mubr.bf16.mxu0 %v1023
      %1591 = vmatmul.mubr.bf16.gmra.mrb[0].mxu0 %v622
      %v1592 = vpop.f32.mrb[0].mxu0
      %v1593 = vadd.f32 %v483, %v1592
      %v1594 = vpop.f32.mrb[0].mxu0
      %v1595 = vadd.f32 %v487, %v1594
      %v1596 = vpop.f32.mrb[0].mxu0
      %v1597 = vadd.f32 %v483, %v1596
      %v1598 = vpop.f32.mrb[0].mxu0
      %v1599 = vadd.f32 %v487, %v1598
      %1600 = vmatprep.mubr.bf16.mxu0 %v1026
      %1601 = vmatmul.mubr.bf16.gmra.mrb[0].mxu0 %v624
      %v1602 = vpop.f32.mrb[0].mxu0
      %v1603 = vadd.f32 %v483, %v1602
      %v1604 = vpop.f32.mrb[0].mxu0
      %v1605 = vadd.f32 %v487, %v1604
      %v1606 = vpop.f32.mrb[0].mxu0
      %v1607 = vadd.f32 %v483, %v1606
      %v1608 = vpop.f32.mrb[0].mxu0
      %v1609 = vadd.f32 %v487, %v1608
      %1610 = vmatprep.mubr.bf16.mxu0 %v1029
      %1611 = vmatmul.mubr.bf16.gmra.mrb[0].mxu0 %v626
      %v1612 = vpop.f32.mrb[0].mxu0
      %v1613 = vadd.f32 %v483, %v1612
      %v1614 = vpop.f32.mrb[0].mxu0
      %v1615 = vadd.f32 %v487, %v1614
      %v1616 = vpop.f32.mrb[0].mxu0
      %v1617 = vadd.f32 %v483, %v1616
      %v1618 = vpop.f32.mrb[0].mxu0
      %v1619 = vadd.f32 %v487, %v1618
      %1620 = vmatprep.mubr.bf16.mxu0 %v1032
      %1621 = vmatmul.mubr.bf16.gmra.mrb[0].mxu0 %v628
      %v1622 = vpop.f32.mrb[0].mxu0
      %v1623 = vadd.f32 %v483, %v1622
      %v1624 = vpop.f32.mrb[0].mxu0
      %v1625 = vadd.f32 %v487, %v1624
      %v1626 = vpop.f32.mrb[0].mxu0
      %v1627 = vadd.f32 %v483, %v1626
      %v1628 = vpop.f32.mrb[0].mxu0
      %v1629 = vadd.f32 %v487, %v1628
      %1630 = vmatprep.mubr.bf16.mxu0 %v1035
      %1631 = vmatmul.mubr.bf16.gmra.mrb[0].mxu0 %v630
      %v1632 = vpop.f32.mrb[0].mxu0
      %v1633 = vadd.f32 %v483, %v1632
      %v1634 = vpop.f32.mrb[0].mxu0
      %v1635 = vadd.f32 %v487, %v1634
      %v1636 = vpop.f32.mrb[0].mxu0
      %v1637 = vadd.f32 %v483, %v1636
      %v1638 = vpop.f32.mrb[0].mxu0
      %v1639 = vadd.f32 %v487, %v1638
      %1640 = vdwg.mxu0
      %1641 = vmatprep.subr.bf16.mxu0 %v859
      %1642 = vmatpush1.bf16.msra.mxu0 %v858
      %1643 = vmatprep.subr.bf16.mxu0 %v867
      %1644 = vmatpush1.bf16.msra.mxu0 %v866
      %1645 = vmatprep.subr.bf16.mxu0 %v875
      %1646 = vmatpush1.bf16.msra.mxu0 %v874
      %1647 = vmatprep.subr.bf16.mxu0 %v883
      %1648 = vmatpush1.bf16.msra.mxu0 %v882
      %1649 = vmatprep.subr.bf16.mxu0 %v891
      %1650 = vmatpush1.bf16.msra.mxu0 %v890
      %1651 = vmatprep.subr.bf16.mxu0 %v899
      %1652 = vmatpush1.bf16.msra.mxu0 %v898
      %1653 = vmatprep.subr.bf16.mxu0 %v907
      %1654 = vmatpush1.bf16.msra.mxu0 %v906
      %1655 = vmatprep.subr.bf16.mxu0 %v915
      %1656 = vmatpush1.bf16.msra.mxu0 %v914
      %1657 = vmatprep.subr.bf16.mxu0 %v1060
      %1658 = vmatpush1.bf16.msra.mxu0 %v1057
      %1659 = vmatprep.subr.bf16.mxu0 0
      %1660 = vmatpush1.bf16.msra.mxu0 0
      %1661 = vmatprep.subr.bf16.mxu0 0
      %1662 = vmatpush1.bf16.msra.mxu0 0
      %1663 = vmatprep.subr.bf16.mxu0 0
      %1664 = vmatpush1.bf16.msra.mxu0 0
      %1665 = vmatprep.subr.bf16.mxu0 0
      %1666 = vmatpush1.bf16.msra.mxu0 0
      %1667 = vmatprep.subr.bf16.mxu0 0
      %1668 = vmatpush1.bf16.msra.mxu0 0
      %1669 = vmatprep.subr.bf16.mxu0 0
      %1670 = vmatpush1.bf16.msra.mxu0 0
      %1671 = vmatprep.subr.bf16.mxu0 0
      %1672 = vmatpush1.bf16.msra.mxu0 0
      %1673 = vmatprep.mubr.bf16.mxu0 %v990
      %1674 = vmatmul.mubr.bf16.gmra.mrb[0].mxu0 %v600
      %v1675 = vpop.f32.mrb[0].mxu0
      %v1676 = vadd.f32 %v491, %v1675
      %v1677 = vpop.f32.mrb[0].mxu0
      %v1678 = vadd.f32 %v495, %v1677
      %v1679 = vpop.f32.mrb[0].mxu0
      %v1680 = vadd.f32 %v491, %v1679
      %v1681 = vpop.f32.mrb[0].mxu0
      %v1682 = vadd.f32 %v495, %v1681
      %1683 = vmatprep.mubr.bf16.mxu0 %v993
      %1684 = vmatmul.mubr.bf16.gmra.mrb[0].mxu0 %v602
      %v1685 = vpop.f32.mrb[0].mxu0
      %v1686 = vadd.f32 %v491, %v1685
      %v1687 = vpop.f32.mrb[0].mxu0
      %v1688 = vadd.f32 %v495, %v1687
      %v1689 = vpop.f32.mrb[0].mxu0
      %v1690 = vadd.f32 %v491, %v1689
      %v1691 = vpop.f32.mrb[0].mxu0
      %v1692 = vadd.f32 %v495, %v1691
      %1693 = vmatprep.mubr.bf16.mxu0 %v996
      %1694 = vmatmul.mubr.bf16.gmra.mrb[0].mxu0 %v604
      %v1695 = vpop.f32.mrb[0].mxu0
      %v1696 = vadd.f32 %v491, %v1695
      %v1697 = vpop.f32.mrb[0].mxu0
      %v1698 = vadd.f32 %v495, %v1697
      %v1699 = vpop.f32.mrb[0].mxu0
      %v1700 = vadd.f32 %v491, %v1699
      %v1701 = vpop.f32.mrb[0].mxu0
      %v1702 = vadd.f32 %v495, %v1701
      %1703 = vmatprep.mubr.bf16.mxu0 %v999
      %1704 = vmatmul.mubr.bf16.gmra.mrb[0].mxu0 %v606
      %v1705 = vpop.f32.mrb[0].mxu0
      %v1706 = vadd.f32 %v491, %v1705
      %v1707 = vpop.f32.mrb[0].mxu0
      %v1708 = vadd.f32 %v495, %v1707
      %v1709 = vpop.f32.mrb[0].mxu0
      %v1710 = vadd.f32 %v491, %v1709
      %v1711 = vpop.f32.mrb[0].mxu0
      %v1712 = vadd.f32 %v495, %v1711
      %1713 = vmatprep.mubr.bf16.mxu0 %v1002
      %1714 = vmatmul.mubr.bf16.gmra.mrb[0].mxu0 %v608
      %v1715 = vpop.f32.mrb[0].mxu0
      %v1716 = vadd.f32 %v491, %v1715
      %v1717 = vpop.f32.mrb[0].mxu0
      %v1718 = vadd.f32 %v495, %v1717
      %v1719 = vpop.f32.mrb[0].mxu0
      %v1720 = vadd.f32 %v491, %v1719
      %v1721 = vpop.f32.mrb[0].mxu0
      %v1722 = vadd.f32 %v495, %v1721
      %1723 = vmatprep.mubr.bf16.mxu0 %v1005
      %1724 = vmatmul.mubr.bf16.gmra.mrb[0].mxu0 %v610
      %v1725 = vpop.f32.mrb[0].mxu0
      %v1726 = vadd.f32 %v491, %v1725
      %v1727 = vpop.f32.mrb[0].mxu0
      %v1728 = vadd.f32 %v495, %v1727
      %v1729 = vpop.f32.mrb[0].mxu0
      %v1730 = vadd.f32 %v491, %v1729
      %v1731 = vpop.f32.mrb[0].mxu0
      %v1732 = vadd.f32 %v495, %v1731
      %1733 = vmatprep.mubr.bf16.mxu0 %v1008
      %1734 = vmatmul.mubr.bf16.gmra.mrb[0].mxu0 %v612
      %v1735 = vpop.f32.mrb[0].mxu0
      %v1736 = vadd.f32 %v491, %v1735
      %v1737 = vpop.f32.mrb[0].mxu0
      %v1738 = vadd.f32 %v495, %v1737
      %v1739 = vpop.f32.mrb[0].mxu0
      %v1740 = vadd.f32 %v491, %v1739
      %v1741 = vpop.f32.mrb[0].mxu0
      %v1742 = vadd.f32 %v495, %v1741
      %1743 = vmatprep.mubr.bf16.mxu0 %v1011
      %1744 = vmatmul.mubr.bf16.gmra.mrb[0].mxu0 %v614
      %v1745 = vpop.f32.mrb[0].mxu0
      %v1746 = vadd.f32 %v491, %v1745
      %v1747 = vpop.f32.mrb[0].mxu0
      %v1748 = vadd.f32 %v495, %v1747
      %v1749 = vpop.f32.mrb[0].mxu0
      %v1750 = vadd.f32 %v491, %v1749
      %v1751 = vpop.f32.mrb[0].mxu0
      %v1752 = vadd.f32 %v495, %v1751
      %1753 = vmatprep.mubr.bf16.mxu0 %v1014
      %1754 = vmatmul.mubr.bf16.gmra.mrb[0].mxu0 %v616
      %v1755 = vpop.f32.mrb[0].mxu0
      %v1756 = vadd.f32 %v491, %v1755
      %v1757 = vpop.f32.mrb[0].mxu0
      %v1758 = vadd.f32 %v495, %v1757
      %v1759 = vpop.f32.mrb[0].mxu0
      %v1760 = vadd.f32 %v491, %v1759
      %v1761 = vpop.f32.mrb[0].mxu0
      %v1762 = vadd.f32 %v495, %v1761
      %1763 = vmatprep.mubr.bf16.mxu0 %v1017
      %1764 = vmatmul.mubr.bf16.gmra.mrb[0].mxu0 %v618
      %v1765 = vpop.f32.mrb[0].mxu0
      %v1766 = vadd.f32 %v491, %v1765
      %v1767 = vpop.f32.mrb[0].mxu0
      %v1768 = vadd.f32 %v495, %v1767
      %v1769 = vpop.f32.mrb[0].mxu0
      %v1770 = vadd.f32 %v491, %v1769
      %v1771 = vpop.f32.mrb[0].mxu0
      %v1772 = vadd.f32 %v495, %v1771
      %1773 = vmatprep.mubr.bf16.mxu0 %v1020
      %1774 = vmatmul.mubr.bf16.gmra.mrb[0].mxu0 %v620
      %v1775 = vpop.f32.mrb[0].mxu0
      %v1776 = vadd.f32 %v491, %v1775
      %v1777 = vpop.f32.mrb[0].mxu0
      %v1778 = vadd.f32 %v495, %v1777
      %v1779 = vpop.f32.mrb[0].mxu0
      %v1780 = vadd.f32 %v491, %v1779
      %v1781 = vpop.f32.mrb[0].mxu0
      %v1782 = vadd.f32 %v495, %v1781
      %1783 = vmatprep.mubr.bf16.mxu0 %v1023
      %1784 = vmatmul.mubr.bf16.gmra.mrb[0].mxu0 %v622
      %v1785 = vpop.f32.mrb[0].mxu0
      %v1786 = vadd.f32 %v491, %v1785
      %v1787 = vpop.f32.mrb[0].mxu0
      %v1788 = vadd.f32 %v495, %v1787
      %v1789 = vpop.f32.mrb[0].mxu0
      %v1790 = vadd.f32 %v491, %v1789
      %v1791 = vpop.f32.mrb[0].mxu0
      %v1792 = vadd.f32 %v495, %v1791
      %1793 = vmatprep.mubr.bf16.mxu0 %v1026
      %1794 = vmatmul.mubr.bf16.gmra.mrb[0].mxu0 %v624
      %v1795 = vpop.f32.mrb[0].mxu0
      %v1796 = vadd.f32 %v491, %v1795
      %v1797 = vpop.f32.mrb[0].mxu0
      %v1798 = vadd.f32 %v495, %v1797
      %v1799 = vpop.f32.mrb[0].mxu0
      %v1800 = vadd.f32 %v491, %v1799
      %v1801 = vpop.f32.mrb[0].mxu0
      %v1802 = vadd.f32 %v495, %v1801
      %1803 = vmatprep.mubr.bf16.mxu0 %v1029
      %1804 = vmatmul.mubr.bf16.gmra.mrb[0].mxu0 %v626
      %v1805 = vpop.f32.mrb[0].mxu0
      %v1806 = vadd.f32 %v491, %v1805
      %v1807 = vpop.f32.mrb[0].mxu0
      %v1808 = vadd.f32 %v495, %v1807
      %v1809 = vpop.f32.mrb[0].mxu0
      %v1810 = vadd.f32 %v491, %v1809
      %v1811 = vpop.f32.mrb[0].mxu0
      %v1812 = vadd.f32 %v495, %v1811
      %1813 = vmatprep.mubr.bf16.mxu0 %v1032
      %1814 = vmatmul.mubr.bf16.gmra.mrb[0].mxu0 %v628
      %v1815 = vpop.f32.mrb[0].mxu0
      %v1816 = vadd.f32 %v491, %v1815
      %v1817 = vpop.f32.mrb[0].mxu0
      %v1818 = vadd.f32 %v495, %v1817
      %v1819 = vpop.f32.mrb[0].mxu0
      %v1820 = vadd.f32 %v491, %v1819
      %v1821 = vpop.f32.mrb[0].mxu0
      %v1822 = vadd.f32 %v495, %v1821
      %1823 = vmatprep.mubr.bf16.mxu0 %v1035
      %1824 = vmatmul.mubr.bf16.gmra.mrb[0].mxu0 %v630
      %v1825 = vpop.f32.mrb[0].mxu0
      %v1826 = vadd.f32 %v491, %v1825
      %v1827 = vpop.f32.mrb[0].mxu0
      %v1828 = vadd.f32 %v495, %v1827
      %v1829 = vpop.f32.mrb[0].mxu0
      %v1830 = vadd.f32 %v491, %v1829
      %v1831 = vpop.f32.mrb[0].mxu0
      %v1832 = vadd.f32 %v495, %v1831
      %1833 = vdwg.mxu0
      %v1834 = vmax.f32 %v1097, 0.0
      %v1835 = vmax.f32 %v1099, 0.0
      %v1836 = vmax.f32 %v1290, 0.0
      %v1837 = vmax.f32 %v1292, 0.0
      %v1838 = vmax.f32 %v1483, 0.0
      %v1839 = vmax.f32 %v1485, 0.0
      %v1840 = vmax.f32 %v1676, 0.0
      %v1841 = vmax.f32 %v1678, 0.0
      %v1842 = vmax.f32 %v1101, 0.0
      %v1843 = vmax.f32 %v1103, 0.0
      %v1844 = vmax.f32 %v1294, 0.0
      %v1845 = vmax.f32 %v1296, 0.0
      %v1846 = vmax.f32 %v1487, 0.0
      %v1847 = vmax.f32 %v1489, 0.0
      %v1848 = vmax.f32 %v1680, 0.0
      %v1849 = vmax.f32 %v1682, 0.0
      %v1850 = vmax.f32 %v1107, 0.0
      %v1851 = vmax.f32 %v1109, 0.0
      %v1852 = vmax.f32 %v1300, 0.0
      %v1853 = vmax.f32 %v1302, 0.0
      %v1854 = vmax.f32 %v1493, 0.0
      %v1855 = vmax.f32 %v1495, 0.0
      %v1856 = vmax.f32 %v1686, 0.0
      %v1857 = vmax.f32 %v1688, 0.0
      %v1858 = vmax.f32 %v1111, 0.0
      %v1859 = vmax.f32 %v1113, 0.0
      %v1860 = vmax.f32 %v1304, 0.0
      %v1861 = vmax.f32 %v1306, 0.0
      %v1862 = vmax.f32 %v1497, 0.0
      %v1863 = vmax.f32 %v1499, 0.0
      %v1864 = vmax.f32 %v1690, 0.0
      %v1865 = vmax.f32 %v1692, 0.0
      %v1866 = vmax.f32 %v1117, 0.0
      %v1867 = vmax.f32 %v1119, 0.0
      %v1868 = vmax.f32 %v1310, 0.0
      %v1869 = vmax.f32 %v1312, 0.0
      %v1870 = vmax.f32 %v1503, 0.0
      %v1871 = vmax.f32 %v1505, 0.0
      %v1872 = vmax.f32 %v1696, 0.0
      %v1873 = vmax.f32 %v1698, 0.0
      %v1874 = vmax.f32 %v1121, 0.0
      %v1875 = vmax.f32 %v1123, 0.0
      %v1876 = vmax.f32 %v1314, 0.0
      %v1877 = vmax.f32 %v1316, 0.0
      %v1878 = vmax.f32 %v1507, 0.0
      %v1879 = vmax.f32 %v1509, 0.0
      %v1880 = vmax.f32 %v1700, 0.0
      %v1881 = vmax.f32 %v1702, 0.0
      %v1882 = vmax.f32 %v1127, 0.0
      %v1883 = vmax.f32 %v1129, 0.0
      %v1884 = vmax.f32 %v1320, 0.0
      %v1885 = vmax.f32 %v1322, 0.0
      %v1886 = vmax.f32 %v1513, 0.0
      %v1887 = vmax.f32 %v1515, 0.0
      %v1888 = vmax.f32 %v1706, 0.0
      %v1889 = vmax.f32 %v1708, 0.0
      %v1890 = vmax.f32 %v1131, 0.0
      %v1891 = vmax.f32 %v1133, 0.0
      %v1892 = vmax.f32 %v1324, 0.0
      %v1893 = vmax.f32 %v1326, 0.0
      %v1894 = vmax.f32 %v1517, 0.0
      %v1895 = vmax.f32 %v1519, 0.0
      %v1896 = vmax.f32 %v1710, 0.0
      %v1897 = vmax.f32 %v1712, 0.0
      %v1898 = vmax.f32 %v1137, 0.0
      %v1899 = vmax.f32 %v1139, 0.0
      %v1900 = vmax.f32 %v1330, 0.0
      %v1901 = vmax.f32 %v1332, 0.0
      %v1902 = vmax.f32 %v1523, 0.0
      %v1903 = vmax.f32 %v1525, 0.0
      %v1904 = vmax.f32 %v1716, 0.0
      %v1905 = vmax.f32 %v1718, 0.0
      %v1906 = vmax.f32 %v1141, 0.0
      %v1907 = vmax.f32 %v1143, 0.0
      %v1908 = vmax.f32 %v1334, 0.0
      %v1909 = vmax.f32 %v1336, 0.0
      %v1910 = vmax.f32 %v1527, 0.0
      %v1911 = vmax.f32 %v1529, 0.0
      %v1912 = vmax.f32 %v1720, 0.0
      %v1913 = vmax.f32 %v1722, 0.0
      %v1914 = vmax.f32 %v1147, 0.0
      %v1915 = vmax.f32 %v1149, 0.0
      %v1916 = vmax.f32 %v1340, 0.0
      %v1917 = vmax.f32 %v1342, 0.0
      %v1918 = vmax.f32 %v1533, 0.0
      %v1919 = vmax.f32 %v1535, 0.0
      %v1920 = vmax.f32 %v1726, 0.0
      %v1921 = vmax.f32 %v1728, 0.0
      %v1922 = vmax.f32 %v1151, 0.0
      %v1923 = vmax.f32 %v1153, 0.0
      %v1924 = vmax.f32 %v1344, 0.0
      %v1925 = vmax.f32 %v1346, 0.0
      %v1926 = vmax.f32 %v1537, 0.0
      %v1927 = vmax.f32 %v1539, 0.0
      %v1928 = vmax.f32 %v1730, 0.0
      %v1929 = vmax.f32 %v1732, 0.0
      %v1930 = vmax.f32 %v1157, 0.0
      %v1931 = vmax.f32 %v1159, 0.0
      %v1932 = vmax.f32 %v1350, 0.0
      %v1933 = vmax.f32 %v1352, 0.0
      %v1934 = vmax.f32 %v1543, 0.0
      %v1935 = vmax.f32 %v1545, 0.0
      %v1936 = vmax.f32 %v1736, 0.0
      %v1937 = vmax.f32 %v1738, 0.0
      %v1938 = vmax.f32 %v1161, 0.0
      %v1939 = vmax.f32 %v1163, 0.0
      %v1940 = vmax.f32 %v1354, 0.0
      %v1941 = vmax.f32 %v1356, 0.0
      %v1942 = vmax.f32 %v1547, 0.0
      %v1943 = vmax.f32 %v1549, 0.0
      %v1944 = vmax.f32 %v1740, 0.0
      %v1945 = vmax.f32 %v1742, 0.0
      %v1946 = vmax.f32 %v1167, 0.0
      %v1947 = vmax.f32 %v1169, 0.0
      %v1948 = vmax.f32 %v1360, 0.0
      %v1949 = vmax.f32 %v1362, 0.0
      %v1950 = vmax.f32 %v1553, 0.0
      %v1951 = vmax.f32 %v1555, 0.0
      %v1952 = vmax.f32 %v1746, 0.0
      %v1953 = vmax.f32 %v1748, 0.0
      %v1954 = vmax.f32 %v1171, 0.0
      %v1955 = vmax.f32 %v1173, 0.0
      %v1956 = vmax.f32 %v1364, 0.0
      %v1957 = vmax.f32 %v1366, 0.0
      %v1958 = vmax.f32 %v1557, 0.0
      %v1959 = vmax.f32 %v1559, 0.0
      %v1960 = vmax.f32 %v1750, 0.0
      %v1961 = vmax.f32 %v1752, 0.0
      %v1962 = vmax.f32 %v1177, 0.0
      %v1963 = vmax.f32 %v1179, 0.0
      %v1964 = vmax.f32 %v1370, 0.0
      %v1965 = vmax.f32 %v1372, 0.0
      %v1966 = vmax.f32 %v1563, 0.0
      %v1967 = vmax.f32 %v1565, 0.0
      %v1968 = vmax.f32 %v1756, 0.0
      %v1969 = vmax.f32 %v1758, 0.0
      %v1970 = vmax.f32 %v1181, 0.0
      %v1971 = vmax.f32 %v1183, 0.0
      %v1972 = vmax.f32 %v1374, 0.0
      %v1973 = vmax.f32 %v1376, 0.0
      %v1974 = vmax.f32 %v1567, 0.0
      %v1975 = vmax.f32 %v1569, 0.0
      %v1976 = vmax.f32 %v1760, 0.0
      %v1977 = vmax.f32 %v1762, 0.0
      %v1978 = vmax.f32 %v1187, 0.0
      %v1979 = vmax.f32 %v1189, 0.0
      %v1980 = vmax.f32 %v1380, 0.0
      %v1981 = vmax.f32 %v1382, 0.0
      %v1982 = vmax.f32 %v1573, 0.0
      %v1983 = vmax.f32 %v1575, 0.0
      %v1984 = vmax.f32 %v1766, 0.0
      %v1985 = vmax.f32 %v1768, 0.0
      %v1986 = vmax.f32 %v1191, 0.0
      %v1987 = vmax.f32 %v1193, 0.0
      %v1988 = vmax.f32 %v1384, 0.0
      %v1989 = vmax.f32 %v1386, 0.0
      %v1990 = vmax.f32 %v1577, 0.0
      %v1991 = vmax.f32 %v1579, 0.0
      %v1992 = vmax.f32 %v1770, 0.0
      %v1993 = vmax.f32 %v1772, 0.0
      %v1994 = vmax.f32 %v1197, 0.0
      %v1995 = vmax.f32 %v1199, 0.0
      %v1996 = vmax.f32 %v1390, 0.0
      %v1997 = vmax.f32 %v1392, 0.0
      %v1998 = vmax.f32 %v1583, 0.0
      %v1999 = vmax.f32 %v1585, 0.0
      %v2000 = vmax.f32 %v1776, 0.0
      %v2001 = vmax.f32 %v1778, 0.0
      %v2002 = vmax.f32 %v1201, 0.0
      %v2003 = vmax.f32 %v1203, 0.0
      %v2004 = vmax.f32 %v1394, 0.0
      %v2005 = vmax.f32 %v1396, 0.0
      %v2006 = vmax.f32 %v1587, 0.0
      %v2007 = vmax.f32 %v1589, 0.0
      %v2008 = vmax.f32 %v1780, 0.0
      %v2009 = vmax.f32 %v1782, 0.0
      %v2010 = vmax.f32 %v1207, 0.0
      %v2011 = vmax.f32 %v1209, 0.0
      %v2012 = vmax.f32 %v1400, 0.0
      %v2013 = vmax.f32 %v1402, 0.0
      %v2014 = vmax.f32 %v1593, 0.0
      %v2015 = vmax.f32 %v1595, 0.0
      %v2016 = vmax.f32 %v1786, 0.0
      %v2017 = vmax.f32 %v1788, 0.0
      %v2018 = vmax.f32 %v1211, 0.0
      %v2019 = vmax.f32 %v1213, 0.0
      %v2020 = vmax.f32 %v1404, 0.0
      %v2021 = vmax.f32 %v1406, 0.0
      %v2022 = vmax.f32 %v1597, 0.0
      %v2023 = vmax.f32 %v1599, 0.0
      %v2024 = vmax.f32 %v1790, 0.0
      %v2025 = vmax.f32 %v1792, 0.0
      %v2026 = vmax.f32 %v1217, 0.0
      %v2027 = vmax.f32 %v1219, 0.0
      %v2028 = vmax.f32 %v1410, 0.0
      %v2029 = vmax.f32 %v1412, 0.0
      %v2030 = vmax.f32 %v1603, 0.0
      %v2031 = vmax.f32 %v1605, 0.0
      %v2032 = vmax.f32 %v1796, 0.0
      %v2033 = vmax.f32 %v1798, 0.0
      %v2034 = vmax.f32 %v1221, 0.0
      %v2035 = vmax.f32 %v1223, 0.0
      %v2036 = vmax.f32 %v1414, 0.0
      %v2037 = vmax.f32 %v1416, 0.0
      %v2038 = vmax.f32 %v1607, 0.0
      %v2039 = vmax.f32 %v1609, 0.0
      %v2040 = vmax.f32 %v1800, 0.0
      %v2041 = vmax.f32 %v1802, 0.0
      %v2042 = vmax.f32 %v1227, 0.0
      %v2043 = vmax.f32 %v1229, 0.0
      %v2044 = vmax.f32 %v1420, 0.0
      %v2045 = vmax.f32 %v1422, 0.0
      %v2046 = vmax.f32 %v1613, 0.0
      %v2047 = vmax.f32 %v1615, 0.0
      %v2048 = vmax.f32 %v1806, 0.0
      %v2049 = vmax.f32 %v1808, 0.0
      %v2050 = vmax.f32 %v1231, 0.0
      %v2051 = vmax.f32 %v1233, 0.0
      %v2052 = vmax.f32 %v1424, 0.0
      %v2053 = vmax.f32 %v1426, 0.0
      %v2054 = vmax.f32 %v1617, 0.0
      %v2055 = vmax.f32 %v1619, 0.0
      %v2056 = vmax.f32 %v1810, 0.0
      %v2057 = vmax.f32 %v1812, 0.0
      %v2058 = vmax.f32 %v1237, 0.0
      %v2059 = vmax.f32 %v1239, 0.0
      %v2060 = vmax.f32 %v1430, 0.0
      %v2061 = vmax.f32 %v1432, 0.0
      %v2062 = vmax.f32 %v1623, 0.0
      %v2063 = vmax.f32 %v1625, 0.0
      %v2064 = vmax.f32 %v1816, 0.0
      %v2065 = vmax.f32 %v1818, 0.0
      %v2066 = vmax.f32 %v1241, 0.0
      %v2067 = vmax.f32 %v1243, 0.0
      %v2068 = vmax.f32 %v1434, 0.0
      %v2069 = vmax.f32 %v1436, 0.0
      %v2070 = vmax.f32 %v1627, 0.0
      %v2071 = vmax.f32 %v1629, 0.0
      %v2072 = vmax.f32 %v1820, 0.0
      %v2073 = vmax.f32 %v1822, 0.0
      %v2074 = vmax.f32 %v1247, 0.0
      %v2075 = vmax.f32 %v1249, 0.0
      %v2076 = vmax.f32 %v1440, 0.0
      %v2077 = vmax.f32 %v1442, 0.0
      %v2078 = vmax.f32 %v1633, 0.0
      %v2079 = vmax.f32 %v1635, 0.0
      %v2080 = vmax.f32 %v1826, 0.0
      %v2081 = vmax.f32 %v1828, 0.0
      %v2082 = vmax.f32 %v1251, 0.0
      %v2083 = vmax.f32 %v1253, 0.0
      %v2084 = vmax.f32 %v1444, 0.0
      %v2085 = vmax.f32 %v1446, 0.0
      %v2086 = vmax.f32 %v1637, 0.0
      %v2087 = vmax.f32 %v1639, 0.0
      %v2088 = vmax.f32 %v1830, 0.0
      %v2089 = vmax.f32 %v1832, 0.0
      %v2090 = vpack.c.bf16 %v1842, %v1834
      %v2091 = vpack.c.bf16 %v1843, %v1835
      %v2092 = vpack.c.bf16 %v1844, %v1836
      %v2093 = vpack.c.bf16 %v1845, %v1837
      %v2094 = vpack.c.bf16 %v1846, %v1838
      %v2095 = vpack.c.bf16 %v1847, %v1839
      %v2096 = vpack.c.bf16 %v1848, %v1840
      %v2097 = vpack.c.bf16 %v1849, %v1841
      %v2098 = vpack.c.bf16 %v1858, %v1850
      %v2099 = vpack.c.bf16 %v1859, %v1851
      %v2100 = vpack.c.bf16 %v1860, %v1852
      %v2101 = vpack.c.bf16 %v1861, %v1853
      %v2102 = vpack.c.bf16 %v1862, %v1854
      %v2103 = vpack.c.bf16 %v1863, %v1855
      %v2104 = vpack.c.bf16 %v1864, %v1856
      %v2105 = vpack.c.bf16 %v1865, %v1857
      %v2106 = vpack.c.bf16 %v1874, %v1866
      %v2107 = vpack.c.bf16 %v1875, %v1867
      %v2108 = vpack.c.bf16 %v1876, %v1868
      %v2109 = vpack.c.bf16 %v1877, %v1869
      %v2110 = vpack.c.bf16 %v1878, %v1870
      %v2111 = vpack.c.bf16 %v1879, %v1871
      %v2112 = vpack.c.bf16 %v1880, %v1872
      %v2113 = vpack.c.bf16 %v1881, %v1873
      %v2114 = vpack.c.bf16 %v1890, %v1882
      %v2115 = vpack.c.bf16 %v1891, %v1883
      %v2116 = vpack.c.bf16 %v1892, %v1884
      %v2117 = vpack.c.bf16 %v1893, %v1885
      %v2118 = vpack.c.bf16 %v1894, %v1886
      %v2119 = vpack.c.bf16 %v1895, %v1887
      %v2120 = vpack.c.bf16 %v1896, %v1888
      %v2121 = vpack.c.bf16 %v1897, %v1889
      %v2122 = vpack.c.bf16 %v1906, %v1898
      %v2123 = vpack.c.bf16 %v1907, %v1899
      %v2124 = vpack.c.bf16 %v1908, %v1900
      %v2125 = vpack.c.bf16 %v1909, %v1901
      %v2126 = vpack.c.bf16 %v1910, %v1902
      %v2127 = vpack.c.bf16 %v1911, %v1903
      %v2128 = vpack.c.bf16 %v1912, %v1904
      %v2129 = vpack.c.bf16 %v1913, %v1905
      %v2130 = vpack.c.bf16 %v1922, %v1914
      %v2131 = vpack.c.bf16 %v1923, %v1915
      %v2132 = vpack.c.bf16 %v1924, %v1916
      %v2133 = vpack.c.bf16 %v1925, %v1917
      %v2134 = vpack.c.bf16 %v1926, %v1918
      %v2135 = vpack.c.bf16 %v1927, %v1919
      %v2136 = vpack.c.bf16 %v1928, %v1920
      %v2137 = vpack.c.bf16 %v1929, %v1921
      %v2138 = vpack.c.bf16 %v1938, %v1930
      %v2139 = vpack.c.bf16 %v1939, %v1931
      %v2140 = vpack.c.bf16 %v1940, %v1932
      %v2141 = vpack.c.bf16 %v1941, %v1933
      %v2142 = vpack.c.bf16 %v1942, %v1934
      %v2143 = vpack.c.bf16 %v1943, %v1935
      %v2144 = vpack.c.bf16 %v1944, %v1936
      %v2145 = vpack.c.bf16 %v1945, %v1937
      %v2146 = vpack.c.bf16 %v1954, %v1946
      %v2147 = vpack.c.bf16 %v1955, %v1947
      %v2148 = vpack.c.bf16 %v1956, %v1948
      %v2149 = vpack.c.bf16 %v1957, %v1949
      %v2150 = vpack.c.bf16 %v1958, %v1950
      %v2151 = vpack.c.bf16 %v1959, %v1951
      %v2152 = vpack.c.bf16 %v1960, %v1952
      %v2153 = vpack.c.bf16 %v1961, %v1953
      %v2154 = vpack.c.bf16 %v1970, %v1962
      %v2155 = vpack.c.bf16 %v1971, %v1963
      %v2156 = vpack.c.bf16 %v1972, %v1964
      %v2157 = vpack.c.bf16 %v1973, %v1965
      %v2158 = vpack.c.bf16 %v1974, %v1966
      %v2159 = vpack.c.bf16 %v1975, %v1967
      %v2160 = vpack.c.bf16 %v1976, %v1968
      %v2161 = vpack.c.bf16 %v1977, %v1969
      %v2162 = vpack.c.bf16 %v1986, %v1978
      %v2163 = vpack.c.bf16 %v1987, %v1979
      %v2164 = vpack.c.bf16 %v1988, %v1980
      %v2165 = vpack.c.bf16 %v1989, %v1981
      %v2166 = vpack.c.bf16 %v1990, %v1982
      %v2167 = vpack.c.bf16 %v1991, %v1983
      %v2168 = vpack.c.bf16 %v1992, %v1984
      %v2169 = vpack.c.bf16 %v1993, %v1985
      %v2170 = vpack.c.bf16 %v2002, %v1994
      %v2171 = vpack.c.bf16 %v2003, %v1995
      %v2172 = vpack.c.bf16 %v2004, %v1996
      %v2173 = vpack.c.bf16 %v2005, %v1997
      %v2174 = vpack.c.bf16 %v2006, %v1998
      %v2175 = vpack.c.bf16 %v2007, %v1999
      %v2176 = vpack.c.bf16 %v2008, %v2000
      %v2177 = vpack.c.bf16 %v2009, %v2001
      %v2178 = vpack.c.bf16 %v2018, %v2010
      %v2179 = vpack.c.bf16 %v2019, %v2011
      %v2180 = vpack.c.bf16 %v2020, %v2012
      %v2181 = vpack.c.bf16 %v2021, %v2013
      %v2182 = vpack.c.bf16 %v2022, %v2014
      %v2183 = vpack.c.bf16 %v2023, %v2015
      %v2184 = vpack.c.bf16 %v2024, %v2016
      %v2185 = vpack.c.bf16 %v2025, %v2017
      %v2186 = vpack.c.bf16 %v2034, %v2026
      %v2187 = vpack.c.bf16 %v2035, %v2027
      %v2188 = vpack.c.bf16 %v2036, %v2028
      %v2189 = vpack.c.bf16 %v2037, %v2029
      %v2190 = vpack.c.bf16 %v2038, %v2030
      %v2191 = vpack.c.bf16 %v2039, %v2031
      %v2192 = vpack.c.bf16 %v2040, %v2032
      %v2193 = vpack.c.bf16 %v2041, %v2033
      %v2194 = vpack.c.bf16 %v2050, %v2042
      %v2195 = vpack.c.bf16 %v2051, %v2043
      %v2196 = vpack.c.bf16 %v2052, %v2044
      %v2197 = vpack.c.bf16 %v2053, %v2045
      %v2198 = vpack.c.bf16 %v2054, %v2046
      %v2199 = vpack.c.bf16 %v2055, %v2047
      %v2200 = vpack.c.bf16 %v2056, %v2048
      %v2201 = vpack.c.bf16 %v2057, %v2049
      %v2202 = vpack.c.bf16 %v2066, %v2058
      %v2203 = vpack.c.bf16 %v2067, %v2059
      %v2204 = vpack.c.bf16 %v2068, %v2060
      %v2205 = vpack.c.bf16 %v2069, %v2061
      %v2206 = vpack.c.bf16 %v2070, %v2062
      %v2207 = vpack.c.bf16 %v2071, %v2063
      %v2208 = vpack.c.bf16 %v2072, %v2064
      %v2209 = vpack.c.bf16 %v2073, %v2065
      %v2210 = vpack.c.bf16 %v2082, %v2074
      %v2211 = vpack.c.bf16 %v2083, %v2075
      %v2212 = vpack.c.bf16 %v2084, %v2076
      %v2213 = vpack.c.bf16 %v2085, %v2077
      %v2214 = vpack.c.bf16 %v2086, %v2078
      %v2215 = vpack.c.bf16 %v2087, %v2079
      %v2216 = vpack.c.bf16 %v2088, %v2080
      %v2217 = vpack.c.bf16 %v2089, %v2081
      %v2218 = vld [vmem:[%s4] sm:$0xff]
      %v2219 = vld [vmem:[%s4 + $0x8] sm:$0xff]
      %v2220 = vld [vmem:[%s4 + $0x10] sm:$0xff]
      %v2221 = vld [vmem:[%s4 + $0x18] sm:$0xff]
      %v2222 = vld [vmem:[%s4 + $0x20] sm:$0xff]
      %v2223 = vld [vmem:[%s4 + $0x28] sm:$0xff]
      %v2224 = vld [vmem:[%s4 + $0x30] sm:$0xff]
      %v2225 = vld [vmem:[%s4 + $0x38] sm:$0xff]
      %v2226 = vld [vmem:[%s4 + $0x40] sm:$0xff]
      %v2227 = vld [vmem:[%s4 + $0x48] sm:$0xff]
      %v2228 = vld [vmem:[%s4 + $0x50] sm:$0xff]
      %v2229 = vld [vmem:[%s4 + $0x58] sm:$0xff]
      %v2230 = vld [vmem:[%s4 + $0x60] sm:$0xff]
      %v2231 = vld [vmem:[%s4 + $0x68] sm:$0xff]
      %v2232 = vld [vmem:[%s4 + $0x70] sm:$0xff]
      %v2233 = vld [vmem:[%s4 + $0x78] sm:$0xff]
      %v2234 = vld [vmem:[%s4 + $0x80] sm:$0xff]
      %v2235 = vld [vmem:[%s4 + $0x88] sm:$0xff]
      %v2236 = vld [vmem:[%s4 + $0x90] sm:$0xff]
      %v2237 = vld [vmem:[%s4 + $0x98] sm:$0xff]
      %v2238 = vld [vmem:[%s4 + $0xa0] sm:$0xff]
      %v2239 = vld [vmem:[%s4 + $0xa8] sm:$0xff]
      %v2240 = vld [vmem:[%s4 + $0xb0] sm:$0xff]
      %v2241 = vld [vmem:[%s4 + $0xb8] sm:$0xff]
      %v2242 = vld [vmem:[%s4 + $0xc0] sm:$0xff]
      %v2243 = vld [vmem:[%s4 + $0xc8] sm:$0xff]
      %v2244 = vld [vmem:[%s4 + $0xd0] sm:$0xff]
      %v2245 = vld [vmem:[%s4 + $0xd8] sm:$0xff]
      %v2246 = vld [vmem:[%s4 + $0xe0] sm:$0xff]
      %v2247 = vld [vmem:[%s4 + $0xe8] sm:$0xff]
      %v2248 = vld [vmem:[%s4 + $0xf0] sm:$0xff]
      %v2249 = vld [vmem:[%s4 + $0xf8] sm:$0xff]
      %v2250 = vld [vmem:[%s4 + $0x100] sm:$0xff]
      %v2251 = vld [vmem:[%s4 + $0x108] sm:$0xff]
      %v2252 = vld [vmem:[%s4 + $0x110] sm:$0xff]
      %v2253 = vld [vmem:[%s4 + $0x118] sm:$0xff]
      %v2254 = vld [vmem:[%s4 + $0x120] sm:$0xff]
      %v2255 = vld [vmem:[%s4 + $0x128] sm:$0xff]
      %v2256 = vld [vmem:[%s4 + $0x130] sm:$0xff]
      %v2257 = vld [vmem:[%s4 + $0x138] sm:$0xff]
      %v2258 = vld [vmem:[%s4 + $0x140] sm:$0xff]
      %v2259 = vld [vmem:[%s4 + $0x148] sm:$0xff]
      %v2260 = vld [vmem:[%s4 + $0x150] sm:$0xff]
      %v2261 = vld [vmem:[%s4 + $0x158] sm:$0xff]
      %v2262 = vld [vmem:[%s4 + $0x160] sm:$0xff]
      %v2263 = vld [vmem:[%s4 + $0x168] sm:$0xff]
      %v2264 = vld [vmem:[%s4 + $0x170] sm:$0xff]
      %v2265 = vld [vmem:[%s4 + $0x178] sm:$0xff]
      %v2266 = vld [vmem:[%s4 + $0x180] sm:$0xff]
      %v2267 = vld [vmem:[%s4 + $0x188] sm:$0xff]
      %v2268 = vld [vmem:[%s4 + $0x190] sm:$0xff]
      %v2269 = vld [vmem:[%s4 + $0x198] sm:$0xff]
      %v2270 = vld [vmem:[%s4 + $0x1a0] sm:$0xff]
      %v2271 = vld [vmem:[%s4 + $0x1a8] sm:$0xff]
      %v2272 = vld [vmem:[%s4 + $0x1b0] sm:$0xff]
      %v2273 = vld [vmem:[%s4 + $0x1b8] sm:$0xff]
      %v2274 = vld [vmem:[%s4 + $0x1c0] sm:$0xff]
      %v2275 = vld [vmem:[%s4 + $0x1c8] sm:$0xff]
      %v2276 = vld [vmem:[%s4 + $0x1d0] sm:$0xff]
      %v2277 = vld [vmem:[%s4 + $0x1d8] sm:$0xff]
      %v2278 = vld [vmem:[%s4 + $0x1e0] sm:$0xff]
      %v2279 = vld [vmem:[%s4 + $0x1e8] sm:$0xff]
      %v2280 = vld [vmem:[%s4 + $0x1f0] sm:$0xff]
      %v2281 = vld [vmem:[%s4 + $0x1f8] sm:$0xff]
      %v2282 = vld [vmem:[%s4 + $0x200] sm:$0xff]
      %v2283 = vld [vmem:[%s4 + $0x208] sm:$0xff]
      %v2284 = vld [vmem:[%s4 + $0x210] sm:$0xff]
      %v2285 = vld [vmem:[%s4 + $0x218] sm:$0xff]
      %v2286 = vld [vmem:[%s4 + $0x220] sm:$0xff]
      %v2287 = vld [vmem:[%s4 + $0x228] sm:$0xff]
      %v2288 = vld [vmem:[%s4 + $0x230] sm:$0xff]
      %v2289 = vld [vmem:[%s4 + $0x238] sm:$0xff]
      %v2290 = vld [vmem:[%s4 + $0x240] sm:$0xff]
      %v2291 = vld [vmem:[%s4 + $0x248] sm:$0xff]
      %v2292 = vld [vmem:[%s4 + $0x250] sm:$0xff]
      %v2293 = vld [vmem:[%s4 + $0x258] sm:$0xff]
      %v2294 = vld [vmem:[%s4 + $0x260] sm:$0xff]
      %v2295 = vld [vmem:[%s4 + $0x268] sm:$0xff]
      %v2296 = vld [vmem:[%s4 + $0x270] sm:$0xff]
      %v2297 = vld [vmem:[%s4 + $0x278] sm:$0xff]
      %v2298 = vld [vmem:[%s4 + $0x280] sm:$0xff]
      %v2299 = vld [vmem:[%s4 + $0x288] sm:$0xff]
      %v2300 = vld [vmem:[%s4 + $0x290] sm:$0xff]
      %v2301 = vld [vmem:[%s4 + $0x298] sm:$0xff]
      %v2302 = vld [vmem:[%s4 + $0x2a0] sm:$0xff]
      %v2303 = vld [vmem:[%s4 + $0x2a8] sm:$0xff]
      %v2304 = vld [vmem:[%s4 + $0x2b0] sm:$0xff]
      %v2305 = vld [vmem:[%s4 + $0x2b8] sm:$0xff]
      %v2306 = vld [vmem:[%s4 + $0x2c0] sm:$0xff]
      %v2307 = vld [vmem:[%s4 + $0x2c8] sm:$0xff]
      %v2308 = vld [vmem:[%s4 + $0x2d0] sm:$0xff]
      %v2309 = vld [vmem:[%s4 + $0x2d8] sm:$0xff]
      %v2310 = vld [vmem:[%s4 + $0x2e0] sm:$0xff]
      %v2311 = vld [vmem:[%s4 + $0x2e8] sm:$0xff]
      %v2312 = vld [vmem:[%s4 + $0x2f0] sm:$0xff]
      %v2313 = vld [vmem:[%s4 + $0x2f8] sm:$0xff]
      %v2314 = vld [vmem:[%s4 + $0x300] sm:$0xff]
      %v2315 = vld [vmem:[%s4 + $0x308] sm:$0xff]
      %v2316 = vld [vmem:[%s4 + $0x310] sm:$0xff]
      %v2317 = vld [vmem:[%s4 + $0x318] sm:$0xff]
      %v2318 = vld [vmem:[%s4 + $0x320] sm:$0xff]
      %v2319 = vld [vmem:[%s4 + $0x328] sm:$0xff]
      %v2320 = vld [vmem:[%s4 + $0x330] sm:$0xff]
      %v2321 = vld [vmem:[%s4 + $0x338] sm:$0xff]
      %v2322 = vld [vmem:[%s4 + $0x340] sm:$0xff]
      %v2323 = vld [vmem:[%s4 + $0x348] sm:$0xff]
      %v2324 = vld [vmem:[%s4 + $0x350] sm:$0xff]
      %v2325 = vld [vmem:[%s4 + $0x358] sm:$0xff]
      %v2326 = vld [vmem:[%s4 + $0x360] sm:$0xff]
      %v2327 = vld [vmem:[%s4 + $0x368] sm:$0xff]
      %v2328 = vld [vmem:[%s4 + $0x370] sm:$0xff]
      %v2329 = vld [vmem:[%s4 + $0x378] sm:$0xff]
      %v2330 = vld [vmem:[%s4 + $0x380] sm:$0xff]
      %v2331 = vld [vmem:[%s4 + $0x388] sm:$0xff]
      %v2332 = vld [vmem:[%s4 + $0x390] sm:$0xff]
      %v2333 = vld [vmem:[%s4 + $0x398] sm:$0xff]
      %v2334 = vld [vmem:[%s4 + $0x3a0] sm:$0xff]
      %v2335 = vld [vmem:[%s4 + $0x3a8] sm:$0xff]
      %v2336 = vld [vmem:[%s4 + $0x3b0] sm:$0xff]
      %v2337 = vld [vmem:[%s4 + $0x3b8] sm:$0xff]
      %v2338 = vld [vmem:[%s4 + $0x3c0] sm:$0xff]
      %v2339 = vld [vmem:[%s4 + $0x3c8] sm:$0xff]
      %v2340 = vld [vmem:[%s4 + $0x3d0] sm:$0xff]
      %v2341 = vld [vmem:[%s4 + $0x3d8] sm:$0xff]
      %v2342 = vld [vmem:[%s4 + $0x3e0] sm:$0xff]
      %v2343 = vld [vmem:[%s4 + $0x3e8] sm:$0xff]
      %v2344 = vld [vmem:[%s4 + $0x3f0] sm:$0xff]
      %v2345 = vld [vmem:[%s4 + $0x3f8] sm:$0xff]
      %v2346 = vld [vmem:[%s4 + $0x400] sm:$0xff]
      %v2347 = vld [vmem:[%s4 + $0x408] sm:$0xff]
      %v2348 = vld [vmem:[%s4 + $0x410] sm:$0xff]
      %v2349 = vld [vmem:[%s4 + $0x418] sm:$0xff]
      %v2350 = vld [vmem:[%s4 + $0x420] sm:$0xff]
      %v2351 = vld [vmem:[%s4 + $0x428] sm:$0xff]
      %v2352 = vld [vmem:[%s4 + $0x430] sm:$0xff]
      %v2353 = vld [vmem:[%s4 + $0x438] sm:$0xff]
      %v2354 = vld [vmem:[%s4 + $0x440] sm:$0xff]
      %v2355 = vld [vmem:[%s4 + $0x448] sm:$0xff]
      %v2356 = vld [vmem:[%s4 + $0x450] sm:$0xff]
      %v2357 = vld [vmem:[%s4 + $0x458] sm:$0xff]
      %v2358 = vld [vmem:[%s4 + $0x460] sm:$0xff]
      %v2359 = vld [vmem:[%s4 + $0x468] sm:$0xff]
      %v2360 = vld [vmem:[%s4 + $0x470] sm:$0xff]
      %v2361 = vld [vmem:[%s4 + $0x478] sm:$0xff]
      %v2362 = vld [vmem:[%s4 + $0x480] sm:$0xff]
      %v2363 = vld [vmem:[%s4 + $0x488] sm:$0xff]
      %v2364 = vld [vmem:[%s4 + $0x490] sm:$0xff]
      %v2365 = vld [vmem:[%s4 + $0x498] sm:$0xff]
      %v2366 = vld [vmem:[%s4 + $0x4a0] sm:$0xff]
      %v2367 = vld [vmem:[%s4 + $0x4a8] sm:$0xff]
      %v2368 = vld [vmem:[%s4 + $0x4b0] sm:$0xff]
      %v2369 = vld [vmem:[%s4 + $0x4b8] sm:$0xff]
      %v2370 = vld [vmem:[%s4 + $0x4c0] sm:$0xff]
      %v2371 = vld [vmem:[%s4 + $0x4c8] sm:$0xff]
      %v2372 = vld [vmem:[%s4 + $0x4d0] sm:$0xff]
      %v2373 = vld [vmem:[%s4 + $0x4d8] sm:$0xff]
      %v2374 = vld [vmem:[%s4 + $0x4e0] sm:$0xff]
      %v2375 = vld [vmem:[%s4 + $0x4e8] sm:$0xff]
      %v2376 = vld [vmem:[%s4 + $0x4f0] sm:$0xff]
      %v2377 = vld [vmem:[%s4 + $0x4f8] sm:$0xff]
      %v2378 = vld [vmem:[%s4 + $0x500] sm:$0xff]
      %v2379 = vld [vmem:[%s4 + $0x508] sm:$0xff]
      %v2380 = vld [vmem:[%s4 + $0x510] sm:$0xff]
      %v2381 = vld [vmem:[%s4 + $0x518] sm:$0xff]
      %v2382 = vld [vmem:[%s4 + $0x520] sm:$0xff]
      %v2383 = vld [vmem:[%s4 + $0x528] sm:$0xff]
      %v2384 = vld [vmem:[%s4 + $0x530] sm:$0xff]
      %v2385 = vld [vmem:[%s4 + $0x538] sm:$0xff]
      %v2386 = vld [vmem:[%s4 + $0x540] sm:$0xff]
      %v2387 = vld [vmem:[%s4 + $0x548] sm:$0xff]
      %v2388 = vld [vmem:[%s4 + $0x550] sm:$0xff]
      %v2389 = vld [vmem:[%s4 + $0x558] sm:$0xff]
      %v2390 = vld [vmem:[%s4 + $0x560] sm:$0xff]
      %v2391 = vld [vmem:[%s4 + $0x568] sm:$0xff]
      %v2392 = vld [vmem:[%s4 + $0x570] sm:$0xff]
      %v2393 = vld [vmem:[%s4 + $0x578] sm:$0xff]
      %v2394 = vld [vmem:[%s4 + $0x580] sm:$0xff]
      %v2395 = vld [vmem:[%s4 + $0x588] sm:$0xff]
      %v2396 = vld [vmem:[%s4 + $0x590] sm:$0xff]
      %v2397 = vld [vmem:[%s4 + $0x598] sm:$0xff]
      %v2398 = vld [vmem:[%s4 + $0x5a0] sm:$0xff]
      %v2399 = vld [vmem:[%s4 + $0x5a8] sm:$0xff]
      %v2400 = vld [vmem:[%s4 + $0x5b0] sm:$0xff]
      %v2401 = vld [vmem:[%s4 + $0x5b8] sm:$0xff]
      %v2402 = vld [vmem:[%s4 + $0x5c0] sm:$0xff]
      %v2403 = vld [vmem:[%s4 + $0x5c8] sm:$0xff]
      %v2404 = vld [vmem:[%s4 + $0x5d0] sm:$0xff]
      %v2405 = vld [vmem:[%s4 + $0x5d8] sm:$0xff]
      %v2406 = vld [vmem:[%s4 + $0x5e0] sm:$0xff]
      %v2407 = vld [vmem:[%s4 + $0x5e8] sm:$0xff]
      %v2408 = vld [vmem:[%s4 + $0x5f0] sm:$0xff]
      %v2409 = vld [vmem:[%s4 + $0x5f8] sm:$0xff]
      %v2410 = vld [vmem:[%s4 + $0x600] sm:$0xff]
      %v2411 = vld [vmem:[%s4 + $0x608] sm:$0xff]
      %v2412 = vld [vmem:[%s4 + $0x610] sm:$0xff]
      %v2413 = vld [vmem:[%s4 + $0x618] sm:$0xff]
      %v2414 = vld [vmem:[%s4 + $0x620] sm:$0xff]
      %v2415 = vld [vmem:[%s4 + $0x628] sm:$0xff]
      %v2416 = vld [vmem:[%s4 + $0x630] sm:$0xff]
      %v2417 = vld [vmem:[%s4 + $0x638] sm:$0xff]
      %v2418 = vld [vmem:[%s4 + $0x640] sm:$0xff]
      %v2419 = vld [vmem:[%s4 + $0x648] sm:$0xff]
      %v2420 = vld [vmem:[%s4 + $0x650] sm:$0xff]
      %v2421 = vld [vmem:[%s4 + $0x658] sm:$0xff]
      %v2422 = vld [vmem:[%s4 + $0x660] sm:$0xff]
      %v2423 = vld [vmem:[%s4 + $0x668] sm:$0xff]
      %v2424 = vld [vmem:[%s4 + $0x670] sm:$0xff]
      %v2425 = vld [vmem:[%s4 + $0x678] sm:$0xff]
      %v2426 = vld [vmem:[%s4 + $0x680] sm:$0xff]
      %v2427 = vld [vmem:[%s4 + $0x688] sm:$0xff]
      %v2428 = vld [vmem:[%s4 + $0x690] sm:$0xff]
      %v2429 = vld [vmem:[%s4 + $0x698] sm:$0xff]
      %v2430 = vld [vmem:[%s4 + $0x6a0] sm:$0xff]
      %v2431 = vld [vmem:[%s4 + $0x6a8] sm:$0xff]
      %v2432 = vld [vmem:[%s4 + $0x6b0] sm:$0xff]
      %v2433 = vld [vmem:[%s4 + $0x6b8] sm:$0xff]
      %v2434 = vld [vmem:[%s4 + $0x6c0] sm:$0xff]
      %v2435 = vld [vmem:[%s4 + $0x6c8] sm:$0xff]
      %v2436 = vld [vmem:[%s4 + $0x6d0] sm:$0xff]
      %v2437 = vld [vmem:[%s4 + $0x6d8] sm:$0xff]
      %v2438 = vld [vmem:[%s4 + $0x6e0] sm:$0xff]
      %v2439 = vld [vmem:[%s4 + $0x6e8] sm:$0xff]
      %v2440 = vld [vmem:[%s4 + $0x6f0] sm:$0xff]
      %v2441 = vld [vmem:[%s4 + $0x6f8] sm:$0xff]
      %v2442 = vld [vmem:[%s4 + $0x700] sm:$0xff]
      %v2443 = vld [vmem:[%s4 + $0x708] sm:$0xff]
      %v2444 = vld [vmem:[%s4 + $0x710] sm:$0xff]
      %v2445 = vld [vmem:[%s4 + $0x718] sm:$0xff]
      %v2446 = vld [vmem:[%s4 + $0x720] sm:$0xff]
      %v2447 = vld [vmem:[%s4 + $0x728] sm:$0xff]
      %v2448 = vld [vmem:[%s4 + $0x730] sm:$0xff]
      %v2449 = vld [vmem:[%s4 + $0x738] sm:$0xff]
      %v2450 = vld [vmem:[%s4 + $0x740] sm:$0xff]
      %v2451 = vld [vmem:[%s4 + $0x748] sm:$0xff]
      %v2452 = vld [vmem:[%s4 + $0x750] sm:$0xff]
      %v2453 = vld [vmem:[%s4 + $0x758] sm:$0xff]
      %v2454 = vld [vmem:[%s4 + $0x760] sm:$0xff]
      %v2455 = vld [vmem:[%s4 + $0x768] sm:$0xff]
      %v2456 = vld [vmem:[%s4 + $0x770] sm:$0xff]
      %v2457 = vld [vmem:[%s4 + $0x778] sm:$0xff]
      %v2458 = vld [vmem:[%s4 + $0x780] sm:$0xff]
      %v2459 = vld [vmem:[%s4 + $0x788] sm:$0xff]
      %v2460 = vld [vmem:[%s4 + $0x790] sm:$0xff]
      %v2461 = vld [vmem:[%s4 + $0x798] sm:$0xff]
      %v2462 = vld [vmem:[%s4 + $0x7a0] sm:$0xff]
      %v2463 = vld [vmem:[%s4 + $0x7a8] sm:$0xff]
      %v2464 = vld [vmem:[%s4 + $0x7b0] sm:$0xff]
      %v2465 = vld [vmem:[%s4 + $0x7b8] sm:$0xff]
      %v2466 = vld [vmem:[%s4 + $0x7c0] sm:$0xff]
      %v2467 = vld [vmem:[%s4 + $0x7c8] sm:$0xff]
      %v2468 = vld [vmem:[%s4 + $0x7d0] sm:$0xff]
      %v2469 = vld [vmem:[%s4 + $0x7d8] sm:$0xff]
      %v2470 = vld [vmem:[%s4 + $0x7e0] sm:$0xff]
      %v2471 = vld [vmem:[%s4 + $0x7e8] sm:$0xff]
      %v2472 = vld [vmem:[%s4 + $0x7f0] sm:$0xff]
      %v2473 = vld [vmem:[%s4 + $0x7f8] sm:$0xff]
      %v2474 = vld [vmem:[%s5] sm:$0xf]
      %v2476 = vlaneseq
      %v2477 = vshrl.u32 %v2476, 7
      %v2478 = vsub.s32 0, %v2477
      %v2479 = vrot.slane %v2474, %v2478
      %v2480 = vlaneseq
      %v2481 = vshrl.u32 %v2480, 7
      %v2482 = vsub.s32 1, %v2481
      %v2483 = vrot.slane %v2474, %v2482
      %v2484 = vlaneseq
      %v2485 = vshrl.u32 %v2484, 7
      %v2486 = vsub.s32 2, %v2485
      %v2487 = vrot.slane %v2474, %v2486
      %v2488 = vlaneseq
      %v2489 = vshrl.u32 %v2488, 7
      %v2490 = vsub.s32 3, %v2489
      %v2491 = vrot.slane %v2474, %v2490
      %v2752 = vunpack.c.l.b16 %v2218
      %v2753 = vunpack.c.h.b16 %v2218
      %v2754 = vunpack.c.l.b16 %v2219
      %v2755 = vunpack.c.h.b16 %v2219
      %v2756 = vunpack.c.l.b16 %v2220
      %v2757 = vunpack.c.h.b16 %v2220
      %v2758 = vunpack.c.l.b16 %v2221
      %v2759 = vunpack.c.h.b16 %v2221
      %v2760 = vunpack.c.l.b16 %v2222
      %v2761 = vunpack.c.h.b16 %v2222
      %v2762 = vunpack.c.l.b16 %v2223
      %v2763 = vunpack.c.h.b16 %v2223
      %v2764 = vunpack.c.l.b16 %v2224
      %v2765 = vunpack.c.h.b16 %v2224
      %v2766 = vunpack.c.l.b16 %v2225
      %v2767 = vunpack.c.h.b16 %v2225
      %v2768 = vunpack.c.l.b16 %v2226
      %v2769 = vunpack.c.h.b16 %v2226
      %v2770 = vunpack.c.l.b16 %v2227
      %v2771 = vunpack.c.h.b16 %v2227
      %v2772 = vunpack.c.l.b16 %v2228
      %v2773 = vunpack.c.h.b16 %v2228
      %v2774 = vunpack.c.l.b16 %v2229
      %v2775 = vunpack.c.h.b16 %v2229
      %v2776 = vunpack.c.l.b16 %v2230
      %v2777 = vunpack.c.h.b16 %v2230
      %v2778 = vunpack.c.l.b16 %v2231
      %v2779 = vunpack.c.h.b16 %v2231
      %v2780 = vunpack.c.l.b16 %v2232
      %v2781 = vunpack.c.h.b16 %v2232
      %v2782 = vunpack.c.l.b16 %v2233
      %v2783 = vunpack.c.h.b16 %v2233
      %v2784 = vunpack.c.l.b16 %v2234
      %v2785 = vunpack.c.h.b16 %v2234
      %v2786 = vunpack.c.l.b16 %v2235
      %v2787 = vunpack.c.h.b16 %v2235
      %v2788 = vunpack.c.l.b16 %v2236
      %v2789 = vunpack.c.h.b16 %v2236
      %v2790 = vunpack.c.l.b16 %v2237
      %v2791 = vunpack.c.h.b16 %v2237
      %v2792 = vunpack.c.l.b16 %v2238
      %v2793 = vunpack.c.h.b16 %v2238
      %v2794 = vunpack.c.l.b16 %v2239
      %v2795 = vunpack.c.h.b16 %v2239
      %v2796 = vunpack.c.l.b16 %v2240
      %v2797 = vunpack.c.h.b16 %v2240
      %v2798 = vunpack.c.l.b16 %v2241
      %v2799 = vunpack.c.h.b16 %v2241
      %v2800 = vunpack.c.l.b16 %v2242
      %v2801 = vunpack.c.h.b16 %v2242
      %v2802 = vunpack.c.l.b16 %v2243
      %v2803 = vunpack.c.h.b16 %v2243
      %v2804 = vunpack.c.l.b16 %v2244
      %v2805 = vunpack.c.h.b16 %v2244
      %v2806 = vunpack.c.l.b16 %v2245
      %v2807 = vunpack.c.h.b16 %v2245
      %v2808 = vunpack.c.l.b16 %v2246
      %v2809 = vunpack.c.h.b16 %v2246
      %v2810 = vunpack.c.l.b16 %v2247
      %v2811 = vunpack.c.h.b16 %v2247
      %v2812 = vunpack.c.l.b16 %v2248
      %v2813 = vunpack.c.h.b16 %v2248
      %v2814 = vunpack.c.l.b16 %v2249
      %v2815 = vunpack.c.h.b16 %v2249
      %v2816 = vunpack.c.l.b16 %v2250
      %v2817 = vunpack.c.h.b16 %v2250
      %v2818 = vunpack.c.l.b16 %v2251
      %v2819 = vunpack.c.h.b16 %v2251
      %v2820 = vunpack.c.l.b16 %v2252
      %v2821 = vunpack.c.h.b16 %v2252
      %v2822 = vunpack.c.l.b16 %v2253
      %v2823 = vunpack.c.h.b16 %v2253
      %v2824 = vunpack.c.l.b16 %v2254
      %v2825 = vunpack.c.h.b16 %v2254
      %v2826 = vunpack.c.l.b16 %v2255
      %v2827 = vunpack.c.h.b16 %v2255
      %v2828 = vunpack.c.l.b16 %v2256
      %v2829 = vunpack.c.h.b16 %v2256
      %v2830 = vunpack.c.l.b16 %v2257
      %v2831 = vunpack.c.h.b16 %v2257
      %v2832 = vunpack.c.l.b16 %v2258
      %v2833 = vunpack.c.h.b16 %v2258
      %v2834 = vunpack.c.l.b16 %v2259
      %v2835 = vunpack.c.h.b16 %v2259
      %v2836 = vunpack.c.l.b16 %v2260
      %v2837 = vunpack.c.h.b16 %v2260
      %v2838 = vunpack.c.l.b16 %v2261
      %v2839 = vunpack.c.h.b16 %v2261
      %v2840 = vunpack.c.l.b16 %v2262
      %v2841 = vunpack.c.h.b16 %v2262
      %v2842 = vunpack.c.l.b16 %v2263
      %v2843 = vunpack.c.h.b16 %v2263
      %v2844 = vunpack.c.l.b16 %v2264
      %v2845 = vunpack.c.h.b16 %v2264
      %v2846 = vunpack.c.l.b16 %v2265
      %v2847 = vunpack.c.h.b16 %v2265
      %v2848 = vunpack.c.l.b16 %v2266
      %v2849 = vunpack.c.h.b16 %v2266
      %v2850 = vunpack.c.l.b16 %v2267
      %v2851 = vunpack.c.h.b16 %v2267
      %v2852 = vunpack.c.l.b16 %v2268
      %v2853 = vunpack.c.h.b16 %v2268
      %v2854 = vunpack.c.l.b16 %v2269
      %v2855 = vunpack.c.h.b16 %v2269
      %v2856 = vunpack.c.l.b16 %v2270
      %v2857 = vunpack.c.h.b16 %v2270
      %v2858 = vunpack.c.l.b16 %v2271
      %v2859 = vunpack.c.h.b16 %v2271
      %v2860 = vunpack.c.l.b16 %v2272
      %v2861 = vunpack.c.h.b16 %v2272
      %v2862 = vunpack.c.l.b16 %v2273
      %v2863 = vunpack.c.h.b16 %v2273
      %v2864 = vunpack.c.l.b16 %v2274
      %v2865 = vunpack.c.h.b16 %v2274
      %v2866 = vunpack.c.l.b16 %v2275
      %v2867 = vunpack.c.h.b16 %v2275
      %v2868 = vunpack.c.l.b16 %v2276
      %v2869 = vunpack.c.h.b16 %v2276
      %v2870 = vunpack.c.l.b16 %v2277
      %v2871 = vunpack.c.h.b16 %v2277
      %v2872 = vunpack.c.l.b16 %v2278
      %v2873 = vunpack.c.h.b16 %v2278
      %v2874 = vunpack.c.l.b16 %v2279
      %v2875 = vunpack.c.h.b16 %v2279
      %v2876 = vunpack.c.l.b16 %v2280
      %v2877 = vunpack.c.h.b16 %v2280
      %v2878 = vunpack.c.l.b16 %v2281
      %v2879 = vunpack.c.h.b16 %v2281
      %v2880 = vunpack.c.l.b16 %v2282
      %v2881 = vunpack.c.h.b16 %v2282
      %v2882 = vunpack.c.l.b16 %v2283
      %v2883 = vunpack.c.h.b16 %v2283
      %v2884 = vunpack.c.l.b16 %v2284
      %v2885 = vunpack.c.h.b16 %v2284
      %v2886 = vunpack.c.l.b16 %v2285
      %v2887 = vunpack.c.h.b16 %v2285
      %v2888 = vunpack.c.l.b16 %v2286
      %v2889 = vunpack.c.h.b16 %v2286
      %v2890 = vunpack.c.l.b16 %v2287
      %v2891 = vunpack.c.h.b16 %v2287
      %v2892 = vunpack.c.l.b16 %v2288
      %v2893 = vunpack.c.h.b16 %v2288
      %v2894 = vunpack.c.l.b16 %v2289
      %v2895 = vunpack.c.h.b16 %v2289
      %v2896 = vunpack.c.l.b16 %v2290
      %v2897 = vunpack.c.h.b16 %v2290
      %v2898 = vunpack.c.l.b16 %v2291
      %v2899 = vunpack.c.h.b16 %v2291
      %v2900 = vunpack.c.l.b16 %v2292
      %v2901 = vunpack.c.h.b16 %v2292
      %v2902 = vunpack.c.l.b16 %v2293
      %v2903 = vunpack.c.h.b16 %v2293
      %v2904 = vunpack.c.l.b16 %v2294
      %v2905 = vunpack.c.h.b16 %v2294
      %v2906 = vunpack.c.l.b16 %v2295
      %v2907 = vunpack.c.h.b16 %v2295
      %v2908 = vunpack.c.l.b16 %v2296
      %v2909 = vunpack.c.h.b16 %v2296
      %v2910 = vunpack.c.l.b16 %v2297
      %v2911 = vunpack.c.h.b16 %v2297
      %v2912 = vunpack.c.l.b16 %v2298
      %v2913 = vunpack.c.h.b16 %v2298
      %v2914 = vunpack.c.l.b16 %v2299
      %v2915 = vunpack.c.h.b16 %v2299
      %v2916 = vunpack.c.l.b16 %v2300
      %v2917 = vunpack.c.h.b16 %v2300
      %v2918 = vunpack.c.l.b16 %v2301
      %v2919 = vunpack.c.h.b16 %v2301
      %v2920 = vunpack.c.l.b16 %v2302
      %v2921 = vunpack.c.h.b16 %v2302
      %v2922 = vunpack.c.l.b16 %v2303
      %v2923 = vunpack.c.h.b16 %v2303
      %v2924 = vunpack.c.l.b16 %v2304
      %v2925 = vunpack.c.h.b16 %v2304
      %v2926 = vunpack.c.l.b16 %v2305
      %v2927 = vunpack.c.h.b16 %v2305
      %v2928 = vunpack.c.l.b16 %v2306
      %v2929 = vunpack.c.h.b16 %v2306
      %v2930 = vunpack.c.l.b16 %v2307
      %v2931 = vunpack.c.h.b16 %v2307
      %v2932 = vunpack.c.l.b16 %v2308
      %v2933 = vunpack.c.h.b16 %v2308
      %v2934 = vunpack.c.l.b16 %v2309
      %v2935 = vunpack.c.h.b16 %v2309
      %v2936 = vunpack.c.l.b16 %v2310
      %v2937 = vunpack.c.h.b16 %v2310
      %v2938 = vunpack.c.l.b16 %v2311
      %v2939 = vunpack.c.h.b16 %v2311
      %v2940 = vunpack.c.l.b16 %v2312
      %v2941 = vunpack.c.h.b16 %v2312
      %v2942 = vunpack.c.l.b16 %v2313
      %v2943 = vunpack.c.h.b16 %v2313
      %v2944 = vunpack.c.l.b16 %v2314
      %v2945 = vunpack.c.h.b16 %v2314
      %v2946 = vunpack.c.l.b16 %v2315
      %v2947 = vunpack.c.h.b16 %v2315
      %v2948 = vunpack.c.l.b16 %v2316
      %v2949 = vunpack.c.h.b16 %v2316
      %v2950 = vunpack.c.l.b16 %v2317
      %v2951 = vunpack.c.h.b16 %v2317
      %v2952 = vunpack.c.l.b16 %v2318
      %v2953 = vunpack.c.h.b16 %v2318
      %v2954 = vunpack.c.l.b16 %v2319
      %v2955 = vunpack.c.h.b16 %v2319
      %v2956 = vunpack.c.l.b16 %v2320
      %v2957 = vunpack.c.h.b16 %v2320
      %v2958 = vunpack.c.l.b16 %v2321
      %v2959 = vunpack.c.h.b16 %v2321
      %v2960 = vunpack.c.l.b16 %v2322
      %v2961 = vunpack.c.h.b16 %v2322
      %v2962 = vunpack.c.l.b16 %v2323
      %v2963 = vunpack.c.h.b16 %v2323
      %v2964 = vunpack.c.l.b16 %v2324
      %v2965 = vunpack.c.h.b16 %v2324
      %v2966 = vunpack.c.l.b16 %v2325
      %v2967 = vunpack.c.h.b16 %v2325
      %v2968 = vunpack.c.l.b16 %v2326
      %v2969 = vunpack.c.h.b16 %v2326
      %v2970 = vunpack.c.l.b16 %v2327
      %v2971 = vunpack.c.h.b16 %v2327
      %v2972 = vunpack.c.l.b16 %v2328
      %v2973 = vunpack.c.h.b16 %v2328
      %v2974 = vunpack.c.l.b16 %v2329
      %v2975 = vunpack.c.h.b16 %v2329
      %v2976 = vunpack.c.l.b16 %v2330
      %v2977 = vunpack.c.h.b16 %v2330
      %v2978 = vunpack.c.l.b16 %v2331
      %v2979 = vunpack.c.h.b16 %v2331
      %v2980 = vunpack.c.l.b16 %v2332
      %v2981 = vunpack.c.h.b16 %v2332
      %v2982 = vunpack.c.l.b16 %v2333
      %v2983 = vunpack.c.h.b16 %v2333
      %v2984 = vunpack.c.l.b16 %v2334
      %v2985 = vunpack.c.h.b16 %v2334
      %v2986 = vunpack.c.l.b16 %v2335
      %v2987 = vunpack.c.h.b16 %v2335
      %v2988 = vunpack.c.l.b16 %v2336
      %v2989 = vunpack.c.h.b16 %v2336
      %v2990 = vunpack.c.l.b16 %v2337
      %v2991 = vunpack.c.h.b16 %v2337
      %v2992 = vunpack.c.l.b16 %v2338
      %v2993 = vunpack.c.h.b16 %v2338
      %v2994 = vunpack.c.l.b16 %v2339
      %v2995 = vunpack.c.h.b16 %v2339
      %v2996 = vunpack.c.l.b16 %v2340
      %v2997 = vunpack.c.h.b16 %v2340
      %v2998 = vunpack.c.l.b16 %v2341
      %v2999 = vunpack.c.h.b16 %v2341
      %v3000 = vunpack.c.l.b16 %v2342
      %v3001 = vunpack.c.h.b16 %v2342
      %v3002 = vunpack.c.l.b16 %v2343
      %v3003 = vunpack.c.h.b16 %v2343
      %v3004 = vunpack.c.l.b16 %v2344
      %v3005 = vunpack.c.h.b16 %v2344
      %v3006 = vunpack.c.l.b16 %v2345
      %v3007 = vunpack.c.h.b16 %v2345
      %v3008 = vunpack.c.l.b16 %v2346
      %v3009 = vunpack.c.h.b16 %v2346
      %v3010 = vunpack.c.l.b16 %v2347
      %v3011 = vunpack.c.h.b16 %v2347
      %v3012 = vunpack.c.l.b16 %v2348
      %v3013 = vunpack.c.h.b16 %v2348
      %v3014 = vunpack.c.l.b16 %v2349
      %v3015 = vunpack.c.h.b16 %v2349
      %v3016 = vunpack.c.l.b16 %v2350
      %v3017 = vunpack.c.h.b16 %v2350
      %v3018 = vunpack.c.l.b16 %v2351
      %v3019 = vunpack.c.h.b16 %v2351
      %v3020 = vunpack.c.l.b16 %v2352
      %v3021 = vunpack.c.h.b16 %v2352
      %v3022 = vunpack.c.l.b16 %v2353
      %v3023 = vunpack.c.h.b16 %v2353
      %v3024 = vunpack.c.l.b16 %v2354
      %v3025 = vunpack.c.h.b16 %v2354
      %v3026 = vunpack.c.l.b16 %v2355
      %v3027 = vunpack.c.h.b16 %v2355
      %v3028 = vunpack.c.l.b16 %v2356
      %v3029 = vunpack.c.h.b16 %v2356
      %v3030 = vunpack.c.l.b16 %v2357
      %v3031 = vunpack.c.h.b16 %v2357
      %v3032 = vunpack.c.l.b16 %v2358
      %v3033 = vunpack.c.h.b16 %v2358
      %v3034 = vunpack.c.l.b16 %v2359
      %v3035 = vunpack.c.h.b16 %v2359
      %v3036 = vunpack.c.l.b16 %v2360
      %v3037 = vunpack.c.h.b16 %v2360
      %v3038 = vunpack.c.l.b16 %v2361
      %v3039 = vunpack.c.h.b16 %v2361
      %v3040 = vunpack.c.l.b16 %v2362
      %v3041 = vunpack.c.h.b16 %v2362
      %v3042 = vunpack.c.l.b16 %v2363
      %v3043 = vunpack.c.h.b16 %v2363
      %v3044 = vunpack.c.l.b16 %v2364
      %v3045 = vunpack.c.h.b16 %v2364
      %v3046 = vunpack.c.l.b16 %v2365
      %v3047 = vunpack.c.h.b16 %v2365
      %v3048 = vunpack.c.l.b16 %v2366
      %v3049 = vunpack.c.h.b16 %v2366
      %v3050 = vunpack.c.l.b16 %v2367
      %v3051 = vunpack.c.h.b16 %v2367
      %v3052 = vunpack.c.l.b16 %v2368
      %v3053 = vunpack.c.h.b16 %v2368
      %v3054 = vunpack.c.l.b16 %v2369
      %v3055 = vunpack.c.h.b16 %v2369
      %v3056 = vunpack.c.l.b16 %v2370
      %v3057 = vunpack.c.h.b16 %v2370
      %v3058 = vunpack.c.l.b16 %v2371
      %v3059 = vunpack.c.h.b16 %v2371
      %v3060 = vunpack.c.l.b16 %v2372
      %v3061 = vunpack.c.h.b16 %v2372
      %v3062 = vunpack.c.l.b16 %v2373
      %v3063 = vunpack.c.h.b16 %v2373
      %v3064 = vunpack.c.l.b16 %v2374
      %v3065 = vunpack.c.h.b16 %v2374
      %v3066 = vunpack.c.l.b16 %v2375
      %v3067 = vunpack.c.h.b16 %v2375
      %v3068 = vunpack.c.l.b16 %v2376
      %v3069 = vunpack.c.h.b16 %v2376
      %v3070 = vunpack.c.l.b16 %v2377
      %v3071 = vunpack.c.h.b16 %v2377
      %v3072 = vunpack.c.l.b16 %v2378
      %v3073 = vunpack.c.h.b16 %v2378
      %v3074 = vunpack.c.l.b16 %v2379
      %v3075 = vunpack.c.h.b16 %v2379
      %v3076 = vunpack.c.l.b16 %v2380
      %v3077 = vunpack.c.h.b16 %v2380
      %v3078 = vunpack.c.l.b16 %v2381
      %v3079 = vunpack.c.h.b16 %v2381
      %v3080 = vunpack.c.l.b16 %v2382
      %v3081 = vunpack.c.h.b16 %v2382
      %v3082 = vunpack.c.l.b16 %v2383
      %v3083 = vunpack.c.h.b16 %v2383
      %v3084 = vunpack.c.l.b16 %v2384
      %v3085 = vunpack.c.h.b16 %v2384
      %v3086 = vunpack.c.l.b16 %v2385
      %v3087 = vunpack.c.h.b16 %v2385
      %v3088 = vunpack.c.l.b16 %v2386
      %v3089 = vunpack.c.h.b16 %v2386
      %v3090 = vunpack.c.l.b16 %v2387
      %v3091 = vunpack.c.h.b16 %v2387
      %v3092 = vunpack.c.l.b16 %v2388
      %v3093 = vunpack.c.h.b16 %v2388
      %v3094 = vunpack.c.l.b16 %v2389
      %v3095 = vunpack.c.h.b16 %v2389
      %v3096 = vunpack.c.l.b16 %v2390
      %v3097 = vunpack.c.h.b16 %v2390
      %v3098 = vunpack.c.l.b16 %v2391
      %v3099 = vunpack.c.h.b16 %v2391
      %v3100 = vunpack.c.l.b16 %v2392
      %v3101 = vunpack.c.h.b16 %v2392
      %v3102 = vunpack.c.l.b16 %v2393
      %v3103 = vunpack.c.h.b16 %v2393
      %v3104 = vunpack.c.l.b16 %v2394
      %v3105 = vunpack.c.h.b16 %v2394
      %v3106 = vunpack.c.l.b16 %v2395
      %v3107 = vunpack.c.h.b16 %v2395
      %v3108 = vunpack.c.l.b16 %v2396
      %v3109 = vunpack.c.h.b16 %v2396
      %v3110 = vunpack.c.l.b16 %v2397
      %v3111 = vunpack.c.h.b16 %v2397
      %v3112 = vunpack.c.l.b16 %v2398
      %v3113 = vunpack.c.h.b16 %v2398
      %v3114 = vunpack.c.l.b16 %v2399
      %v3115 = vunpack.c.h.b16 %v2399
      %v3116 = vunpack.c.l.b16 %v2400
      %v3117 = vunpack.c.h.b16 %v2400
      %v3118 = vunpack.c.l.b16 %v2401
      %v3119 = vunpack.c.h.b16 %v2401
      %v3120 = vunpack.c.l.b16 %v2402
      %v3121 = vunpack.c.h.b16 %v2402
      %v3122 = vunpack.c.l.b16 %v2403
      %v3123 = vunpack.c.h.b16 %v2403
      %v3124 = vunpack.c.l.b16 %v2404
      %v3125 = vunpack.c.h.b16 %v2404
      %v3126 = vunpack.c.l.b16 %v2405
      %v3127 = vunpack.c.h.b16 %v2405
      %v3128 = vunpack.c.l.b16 %v2406
      %v3129 = vunpack.c.h.b16 %v2406
      %v3130 = vunpack.c.l.b16 %v2407
      %v3131 = vunpack.c.h.b16 %v2407
      %v3132 = vunpack.c.l.b16 %v2408
      %v3133 = vunpack.c.h.b16 %v2408
      %v3134 = vunpack.c.l.b16 %v2409
      %v3135 = vunpack.c.h.b16 %v2409
      %v3136 = vunpack.c.l.b16 %v2410
      %v3137 = vunpack.c.h.b16 %v2410
      %v3138 = vunpack.c.l.b16 %v2411
      %v3139 = vunpack.c.h.b16 %v2411
      %v3140 = vunpack.c.l.b16 %v2412
      %v3141 = vunpack.c.h.b16 %v2412
      %v3142 = vunpack.c.l.b16 %v2413
      %v3143 = vunpack.c.h.b16 %v2413
      %v3144 = vunpack.c.l.b16 %v2414
      %v3145 = vunpack.c.h.b16 %v2414
      %v3146 = vunpack.c.l.b16 %v2415
      %v3147 = vunpack.c.h.b16 %v2415
      %v3148 = vunpack.c.l.b16 %v2416
      %v3149 = vunpack.c.h.b16 %v2416
      %v3150 = vunpack.c.l.b16 %v2417
      %v3151 = vunpack.c.h.b16 %v2417
      %v3152 = vunpack.c.l.b16 %v2418
      %v3153 = vunpack.c.h.b16 %v2418
      %v3154 = vunpack.c.l.b16 %v2419
      %v3155 = vunpack.c.h.b16 %v2419
      %v3156 = vunpack.c.l.b16 %v2420
      %v3157 = vunpack.c.h.b16 %v2420
      %v3158 = vunpack.c.l.b16 %v2421
      %v3159 = vunpack.c.h.b16 %v2421
      %v3160 = vunpack.c.l.b16 %v2422
      %v3161 = vunpack.c.h.b16 %v2422
      %v3162 = vunpack.c.l.b16 %v2423
      %v3163 = vunpack.c.h.b16 %v2423
      %v3164 = vunpack.c.l.b16 %v2424
      %v3165 = vunpack.c.h.b16 %v2424
      %v3166 = vunpack.c.l.b16 %v2425
      %v3167 = vunpack.c.h.b16 %v2425
      %v3168 = vunpack.c.l.b16 %v2426
      %v3169 = vunpack.c.h.b16 %v2426
      %v3170 = vunpack.c.l.b16 %v2427
      %v3171 = vunpack.c.h.b16 %v2427
      %v3172 = vunpack.c.l.b16 %v2428
      %v3173 = vunpack.c.h.b16 %v2428
      %v3174 = vunpack.c.l.b16 %v2429
      %v3175 = vunpack.c.h.b16 %v2429
      %v3176 = vunpack.c.l.b16 %v2430
      %v3177 = vunpack.c.h.b16 %v2430
      %v3178 = vunpack.c.l.b16 %v2431
      %v3179 = vunpack.c.h.b16 %v2431
      %v3180 = vunpack.c.l.b16 %v2432
      %v3181 = vunpack.c.h.b16 %v2432
      %v3182 = vunpack.c.l.b16 %v2433
      %v3183 = vunpack.c.h.b16 %v2433
      %v3184 = vunpack.c.l.b16 %v2434
      %v3185 = vunpack.c.h.b16 %v2434
      %v3186 = vunpack.c.l.b16 %v2435
      %v3187 = vunpack.c.h.b16 %v2435
      %v3188 = vunpack.c.l.b16 %v2436
      %v3189 = vunpack.c.h.b16 %v2436
      %v3190 = vunpack.c.l.b16 %v2437
      %v3191 = vunpack.c.h.b16 %v2437
      %v3192 = vunpack.c.l.b16 %v2438
      %v3193 = vunpack.c.h.b16 %v2438
      %v3194 = vunpack.c.l.b16 %v2439
      %v3195 = vunpack.c.h.b16 %v2439
      %v3196 = vunpack.c.l.b16 %v2440
      %v3197 = vunpack.c.h.b16 %v2440
      %v3198 = vunpack.c.l.b16 %v2441
      %v3199 = vunpack.c.h.b16 %v2441
      %v3200 = vunpack.c.l.b16 %v2442
      %v3201 = vunpack.c.h.b16 %v2442
      %v3202 = vunpack.c.l.b16 %v2443
      %v3203 = vunpack.c.h.b16 %v2443
      %v3204 = vunpack.c.l.b16 %v2444
      %v3205 = vunpack.c.h.b16 %v2444
      %v3206 = vunpack.c.l.b16 %v2445
      %v3207 = vunpack.c.h.b16 %v2445
      %v3208 = vunpack.c.l.b16 %v2446
      %v3209 = vunpack.c.h.b16 %v2446
      %v3210 = vunpack.c.l.b16 %v2447
      %v3211 = vunpack.c.h.b16 %v2447
      %v3212 = vunpack.c.l.b16 %v2448
      %v3213 = vunpack.c.h.b16 %v2448
      %v3214 = vunpack.c.l.b16 %v2449
      %v3215 = vunpack.c.h.b16 %v2449
      %v3216 = vunpack.c.l.b16 %v2450
      %v3217 = vunpack.c.h.b16 %v2450
      %v3218 = vunpack.c.l.b16 %v2451
      %v3219 = vunpack.c.h.b16 %v2451
      %v3220 = vunpack.c.l.b16 %v2452
      %v3221 = vunpack.c.h.b16 %v2452
      %v3222 = vunpack.c.l.b16 %v2453
      %v3223 = vunpack.c.h.b16 %v2453
      %v3224 = vunpack.c.l.b16 %v2454
      %v3225 = vunpack.c.h.b16 %v2454
      %v3226 = vunpack.c.l.b16 %v2455
      %v3227 = vunpack.c.h.b16 %v2455
      %v3228 = vunpack.c.l.b16 %v2456
      %v3229 = vunpack.c.h.b16 %v2456
      %v3230 = vunpack.c.l.b16 %v2457
      %v3231 = vunpack.c.h.b16 %v2457
      %v3232 = vunpack.c.l.b16 %v2458
      %v3233 = vunpack.c.h.b16 %v2458
      %v3234 = vunpack.c.l.b16 %v2459
      %v3235 = vunpack.c.h.b16 %v2459
      %v3236 = vunpack.c.l.b16 %v2460
      %v3237 = vunpack.c.h.b16 %v2460
      %v3238 = vunpack.c.l.b16 %v2461
      %v3239 = vunpack.c.h.b16 %v2461
      %v3240 = vunpack.c.l.b16 %v2462
      %v3241 = vunpack.c.h.b16 %v2462
      %v3242 = vunpack.c.l.b16 %v2463
      %v3243 = vunpack.c.h.b16 %v2463
      %v3244 = vunpack.c.l.b16 %v2464
      %v3245 = vunpack.c.h.b16 %v2464
      %v3246 = vunpack.c.l.b16 %v2465
      %v3247 = vunpack.c.h.b16 %v2465
      %v3248 = vunpack.c.l.b16 %v2466
      %v3249 = vunpack.c.h.b16 %v2466
      %v3250 = vunpack.c.l.b16 %v2467
      %v3251 = vunpack.c.h.b16 %v2467
      %v3252 = vunpack.c.l.b16 %v2468
      %v3253 = vunpack.c.h.b16 %v2468
      %v3254 = vunpack.c.l.b16 %v2469
      %v3255 = vunpack.c.h.b16 %v2469
      %v3256 = vunpack.c.l.b16 %v2470
      %v3257 = vunpack.c.h.b16 %v2470
      %v3258 = vunpack.c.l.b16 %v2471
      %v3259 = vunpack.c.h.b16 %v2471
      %v3260 = vunpack.c.l.b16 %v2472
      %v3261 = vunpack.c.h.b16 %v2472
      %v3262 = vunpack.c.l.b16 %v2473
      %v3263 = vunpack.c.h.b16 %v2473
      %v3264 = vpack.c.b16 %v2756, %v2752
      %v3265 = vpack.c.b16 %v2757, %v2753
      %v3266 = vpack.c.b16 %v2758, %v2754
      %v3267 = vpack.c.b16 %v2759, %v2755
      %v3268 = vpack.c.b16 %v2764, %v2760
      %v3269 = vpack.c.b16 %v2765, %v2761
      %v3270 = vpack.c.b16 %v2766, %v2762
      %v3271 = vpack.c.b16 %v2767, %v2763
      %v3272 = vpack.c.b16 %v2772, %v2768
      %v3273 = vpack.c.b16 %v2773, %v2769
      %v3274 = vpack.c.b16 %v2774, %v2770
      %v3275 = vpack.c.b16 %v2775, %v2771
      %v3276 = vpack.c.b16 %v2780, %v2776
      %v3277 = vpack.c.b16 %v2781, %v2777
      %v3278 = vpack.c.b16 %v2782, %v2778
      %v3279 = vpack.c.b16 %v2783, %v2779
      %v3280 = vpack.c.b16 %v2788, %v2784
      %v3281 = vpack.c.b16 %v2789, %v2785
      %v3282 = vpack.c.b16 %v2790, %v2786
      %v3283 = vpack.c.b16 %v2791, %v2787
      %v3284 = vpack.c.b16 %v2796, %v2792
      %v3285 = vpack.c.b16 %v2797, %v2793
      %v3286 = vpack.c.b16 %v2798, %v2794
      %v3287 = vpack.c.b16 %v2799, %v2795
      %v3288 = vpack.c.b16 %v2804, %v2800
      %v3289 = vpack.c.b16 %v2805, %v2801
      %v3290 = vpack.c.b16 %v2806, %v2802
      %v3291 = vpack.c.b16 %v2807, %v2803
      %v3292 = vpack.c.b16 %v2812, %v2808
      %v3293 = vpack.c.b16 %v2813, %v2809
      %v3294 = vpack.c.b16 %v2814, %v2810
      %v3295 = vpack.c.b16 %v2815, %v2811
      %v3296 = vpack.c.b16 %v2820, %v2816
      %v3297 = vpack.c.b16 %v2821, %v2817
      %v3298 = vpack.c.b16 %v2822, %v2818
      %v3299 = vpack.c.b16 %v2823, %v2819
      %v3300 = vpack.c.b16 %v2828, %v2824
      %v3301 = vpack.c.b16 %v2829, %v2825
      %v3302 = vpack.c.b16 %v2830, %v2826
      %v3303 = vpack.c.b16 %v2831, %v2827
      %v3304 = vpack.c.b16 %v2836, %v2832
      %v3305 = vpack.c.b16 %v2837, %v2833
      %v3306 = vpack.c.b16 %v2838, %v2834
      %v3307 = vpack.c.b16 %v2839, %v2835
      %v3308 = vpack.c.b16 %v2844, %v2840
      %v3309 = vpack.c.b16 %v2845, %v2841
      %v3310 = vpack.c.b16 %v2846, %v2842
      %v3311 = vpack.c.b16 %v2847, %v2843
      %v3312 = vpack.c.b16 %v2852, %v2848
      %v3313 = vpack.c.b16 %v2853, %v2849
      %v3314 = vpack.c.b16 %v2854, %v2850
      %v3315 = vpack.c.b16 %v2855, %v2851
      %v3316 = vpack.c.b16 %v2860, %v2856
      %v3317 = vpack.c.b16 %v2861, %v2857
      %v3318 = vpack.c.b16 %v2862, %v2858
      %v3319 = vpack.c.b16 %v2863, %v2859
      %v3320 = vpack.c.b16 %v2868, %v2864
      %v3321 = vpack.c.b16 %v2869, %v2865
      %v3322 = vpack.c.b16 %v2870, %v2866
      %v3323 = vpack.c.b16 %v2871, %v2867
      %v3324 = vpack.c.b16 %v2876, %v2872
      %v3325 = vpack.c.b16 %v2877, %v2873
      %v3326 = vpack.c.b16 %v2878, %v2874
      %v3327 = vpack.c.b16 %v2879, %v2875
      %v3328 = vpack.c.b16 %v2884, %v2880
      %v3329 = vpack.c.b16 %v2885, %v2881
      %v3330 = vpack.c.b16 %v2886, %v2882
      %v3331 = vpack.c.b16 %v2887, %v2883
      %v3332 = vpack.c.b16 %v2892, %v2888
      %v3333 = vpack.c.b16 %v2893, %v2889
      %v3334 = vpack.c.b16 %v2894, %v2890
      %v3335 = vpack.c.b16 %v2895, %v2891
      %v3336 = vpack.c.b16 %v2900, %v2896
      %v3337 = vpack.c.b16 %v2901, %v2897
      %v3338 = vpack.c.b16 %v2902, %v2898
      %v3339 = vpack.c.b16 %v2903, %v2899
      %v3340 = vpack.c.b16 %v2908, %v2904
      %v3341 = vpack.c.b16 %v2909, %v2905
      %v3342 = vpack.c.b16 %v2910, %v2906
      %v3343 = vpack.c.b16 %v2911, %v2907
      %v3344 = vpack.c.b16 %v2916, %v2912
      %v3345 = vpack.c.b16 %v2917, %v2913
      %v3346 = vpack.c.b16 %v2918, %v2914
      %v3347 = vpack.c.b16 %v2919, %v2915
      %v3348 = vpack.c.b16 %v2924, %v2920
      %v3349 = vpack.c.b16 %v2925, %v2921
      %v3350 = vpack.c.b16 %v2926, %v2922
      %v3351 = vpack.c.b16 %v2927, %v2923
      %v3352 = vpack.c.b16 %v2932, %v2928
      %v3353 = vpack.c.b16 %v2933, %v2929
      %v3354 = vpack.c.b16 %v2934, %v2930
      %v3355 = vpack.c.b16 %v2935, %v2931
      %v3356 = vpack.c.b16 %v2940, %v2936
      %v3357 = vpack.c.b16 %v2941, %v2937
      %v3358 = vpack.c.b16 %v2942, %v2938
      %v3359 = vpack.c.b16 %v2943, %v2939
      %v3360 = vpack.c.b16 %v2948, %v2944
      %v3361 = vpack.c.b16 %v2949, %v2945
      %v3362 = vpack.c.b16 %v2950, %v2946
      %v3363 = vpack.c.b16 %v2951, %v2947
      %v3364 = vpack.c.b16 %v2956, %v2952
      %v3365 = vpack.c.b16 %v2957, %v2953
      %v3366 = vpack.c.b16 %v2958, %v2954
      %v3367 = vpack.c.b16 %v2959, %v2955
      %v3368 = vpack.c.b16 %v2964, %v2960
      %v3369 = vpack.c.b16 %v2965, %v2961
      %v3370 = vpack.c.b16 %v2966, %v2962
      %v3371 = vpack.c.b16 %v2967, %v2963
      %v3372 = vpack.c.b16 %v2972, %v2968
      %v3373 = vpack.c.b16 %v2973, %v2969
      %v3374 = vpack.c.b16 %v2974, %v2970
      %v3375 = vpack.c.b16 %v2975, %v2971
      %v3376 = vpack.c.b16 %v2980, %v2976
      %v3377 = vpack.c.b16 %v2981, %v2977
      %v3378 = vpack.c.b16 %v2982, %v2978
      %v3379 = vpack.c.b16 %v2983, %v2979
      %v3380 = vpack.c.b16 %v2988, %v2984
      %v3381 = vpack.c.b16 %v2989, %v2985
      %v3382 = vpack.c.b16 %v2990, %v2986
      %v3383 = vpack.c.b16 %v2991, %v2987
      %v3384 = vpack.c.b16 %v2996, %v2992
      %v3385 = vpack.c.b16 %v2997, %v2993
      %v3386 = vpack.c.b16 %v2998, %v2994
      %v3387 = vpack.c.b16 %v2999, %v2995
      %v3388 = vpack.c.b16 %v3004, %v3000
      %v3389 = vpack.c.b16 %v3005, %v3001
      %v3390 = vpack.c.b16 %v3006, %v3002
      %v3391 = vpack.c.b16 %v3007, %v3003
      %v3392 = vpack.c.b16 %v3012, %v3008
      %v3393 = vpack.c.b16 %v3013, %v3009
      %v3394 = vpack.c.b16 %v3014, %v3010
      %v3395 = vpack.c.b16 %v3015, %v3011
      %v3396 = vpack.c.b16 %v3020, %v3016
      %v3397 = vpack.c.b16 %v3021, %v3017
      %v3398 = vpack.c.b16 %v3022, %v3018
      %v3399 = vpack.c.b16 %v3023, %v3019
      %v3400 = vpack.c.b16 %v3028, %v3024
      %v3401 = vpack.c.b16 %v3029, %v3025
      %v3402 = vpack.c.b16 %v3030, %v3026
      %v3403 = vpack.c.b16 %v3031, %v3027
      %v3404 = vpack.c.b16 %v3036, %v3032
      %v3405 = vpack.c.b16 %v3037, %v3033
      %v3406 = vpack.c.b16 %v3038, %v3034
      %v3407 = vpack.c.b16 %v3039, %v3035
      %v3408 = vpack.c.b16 %v3044, %v3040
      %v3409 = vpack.c.b16 %v3045, %v3041
      %v3410 = vpack.c.b16 %v3046, %v3042
      %v3411 = vpack.c.b16 %v3047, %v3043
      %v3412 = vpack.c.b16 %v3052, %v3048
      %v3413 = vpack.c.b16 %v3053, %v3049
      %v3414 = vpack.c.b16 %v3054, %v3050
      %v3415 = vpack.c.b16 %v3055, %v3051
      %v3416 = vpack.c.b16 %v3060, %v3056
      %v3417 = vpack.c.b16 %v3061, %v3057
      %v3418 = vpack.c.b16 %v3062, %v3058
      %v3419 = vpack.c.b16 %v3063, %v3059
      %v3420 = vpack.c.b16 %v3068, %v3064
      %v3421 = vpack.c.b16 %v3069, %v3065
      %v3422 = vpack.c.b16 %v3070, %v3066
      %v3423 = vpack.c.b16 %v3071, %v3067
      %v3424 = vpack.c.b16 %v3076, %v3072
      %v3425 = vpack.c.b16 %v3077, %v3073
      %v3426 = vpack.c.b16 %v3078, %v3074
      %v3427 = vpack.c.b16 %v3079, %v3075
      %v3428 = vpack.c.b16 %v3084, %v3080
      %v3429 = vpack.c.b16 %v3085, %v3081
      %v3430 = vpack.c.b16 %v3086, %v3082
      %v3431 = vpack.c.b16 %v3087, %v3083
      %v3432 = vpack.c.b16 %v3092, %v3088
      %v3433 = vpack.c.b16 %v3093, %v3089
      %v3434 = vpack.c.b16 %v3094, %v3090
      %v3435 = vpack.c.b16 %v3095, %v3091
      %v3436 = vpack.c.b16 %v3100, %v3096
      %v3437 = vpack.c.b16 %v3101, %v3097
      %v3438 = vpack.c.b16 %v3102, %v3098
      %v3439 = vpack.c.b16 %v3103, %v3099
      %v3440 = vpack.c.b16 %v3108, %v3104
      %v3441 = vpack.c.b16 %v3109, %v3105
      %v3442 = vpack.c.b16 %v3110, %v3106
      %v3443 = vpack.c.b16 %v3111, %v3107
      %v3444 = vpack.c.b16 %v3116, %v3112
      %v3445 = vpack.c.b16 %v3117, %v3113
      %v3446 = vpack.c.b16 %v3118, %v3114
      %v3447 = vpack.c.b16 %v3119, %v3115
      %v3448 = vpack.c.b16 %v3124, %v3120
      %v3449 = vpack.c.b16 %v3125, %v3121
      %v3450 = vpack.c.b16 %v3126, %v3122
      %v3451 = vpack.c.b16 %v3127, %v3123
      %v3452 = vpack.c.b16 %v3132, %v3128
      %v3453 = vpack.c.b16 %v3133, %v3129
      %v3454 = vpack.c.b16 %v3134, %v3130
      %v3455 = vpack.c.b16 %v3135, %v3131
      %v3456 = vpack.c.b16 %v3140, %v3136
      %v3457 = vpack.c.b16 %v3141, %v3137
      %v3458 = vpack.c.b16 %v3142, %v3138
      %v3459 = vpack.c.b16 %v3143, %v3139
      %v3460 = vpack.c.b16 %v3148, %v3144
      %v3461 = vpack.c.b16 %v3149, %v3145
      %v3462 = vpack.c.b16 %v3150, %v3146
      %v3463 = vpack.c.b16 %v3151, %v3147
      %v3464 = vpack.c.b16 %v3156, %v3152
      %v3465 = vpack.c.b16 %v3157, %v3153
      %v3466 = vpack.c.b16 %v3158, %v3154
      %v3467 = vpack.c.b16 %v3159, %v3155
      %v3468 = vpack.c.b16 %v3164, %v3160
      %v3469 = vpack.c.b16 %v3165, %v3161
      %v3470 = vpack.c.b16 %v3166, %v3162
      %v3471 = vpack.c.b16 %v3167, %v3163
      %v3472 = vpack.c.b16 %v3172, %v3168
      %v3473 = vpack.c.b16 %v3173, %v3169
      %v3474 = vpack.c.b16 %v3174, %v3170
      %v3475 = vpack.c.b16 %v3175, %v3171
      %v3476 = vpack.c.b16 %v3180, %v3176
      %v3477 = vpack.c.b16 %v3181, %v3177
      %v3478 = vpack.c.b16 %v3182, %v3178
      %v3479 = vpack.c.b16 %v3183, %v3179
      %v3480 = vpack.c.b16 %v3188, %v3184
      %v3481 = vpack.c.b16 %v3189, %v3185
      %v3482 = vpack.c.b16 %v3190, %v3186
      %v3483 = vpack.c.b16 %v3191, %v3187
      %v3484 = vpack.c.b16 %v3196, %v3192
      %v3485 = vpack.c.b16 %v3197, %v3193
      %v3486 = vpack.c.b16 %v3198, %v3194
      %v3487 = vpack.c.b16 %v3199, %v3195
      %v3488 = vpack.c.b16 %v3204, %v3200
      %v3489 = vpack.c.b16 %v3205, %v3201
      %v3490 = vpack.c.b16 %v3206, %v3202
      %v3491 = vpack.c.b16 %v3207, %v3203
      %v3492 = vpack.c.b16 %v3212, %v3208
      %v3493 = vpack.c.b16 %v3213, %v3209
      %v3494 = vpack.c.b16 %v3214, %v3210
      %v3495 = vpack.c.b16 %v3215, %v3211
      %v3496 = vpack.c.b16 %v3220, %v3216
      %v3497 = vpack.c.b16 %v3221, %v3217
      %v3498 = vpack.c.b16 %v3222, %v3218
      %v3499 = vpack.c.b16 %v3223, %v3219
      %v3500 = vpack.c.b16 %v3228, %v3224
      %v3501 = vpack.c.b16 %v3229, %v3225
      %v3502 = vpack.c.b16 %v3230, %v3226
      %v3503 = vpack.c.b16 %v3231, %v3227
      %v3504 = vpack.c.b16 %v3236, %v3232
      %v3505 = vpack.c.b16 %v3237, %v3233
      %v3506 = vpack.c.b16 %v3238, %v3234
      %v3507 = vpack.c.b16 %v3239, %v3235
      %v3508 = vpack.c.b16 %v3244, %v3240
      %v3509 = vpack.c.b16 %v3245, %v3241
      %v3510 = vpack.c.b16 %v3246, %v3242
      %v3511 = vpack.c.b16 %v3247, %v3243
      %v3512 = vpack.c.b16 %v3252, %v3248
      %v3513 = vpack.c.b16 %v3253, %v3249
      %v3514 = vpack.c.b16 %v3254, %v3250
      %v3515 = vpack.c.b16 %v3255, %v3251
      %v3516 = vpack.c.b16 %v3260, %v3256
      %v3517 = vpack.c.b16 %v3261, %v3257
      %v3518 = vpack.c.b16 %v3262, %v3258
      %v3519 = vpack.c.b16 %v3263, %v3259
      %3776 = vmatprep.subr.bf16.mxu0 %v3265
      %3777 = vmatpush1.bf16.msra.mxu0 %v3264
      %3778 = vmatprep.subr.bf16.mxu0 %v3269
      %3779 = vmatpush1.bf16.msra.mxu0 %v3268
      %3780 = vmatprep.subr.bf16.mxu0 %v3273
      %3781 = vmatpush1.bf16.msra.mxu0 %v3272
      %3782 = vmatprep.subr.bf16.mxu0 %v3277
      %3783 = vmatpush1.bf16.msra.mxu0 %v3276
      %3784 = vmatprep.subr.bf16.mxu0 %v3281
      %3785 = vmatpush1.bf16.msra.mxu0 %v3280
      %3786 = vmatprep.subr.bf16.mxu0 %v3285
      %3787 = vmatpush1.bf16.msra.mxu0 %v3284
      %3788 = vmatprep.subr.bf16.mxu0 %v3289
      %3789 = vmatpush1.bf16.msra.mxu0 %v3288
      %3790 = vmatprep.subr.bf16.mxu0 %v3293
      %3791 = vmatpush1.bf16.msra.mxu0 %v3292
      %3792 = vmatprep.subr.bf16.mxu0 %v3297
      %3793 = vmatpush1.bf16.msra.mxu0 %v3296
      %3794 = vmatprep.subr.bf16.mxu0 %v3301
      %3795 = vmatpush1.bf16.msra.mxu0 %v3300
      %3796 = vmatprep.subr.bf16.mxu0 %v3305
      %3797 = vmatpush1.bf16.msra.mxu0 %v3304
      %3798 = vmatprep.subr.bf16.mxu0 %v3309
      %3799 = vmatpush1.bf16.msra.mxu0 %v3308
      %3800 = vmatprep.subr.bf16.mxu0 %v3313
      %3801 = vmatpush1.bf16.msra.mxu0 %v3312
      %3802 = vmatprep.subr.bf16.mxu0 %v3317
      %3803 = vmatpush1.bf16.msra.mxu0 %v3316
      %3804 = vmatprep.subr.bf16.mxu0 %v3321
      %3805 = vmatpush1.bf16.msra.mxu0 %v3320
      %3806 = vmatprep.subr.bf16.mxu0 %v3325
      %3807 = vmatpush1.bf16.msra.mxu0 %v3324
      %3808 = vmatprep.mubr.bf16.mxu0 %v2091
      %3809 = vmatmul.mubr.bf16.gmra.mrb[0].mxu0 %v2090
      %v3810 = vpop.f32.mrb[0].mxu0
      %v3811 = vadd.f32 %v2479, %v3810
      %v3812 = vpop.f32.mrb[0].mxu0
      %v3813 = vadd.f32 %v2483, %v3812
      %v3814 = vpop.f32.mrb[0].mxu0
      %v3815 = vadd.f32 %v2479, %v3814
      %v3816 = vpop.f32.mrb[0].mxu0
      %v3817 = vadd.f32 %v2483, %v3816
      %3818 = vmatprep.mubr.bf16.mxu0 %v2099
      %3819 = vmatmul.mubr.bf16.gmra.mrb[0].mxu0 %v2098
      %v3820 = vpop.f32.mrb[0].mxu0
      %v3821 = vadd.f32 %v2479, %v3820
      %v3822 = vpop.f32.mrb[0].mxu0
      %v3823 = vadd.f32 %v2483, %v3822
      %v3824 = vpop.f32.mrb[0].mxu0
      %v3825 = vadd.f32 %v2479, %v3824
      %v3826 = vpop.f32.mrb[0].mxu0
      %v3827 = vadd.f32 %v2483, %v3826
      %3828 = vmatprep.mubr.bf16.mxu0 %v2107
      %3829 = vmatmul.mubr.bf16.gmra.mrb[0].mxu0 %v2106
      %v3830 = vpop.f32.mrb[0].mxu0
      %v3831 = vadd.f32 %v2479, %v3830
      %v3832 = vpop.f32.mrb[0].mxu0
      %v3833 = vadd.f32 %v2483, %v3832
      %v3834 = vpop.f32.mrb[0].mxu0
      %v3835 = vadd.f32 %v2479, %v3834
      %v3836 = vpop.f32.mrb[0].mxu0
      %v3837 = vadd.f32 %v2483, %v3836
      %3838 = vmatprep.mubr.bf16.mxu0 %v2115
      %3839 = vmatmul.mubr.bf16.gmra.mrb[0].mxu0 %v2114
      %v3840 = vpop.f32.mrb[0].mxu0
      %v3841 = vadd.f32 %v2479, %v3840
      %v3842 = vpop.f32.mrb[0].mxu0
      %v3843 = vadd.f32 %v2483, %v3842
      %v3844 = vpop.f32.mrb[0].mxu0
      %v3845 = vadd.f32 %v2479, %v3844
      %v3846 = vpop.f32.mrb[0].mxu0
      %v3847 = vadd.f32 %v2483, %v3846
      %3848 = vmatprep.mubr.bf16.mxu0 %v2123
      %3849 = vmatmul.mubr.bf16.gmra.mrb[0].mxu0 %v2122
      %v3850 = vpop.f32.mrb[0].mxu0
      %v3851 = vadd.f32 %v2479, %v3850
      %v3852 = vpop.f32.mrb[0].mxu0
      %v3853 = vadd.f32 %v2483, %v3852
      %v3854 = vpop.f32.mrb[0].mxu0
      %v3855 = vadd.f32 %v2479, %v3854
      %v3856 = vpop.f32.mrb[0].mxu0
      %v3857 = vadd.f32 %v2483, %v3856
      %3858 = vmatprep.mubr.bf16.mxu0 %v2131
      %3859 = vmatmul.mubr.bf16.gmra.mrb[0].mxu0 %v2130
      %v3860 = vpop.f32.mrb[0].mxu0
      %v3861 = vadd.f32 %v2479, %v3860
      %v3862 = vpop.f32.mrb[0].mxu0
      %v3863 = vadd.f32 %v2483, %v3862
      %v3864 = vpop.f32.mrb[0].mxu0
      %v3865 = vadd.f32 %v2479, %v3864
      %v3866 = vpop.f32.mrb[0].mxu0
      %v3867 = vadd.f32 %v2483, %v3866
      %3868 = vmatprep.mubr.bf16.mxu0 %v2139
      %3869 = vmatmul.mubr.bf16.gmra.mrb[0].mxu0 %v2138
      %v3870 = vpop.f32.mrb[0].mxu0
      %v3871 = vadd.f32 %v2479, %v3870
      %v3872 = vpop.f32.mrb[0].mxu0
      %v3873 = vadd.f32 %v2483, %v3872
      %v3874 = vpop.f32.mrb[0].mxu0
      %v3875 = vadd.f32 %v2479, %v3874
      %v3876 = vpop.f32.mrb[0].mxu0
      %v3877 = vadd.f32 %v2483, %v3876
      %3878 = vmatprep.mubr.bf16.mxu0 %v2147
      %3879 = vmatmul.mubr.bf16.gmra.mrb[0].mxu0 %v2146
      %v3880 = vpop.f32.mrb[0].mxu0
      %v3881 = vadd.f32 %v2479, %v3880
      %v3882 = vpop.f32.mrb[0].mxu0
      %v3883 = vadd.f32 %v2483, %v3882
      %v3884 = vpop.f32.mrb[0].mxu0
      %v3885 = vadd.f32 %v2479, %v3884
      %v3886 = vpop.f32.mrb[0].mxu0
      %v3887 = vadd.f32 %v2483, %v3886
      %3888 = vmatprep.mubr.bf16.mxu0 %v2155
      %3889 = vmatmul.mubr.bf16.gmra.mrb[0].mxu0 %v2154
      %v3890 = vpop.f32.mrb[0].mxu0
      %v3891 = vadd.f32 %v2479, %v3890
      %v3892 = vpop.f32.mrb[0].mxu0
      %v3893 = vadd.f32 %v2483, %v3892
      %v3894 = vpop.f32.mrb[0].mxu0
      %v3895 = vadd.f32 %v2479, %v3894
      %v3896 = vpop.f32.mrb[0].mxu0
      %v3897 = vadd.f32 %v2483, %v3896
      %3898 = vmatprep.mubr.bf16.mxu0 %v2163
      %3899 = vmatmul.mubr.bf16.gmra.mrb[0].mxu0 %v2162
      %v3900 = vpop.f32.mrb[0].mxu0
      %v3901 = vadd.f32 %v2479, %v3900
      %v3902 = vpop.f32.mrb[0].mxu0
      %v3903 = vadd.f32 %v2483, %v3902
      %v3904 = vpop.f32.mrb[0].mxu0
      %v3905 = vadd.f32 %v2479, %v3904
      %v3906 = vpop.f32.mrb[0].mxu0
      %v3907 = vadd.f32 %v2483, %v3906
      %3908 = vmatprep.mubr.bf16.mxu0 %v2171
      %3909 = vmatmul.mubr.bf16.gmra.mrb[0].mxu0 %v2170
      %v3910 = vpop.f32.mrb[0].mxu0
      %v3911 = vadd.f32 %v2479, %v3910
      %v3912 = vpop.f32.mrb[0].mxu0
      %v3913 = vadd.f32 %v2483, %v3912
      %v3914 = vpop.f32.mrb[0].mxu0
      %v3915 = vadd.f32 %v2479, %v3914
      %v3916 = vpop.f32.mrb[0].mxu0
      %v3917 = vadd.f32 %v2483, %v3916
      %3918 = vmatprep.mubr.bf16.mxu0 %v2179
      %3919 = vmatmul.mubr.bf16.gmra.mrb[0].mxu0 %v2178
      %v3920 = vpop.f32.mrb[0].mxu0
      %v3921 = vadd.f32 %v2479, %v3920
      %v3922 = vpop.f32.mrb[0].mxu0
      %v3923 = vadd.f32 %v2483, %v3922
      %v3924 = vpop.f32.mrb[0].mxu0
      %v3925 = vadd.f32 %v2479, %v3924
      %v3926 = vpop.f32.mrb[0].mxu0
      %v3927 = vadd.f32 %v2483, %v3926
      %3928 = vmatprep.mubr.bf16.mxu0 %v2187
      %3929 = vmatmul.mubr.bf16.gmra.mrb[0].mxu0 %v2186
      %v3930 = vpop.f32.mrb[0].mxu0
      %v3931 = vadd.f32 %v2479, %v3930
      %v3932 = vpop.f32.mrb[0].mxu0
      %v3933 = vadd.f32 %v2483, %v3932
      %v3934 = vpop.f32.mrb[0].mxu0
      %v3935 = vadd.f32 %v2479, %v3934
      %v3936 = vpop.f32.mrb[0].mxu0
      %v3937 = vadd.f32 %v2483, %v3936
      %3938 = vmatprep.mubr.bf16.mxu0 %v2195
      %3939 = vmatmul.mubr.bf16.gmra.mrb[0].mxu0 %v2194
      %v3940 = vpop.f32.mrb[0].mxu0
      %v3941 = vadd.f32 %v2479, %v3940
      %v3942 = vpop.f32.mrb[0].mxu0
      %v3943 = vadd.f32 %v2483, %v3942
      %v3944 = vpop.f32.mrb[0].mxu0
      %v3945 = vadd.f32 %v2479, %v3944
      %v3946 = vpop.f32.mrb[0].mxu0
      %v3947 = vadd.f32 %v2483, %v3946
      %3948 = vmatprep.mubr.bf16.mxu0 %v2203
      %3949 = vmatmul.mubr.bf16.gmra.mrb[0].mxu0 %v2202
      %v3950 = vpop.f32.mrb[0].mxu0
      %v3951 = vadd.f32 %v2479, %v3950
      %v3952 = vpop.f32.mrb[0].mxu0
      %v3953 = vadd.f32 %v2483, %v3952
      %v3954 = vpop.f32.mrb[0].mxu0
      %v3955 = vadd.f32 %v2479, %v3954
      %v3956 = vpop.f32.mrb[0].mxu0
      %v3957 = vadd.f32 %v2483, %v3956
      %3958 = vmatprep.mubr.bf16.mxu0 %v2211
      %3959 = vmatmul.mubr.bf16.gmra.mrb[0].mxu0 %v2210
      %v3960 = vpop.f32.mrb[0].mxu0
      %v3961 = vadd.f32 %v2479, %v3960
      %v3962 = vpop.f32.mrb[0].mxu0
      %v3963 = vadd.f32 %v2483, %v3962
      %v3964 = vpop.f32.mrb[0].mxu0
      %v3965 = vadd.f32 %v2479, %v3964
      %v3966 = vpop.f32.mrb[0].mxu0
      %v3967 = vadd.f32 %v2483, %v3966
      %3968 = vdwg.mxu0
      %3969 = vmatprep.subr.bf16.mxu0 %v3329
      %3970 = vmatpush1.bf16.msra.mxu0 %v3328
      %3971 = vmatprep.subr.bf16.mxu0 %v3333
      %3972 = vmatpush1.bf16.msra.mxu0 %v3332
      %3973 = vmatprep.subr.bf16.mxu0 %v3337
      %3974 = vmatpush1.bf16.msra.mxu0 %v3336
      %3975 = vmatprep.subr.bf16.mxu0 %v3341
      %3976 = vmatpush1.bf16.msra.mxu0 %v3340
      %3977 = vmatprep.subr.bf16.mxu0 %v3345
      %3978 = vmatpush1.bf16.msra.mxu0 %v3344
      %3979 = vmatprep.subr.bf16.mxu0 %v3349
      %3980 = vmatpush1.bf16.msra.mxu0 %v3348
      %3981 = vmatprep.subr.bf16.mxu0 %v3353
      %3982 = vmatpush1.bf16.msra.mxu0 %v3352
      %3983 = vmatprep.subr.bf16.mxu0 %v3357
      %3984 = vmatpush1.bf16.msra.mxu0 %v3356
      %3985 = vmatprep.subr.bf16.mxu0 %v3361
      %3986 = vmatpush1.bf16.msra.mxu0 %v3360
      %3987 = vmatprep.subr.bf16.mxu0 %v3365
      %3988 = vmatpush1.bf16.msra.mxu0 %v3364
      %3989 = vmatprep.subr.bf16.mxu0 %v3369
      %3990 = vmatpush1.bf16.msra.mxu0 %v3368
      %3991 = vmatprep.subr.bf16.mxu0 %v3373
      %3992 = vmatpush1.bf16.msra.mxu0 %v3372
      %3993 = vmatprep.subr.bf16.mxu0 %v3377
      %3994 = vmatpush1.bf16.msra.mxu0 %v3376
      %3995 = vmatprep.subr.bf16.mxu0 %v3381
      %3996 = vmatpush1.bf16.msra.mxu0 %v3380
      %3997 = vmatprep.subr.bf16.mxu0 %v3385
      %3998 = vmatpush1.bf16.msra.mxu0 %v3384
      %3999 = vmatprep.subr.bf16.mxu0 %v3389
      %4000 = vmatpush1.bf16.msra.mxu0 %v3388
      %4001 = vmatprep.mubr.bf16.mxu0 %v2093
      %4002 = vmatmul.mubr.bf16.gmra.mrb[0].mxu0 %v2092
      %v4003 = vpop.f32.mrb[0].mxu0
      %v4004 = vadd.f32 %v3811, %v4003
      %v4005 = vpop.f32.mrb[0].mxu0
      %v4006 = vadd.f32 %v3813, %v4005
      %v4007 = vpop.f32.mrb[0].mxu0
      %v4008 = vadd.f32 %v3815, %v4007
      %v4009 = vpop.f32.mrb[0].mxu0
      %v4010 = vadd.f32 %v3817, %v4009
      %4011 = vmatprep.mubr.bf16.mxu0 %v2101
      %4012 = vmatmul.mubr.bf16.gmra.mrb[0].mxu0 %v2100
      %v4013 = vpop.f32.mrb[0].mxu0
      %v4014 = vadd.f32 %v3821, %v4013
      %v4015 = vpop.f32.mrb[0].mxu0
      %v4016 = vadd.f32 %v3823, %v4015
      %v4017 = vpop.f32.mrb[0].mxu0
      %v4018 = vadd.f32 %v3825, %v4017
      %v4019 = vpop.f32.mrb[0].mxu0
      %v4020 = vadd.f32 %v3827, %v4019
      %4021 = vmatprep.mubr.bf16.mxu0 %v2109
      %4022 = vmatmul.mubr.bf16.gmra.mrb[0].mxu0 %v2108
      %v4023 = vpop.f32.mrb[0].mxu0
      %v4024 = vadd.f32 %v3831, %v4023
      %v4025 = vpop.f32.mrb[0].mxu0
      %v4026 = vadd.f32 %v3833, %v4025
      %v4027 = vpop.f32.mrb[0].mxu0
      %v4028 = vadd.f32 %v3835, %v4027
      %v4029 = vpop.f32.mrb[0].mxu0
      %v4030 = vadd.f32 %v3837, %v4029
      %4031 = vmatprep.mubr.bf16.mxu0 %v2117
      %4032 = vmatmul.mubr.bf16.gmra.mrb[0].mxu0 %v2116
      %v4033 = vpop.f32.mrb[0].mxu0
      %v4034 = vadd.f32 %v3841, %v4033
      %v4035 = vpop.f32.mrb[0].mxu0
      %v4036 = vadd.f32 %v3843, %v4035
      %v4037 = vpop.f32.mrb[0].mxu0
      %v4038 = vadd.f32 %v3845, %v4037
      %v4039 = vpop.f32.mrb[0].mxu0
      %v4040 = vadd.f32 %v3847, %v4039
      %4041 = vmatprep.mubr.bf16.mxu0 %v2125
      %4042 = vmatmul.mubr.bf16.gmra.mrb[0].mxu0 %v2124
      %v4043 = vpop.f32.mrb[0].mxu0
      %v4044 = vadd.f32 %v3851, %v4043
      %v4045 = vpop.f32.mrb[0].mxu0
      %v4046 = vadd.f32 %v3853, %v4045
      %v4047 = vpop.f32.mrb[0].mxu0
      %v4048 = vadd.f32 %v3855, %v4047
      %v4049 = vpop.f32.mrb[0].mxu0
      %v4050 = vadd.f32 %v3857, %v4049
      %4051 = vmatprep.mubr.bf16.mxu0 %v2133
      %4052 = vmatmul.mubr.bf16.gmra.mrb[0].mxu0 %v2132
      %v4053 = vpop.f32.mrb[0].mxu0
      %v4054 = vadd.f32 %v3861, %v4053
      %v4055 = vpop.f32.mrb[0].mxu0
      %v4056 = vadd.f32 %v3863, %v4055
      %v4057 = vpop.f32.mrb[0].mxu0
      %v4058 = vadd.f32 %v3865, %v4057
      %v4059 = vpop.f32.mrb[0].mxu0
      %v4060 = vadd.f32 %v3867, %v4059
      %4061 = vmatprep.mubr.bf16.mxu0 %v2141
      %4062 = vmatmul.mubr.bf16.gmra.mrb[0].mxu0 %v2140
      %v4063 = vpop.f32.mrb[0].mxu0
      %v4064 = vadd.f32 %v3871, %v4063
      %v4065 = vpop.f32.mrb[0].mxu0
      %v4066 = vadd.f32 %v3873, %v4065
      %v4067 = vpop.f32.mrb[0].mxu0
      %v4068 = vadd.f32 %v3875, %v4067
      %v4069 = vpop.f32.mrb[0].mxu0
      %v4070 = vadd.f32 %v3877, %v4069
      %4071 = vmatprep.mubr.bf16.mxu0 %v2149
      %4072 = vmatmul.mubr.bf16.gmra.mrb[0].mxu0 %v2148
      %v4073 = vpop.f32.mrb[0].mxu0
      %v4074 = vadd.f32 %v3881, %v4073
      %v4075 = vpop.f32.mrb[0].mxu0
      %v4076 = vadd.f32 %v3883, %v4075
      %v4077 = vpop.f32.mrb[0].mxu0
      %v4078 = vadd.f32 %v3885, %v4077
      %v4079 = vpop.f32.mrb[0].mxu0
      %v4080 = vadd.f32 %v3887, %v4079
      %4081 = vmatprep.mubr.bf16.mxu0 %v2157
      %4082 = vmatmul.mubr.bf16.gmra.mrb[0].mxu0 %v2156
      %v4083 = vpop.f32.mrb[0].mxu0
      %v4084 = vadd.f32 %v3891, %v4083
      %v4085 = vpop.f32.mrb[0].mxu0
      %v4086 = vadd.f32 %v3893, %v4085
      %v4087 = vpop.f32.mrb[0].mxu0
      %v4088 = vadd.f32 %v3895, %v4087
      %v4089 = vpop.f32.mrb[0].mxu0
      %v4090 = vadd.f32 %v3897, %v4089
      %4091 = vmatprep.mubr.bf16.mxu0 %v2165
      %4092 = vmatmul.mubr.bf16.gmra.mrb[0].mxu0 %v2164
      %v4093 = vpop.f32.mrb[0].mxu0
      %v4094 = vadd.f32 %v3901, %v4093
      %v4095 = vpop.f32.mrb[0].mxu0
      %v4096 = vadd.f32 %v3903, %v4095
      %v4097 = vpop.f32.mrb[0].mxu0
      %v4098 = vadd.f32 %v3905, %v4097
      %v4099 = vpop.f32.mrb[0].mxu0
      %v4100 = vadd.f32 %v3907, %v4099
      %4101 = vmatprep.mubr.bf16.mxu0 %v2173
      %4102 = vmatmul.mubr.bf16.gmra.mrb[0].mxu0 %v2172
      %v4103 = vpop.f32.mrb[0].mxu0
      %v4104 = vadd.f32 %v3911, %v4103
      %v4105 = vpop.f32.mrb[0].mxu0
      %v4106 = vadd.f32 %v3913, %v4105
      %v4107 = vpop.f32.mrb[0].mxu0
      %v4108 = vadd.f32 %v3915, %v4107
      %v4109 = vpop.f32.mrb[0].mxu0
      %v4110 = vadd.f32 %v3917, %v4109
      %4111 = vmatprep.mubr.bf16.mxu0 %v2181
      %4112 = vmatmul.mubr.bf16.gmra.mrb[0].mxu0 %v2180
      %v4113 = vpop.f32.mrb[0].mxu0
      %v4114 = vadd.f32 %v3921, %v4113
      %v4115 = vpop.f32.mrb[0].mxu0
      %v4116 = vadd.f32 %v3923, %v4115
      %v4117 = vpop.f32.mrb[0].mxu0
      %v4118 = vadd.f32 %v3925, %v4117
      %v4119 = vpop.f32.mrb[0].mxu0
      %v4120 = vadd.f32 %v3927, %v4119
      %4121 = vmatprep.mubr.bf16.mxu0 %v2189
      %4122 = vmatmul.mubr.bf16.gmra.mrb[0].mxu0 %v2188
      %v4123 = vpop.f32.mrb[0].mxu0
      %v4124 = vadd.f32 %v3931, %v4123
      %v4125 = vpop.f32.mrb[0].mxu0
      %v4126 = vadd.f32 %v3933, %v4125
      %v4127 = vpop.f32.mrb[0].mxu0
      %v4128 = vadd.f32 %v3935, %v4127
      %v4129 = vpop.f32.mrb[0].mxu0
      %v4130 = vadd.f32 %v3937, %v4129
      %4131 = vmatprep.mubr.bf16.mxu0 %v2197
      %4132 = vmatmul.mubr.bf16.gmra.mrb[0].mxu0 %v2196
      %v4133 = vpop.f32.mrb[0].mxu0
      %v4134 = vadd.f32 %v3941, %v4133
      %v4135 = vpop.f32.mrb[0].mxu0
      %v4136 = vadd.f32 %v3943, %v4135
      %v4137 = vpop.f32.mrb[0].mxu0
      %v4138 = vadd.f32 %v3945, %v4137
      %v4139 = vpop.f32.mrb[0].mxu0
      %v4140 = vadd.f32 %v3947, %v4139
      %4141 = vmatprep.mubr.bf16.mxu0 %v2205
      %4142 = vmatmul.mubr.bf16.gmra.mrb[0].mxu0 %v2204
      %v4143 = vpop.f32.mrb[0].mxu0
      %v4144 = vadd.f32 %v3951, %v4143
      %v4145 = vpop.f32.mrb[0].mxu0
      %v4146 = vadd.f32 %v3953, %v4145
      %v4147 = vpop.f32.mrb[0].mxu0
      %v4148 = vadd.f32 %v3955, %v4147
      %v4149 = vpop.f32.mrb[0].mxu0
      %v4150 = vadd.f32 %v3957, %v4149
      %4151 = vmatprep.mubr.bf16.mxu0 %v2213
      %4152 = vmatmul.mubr.bf16.gmra.mrb[0].mxu0 %v2212
      %v4153 = vpop.f32.mrb[0].mxu0
      %v4154 = vadd.f32 %v3961, %v4153
      %v4155 = vpop.f32.mrb[0].mxu0
      %v4156 = vadd.f32 %v3963, %v4155
      %v4157 = vpop.f32.mrb[0].mxu0
      %v4158 = vadd.f32 %v3965, %v4157
      %v4159 = vpop.f32.mrb[0].mxu0
      %v4160 = vadd.f32 %v3967, %v4159
      %4161 = vdwg.mxu0
      %4162 = vmatprep.subr.bf16.mxu0 %v3393
      %4163 = vmatpush1.bf16.msra.mxu0 %v3392
      %4164 = vmatprep.subr.bf16.mxu0 %v3397
      %4165 = vmatpush1.bf16.msra.mxu0 %v3396
      %4166 = vmatprep.subr.bf16.mxu0 %v3401
      %4167 = vmatpush1.bf16.msra.mxu0 %v3400
      %4168 = vmatprep.subr.bf16.mxu0 %v3405
      %4169 = vmatpush1.bf16.msra.mxu0 %v3404
      %4170 = vmatprep.subr.bf16.mxu0 %v3409
      %4171 = vmatpush1.bf16.msra.mxu0 %v3408
      %4172 = vmatprep.subr.bf16.mxu0 %v3413
      %4173 = vmatpush1.bf16.msra.mxu0 %v3412
      %4174 = vmatprep.subr.bf16.mxu0 %v3417
      %4175 = vmatpush1.bf16.msra.mxu0 %v3416
      %4176 = vmatprep.subr.bf16.mxu0 %v3421
      %4177 = vmatpush1.bf16.msra.mxu0 %v3420
      %4178 = vmatprep.subr.bf16.mxu0 %v3425
      %4179 = vmatpush1.bf16.msra.mxu0 %v3424
      %4180 = vmatprep.subr.bf16.mxu0 %v3429
      %4181 = vmatpush1.bf16.msra.mxu0 %v3428
      %4182 = vmatprep.subr.bf16.mxu0 %v3433
      %4183 = vmatpush1.bf16.msra.mxu0 %v3432
      %4184 = vmatprep.subr.bf16.mxu0 %v3437
      %4185 = vmatpush1.bf16.msra.mxu0 %v3436
      %4186 = vmatprep.subr.bf16.mxu0 %v3441
      %4187 = vmatpush1.bf16.msra.mxu0 %v3440
      %4188 = vmatprep.subr.bf16.mxu0 %v3445
      %4189 = vmatpush1.bf16.msra.mxu0 %v3444
      %4190 = vmatprep.subr.bf16.mxu0 %v3449
      %4191 = vmatpush1.bf16.msra.mxu0 %v3448
      %4192 = vmatprep.subr.bf16.mxu0 %v3453
      %4193 = vmatpush1.bf16.msra.mxu0 %v3452
      %4194 = vmatprep.mubr.bf16.mxu0 %v2095
      %4195 = vmatmul.mubr.bf16.gmra.mrb[0].mxu0 %v2094
      %v4196 = vpop.f32.mrb[0].mxu0
      %v4197 = vadd.f32 %v4004, %v4196
      %v4198 = vpop.f32.mrb[0].mxu0
      %v4199 = vadd.f32 %v4006, %v4198
      %v4200 = vpop.f32.mrb[0].mxu0
      %v4201 = vadd.f32 %v4008, %v4200
      %v4202 = vpop.f32.mrb[0].mxu0
      %v4203 = vadd.f32 %v4010, %v4202
      %4204 = vmatprep.mubr.bf16.mxu0 %v2103
      %4205 = vmatmul.mubr.bf16.gmra.mrb[0].mxu0 %v2102
      %v4206 = vpop.f32.mrb[0].mxu0
      %v4207 = vadd.f32 %v4014, %v4206
      %v4208 = vpop.f32.mrb[0].mxu0
      %v4209 = vadd.f32 %v4016, %v4208
      %v4210 = vpop.f32.mrb[0].mxu0
      %v4211 = vadd.f32 %v4018, %v4210
      %v4212 = vpop.f32.mrb[0].mxu0
      %v4213 = vadd.f32 %v4020, %v4212
      %4214 = vmatprep.mubr.bf16.mxu0 %v2111
      %4215 = vmatmul.mubr.bf16.gmra.mrb[0].mxu0 %v2110
      %v4216 = vpop.f32.mrb[0].mxu0
      %v4217 = vadd.f32 %v4024, %v4216
      %v4218 = vpop.f32.mrb[0].mxu0
      %v4219 = vadd.f32 %v4026, %v4218
      %v4220 = vpop.f32.mrb[0].mxu0
      %v4221 = vadd.f32 %v4028, %v4220
      %v4222 = vpop.f32.mrb[0].mxu0
      %v4223 = vadd.f32 %v4030, %v4222
      %4224 = vmatprep.mubr.bf16.mxu0 %v2119
      %4225 = vmatmul.mubr.bf16.gmra.mrb[0].mxu0 %v2118
      %v4226 = vpop.f32.mrb[0].mxu0
      %v4227 = vadd.f32 %v4034, %v4226
      %v4228 = vpop.f32.mrb[0].mxu0
      %v4229 = vadd.f32 %v4036, %v4228
      %v4230 = vpop.f32.mrb[0].mxu0
      %v4231 = vadd.f32 %v4038, %v4230
      %v4232 = vpop.f32.mrb[0].mxu0
      %v4233 = vadd.f32 %v4040, %v4232
      %4234 = vmatprep.mubr.bf16.mxu0 %v2127
      %4235 = vmatmul.mubr.bf16.gmra.mrb[0].mxu0 %v2126
      %v4236 = vpop.f32.mrb[0].mxu0
      %v4237 = vadd.f32 %v4044, %v4236
      %v4238 = vpop.f32.mrb[0].mxu0
      %v4239 = vadd.f32 %v4046, %v4238
      %v4240 = vpop.f32.mrb[0].mxu0
      %v4241 = vadd.f32 %v4048, %v4240
      %v4242 = vpop.f32.mrb[0].mxu0
      %v4243 = vadd.f32 %v4050, %v4242
      %4244 = vmatprep.mubr.bf16.mxu0 %v2135
      %4245 = vmatmul.mubr.bf16.gmra.mrb[0].mxu0 %v2134
      %v4246 = vpop.f32.mrb[0].mxu0
      %v4247 = vadd.f32 %v4054, %v4246
      %v4248 = vpop.f32.mrb[0].mxu0
      %v4249 = vadd.f32 %v4056, %v4248
      %v4250 = vpop.f32.mrb[0].mxu0
      %v4251 = vadd.f32 %v4058, %v4250
      %v4252 = vpop.f32.mrb[0].mxu0
      %v4253 = vadd.f32 %v4060, %v4252
      %4254 = vmatprep.mubr.bf16.mxu0 %v2143
      %4255 = vmatmul.mubr.bf16.gmra.mrb[0].mxu0 %v2142
      %v4256 = vpop.f32.mrb[0].mxu0
      %v4257 = vadd.f32 %v4064, %v4256
      %v4258 = vpop.f32.mrb[0].mxu0
      %v4259 = vadd.f32 %v4066, %v4258
      %v4260 = vpop.f32.mrb[0].mxu0
      %v4261 = vadd.f32 %v4068, %v4260
      %v4262 = vpop.f32.mrb[0].mxu0
      %v4263 = vadd.f32 %v4070, %v4262
      %4264 = vmatprep.mubr.bf16.mxu0 %v2151
      %4265 = vmatmul.mubr.bf16.gmra.mrb[0].mxu0 %v2150
      %v4266 = vpop.f32.mrb[0].mxu0
      %v4267 = vadd.f32 %v4074, %v4266
      %v4268 = vpop.f32.mrb[0].mxu0
      %v4269 = vadd.f32 %v4076, %v4268
      %v4270 = vpop.f32.mrb[0].mxu0
      %v4271 = vadd.f32 %v4078, %v4270
      %v4272 = vpop.f32.mrb[0].mxu0
      %v4273 = vadd.f32 %v4080, %v4272
      %4274 = vmatprep.mubr.bf16.mxu0 %v2159
      %4275 = vmatmul.mubr.bf16.gmra.mrb[0].mxu0 %v2158
      %v4276 = vpop.f32.mrb[0].mxu0
      %v4277 = vadd.f32 %v4084, %v4276
      %v4278 = vpop.f32.mrb[0].mxu0
      %v4279 = vadd.f32 %v4086, %v4278
      %v4280 = vpop.f32.mrb[0].mxu0
      %v4281 = vadd.f32 %v4088, %v4280
      %v4282 = vpop.f32.mrb[0].mxu0
      %v4283 = vadd.f32 %v4090, %v4282
      %4284 = vmatprep.mubr.bf16.mxu0 %v2167
      %4285 = vmatmul.mubr.bf16.gmra.mrb[0].mxu0 %v2166
      %v4286 = vpop.f32.mrb[0].mxu0
      %v4287 = vadd.f32 %v4094, %v4286
      %v4288 = vpop.f32.mrb[0].mxu0
      %v4289 = vadd.f32 %v4096, %v4288
      %v4290 = vpop.f32.mrb[0].mxu0
      %v4291 = vadd.f32 %v4098, %v4290
      %v4292 = vpop.f32.mrb[0].mxu0
      %v4293 = vadd.f32 %v4100, %v4292
      %4294 = vmatprep.mubr.bf16.mxu0 %v2175
      %4295 = vmatmul.mubr.bf16.gmra.mrb[0].mxu0 %v2174
      %v4296 = vpop.f32.mrb[0].mxu0
      %v4297 = vadd.f32 %v4104, %v4296
      %v4298 = vpop.f32.mrb[0].mxu0
      %v4299 = vadd.f32 %v4106, %v4298
      %v4300 = vpop.f32.mrb[0].mxu0
      %v4301 = vadd.f32 %v4108, %v4300
      %v4302 = vpop.f32.mrb[0].mxu0
      %v4303 = vadd.f32 %v4110, %v4302
      %4304 = vmatprep.mubr.bf16.mxu0 %v2183
      %4305 = vmatmul.mubr.bf16.gmra.mrb[0].mxu0 %v2182
      %v4306 = vpop.f32.mrb[0].mxu0
      %v4307 = vadd.f32 %v4114, %v4306
      %v4308 = vpop.f32.mrb[0].mxu0
      %v4309 = vadd.f32 %v4116, %v4308
      %v4310 = vpop.f32.mrb[0].mxu0
      %v4311 = vadd.f32 %v4118, %v4310
      %v4312 = vpop.f32.mrb[0].mxu0
      %v4313 = vadd.f32 %v4120, %v4312
      %4314 = vmatprep.mubr.bf16.mxu0 %v2191
      %4315 = vmatmul.mubr.bf16.gmra.mrb[0].mxu0 %v2190
      %v4316 = vpop.f32.mrb[0].mxu0
      %v4317 = vadd.f32 %v4124, %v4316
      %v4318 = vpop.f32.mrb[0].mxu0
      %v4319 = vadd.f32 %v4126, %v4318
      %v4320 = vpop.f32.mrb[0].mxu0
      %v4321 = vadd.f32 %v4128, %v4320
      %v4322 = vpop.f32.mrb[0].mxu0
      %v4323 = vadd.f32 %v4130, %v4322
      %4324 = vmatprep.mubr.bf16.mxu0 %v2199
      %4325 = vmatmul.mubr.bf16.gmra.mrb[0].mxu0 %v2198
      %v4326 = vpop.f32.mrb[0].mxu0
      %v4327 = vadd.f32 %v4134, %v4326
      %v4328 = vpop.f32.mrb[0].mxu0
      %v4329 = vadd.f32 %v4136, %v4328
      %v4330 = vpop.f32.mrb[0].mxu0
      %v4331 = vadd.f32 %v4138, %v4330
      %v4332 = vpop.f32.mrb[0].mxu0
      %v4333 = vadd.f32 %v4140, %v4332
      %4334 = vmatprep.mubr.bf16.mxu0 %v2207
      %4335 = vmatmul.mubr.bf16.gmra.mrb[0].mxu0 %v2206
      %v4336 = vpop.f32.mrb[0].mxu0
      %v4337 = vadd.f32 %v4144, %v4336
      %v4338 = vpop.f32.mrb[0].mxu0
      %v4339 = vadd.f32 %v4146, %v4338
      %v4340 = vpop.f32.mrb[0].mxu0
      %v4341 = vadd.f32 %v4148, %v4340
      %v4342 = vpop.f32.mrb[0].mxu0
      %v4343 = vadd.f32 %v4150, %v4342
      %4344 = vmatprep.mubr.bf16.mxu0 %v2215
      %4345 = vmatmul.mubr.bf16.gmra.mrb[0].mxu0 %v2214
      %v4346 = vpop.f32.mrb[0].mxu0
      %v4347 = vadd.f32 %v4154, %v4346
      %v4348 = vpop.f32.mrb[0].mxu0
      %v4349 = vadd.f32 %v4156, %v4348
      %v4350 = vpop.f32.mrb[0].mxu0
      %v4351 = vadd.f32 %v4158, %v4350
      %v4352 = vpop.f32.mrb[0].mxu0
      %v4353 = vadd.f32 %v4160, %v4352
      %4354 = vdwg.mxu0
      %4355 = vmatprep.subr.bf16.mxu0 %v3457
      %4356 = vmatpush1.bf16.msra.mxu0 %v3456
      %4357 = vmatprep.subr.bf16.mxu0 %v3461
      %4358 = vmatpush1.bf16.msra.mxu0 %v3460
      %4359 = vmatprep.subr.bf16.mxu0 %v3465
      %4360 = vmatpush1.bf16.msra.mxu0 %v3464
      %4361 = vmatprep.subr.bf16.mxu0 %v3469
      %4362 = vmatpush1.bf16.msra.mxu0 %v3468
      %4363 = vmatprep.subr.bf16.mxu0 %v3473
      %4364 = vmatpush1.bf16.msra.mxu0 %v3472
      %4365 = vmatprep.subr.bf16.mxu0 %v3477
      %4366 = vmatpush1.bf16.msra.mxu0 %v3476
      %4367 = vmatprep.subr.bf16.mxu0 %v3481
      %4368 = vmatpush1.bf16.msra.mxu0 %v3480
      %4369 = vmatprep.subr.bf16.mxu0 %v3485
      %4370 = vmatpush1.bf16.msra.mxu0 %v3484
      %4371 = vmatprep.subr.bf16.mxu0 %v3489
      %4372 = vmatpush1.bf16.msra.mxu0 %v3488
      %4373 = vmatprep.subr.bf16.mxu0 %v3493
      %4374 = vmatpush1.bf16.msra.mxu0 %v3492
      %4375 = vmatprep.subr.bf16.mxu0 %v3497
      %4376 = vmatpush1.bf16.msra.mxu0 %v3496
      %4377 = vmatprep.subr.bf16.mxu0 %v3501
      %4378 = vmatpush1.bf16.msra.mxu0 %v3500
      %4379 = vmatprep.subr.bf16.mxu0 %v3505
      %4380 = vmatpush1.bf16.msra.mxu0 %v3504
      %4381 = vmatprep.subr.bf16.mxu0 %v3509
      %4382 = vmatpush1.bf16.msra.mxu0 %v3508
      %4383 = vmatprep.subr.bf16.mxu0 %v3513
      %4384 = vmatpush1.bf16.msra.mxu0 %v3512
      %4385 = vmatprep.subr.bf16.mxu0 %v3517
      %4386 = vmatpush1.bf16.msra.mxu0 %v3516
      %4387 = vmatprep.mubr.bf16.mxu0 %v2097
      %4388 = vmatmul.mubr.bf16.gmra.mrb[0].mxu0 %v2096
      %v4389 = vpop.f32.mrb[0].mxu0
      %v4390 = vadd.f32 %v4197, %v4389
      %v4391 = vpop.f32.mrb[0].mxu0
      %v4392 = vadd.f32 %v4199, %v4391
      %v4393 = vpop.f32.mrb[0].mxu0
      %v4394 = vadd.f32 %v4201, %v4393
      %v4395 = vpop.f32.mrb[0].mxu0
      %v4396 = vadd.f32 %v4203, %v4395
      %4397 = vmatprep.mubr.bf16.mxu0 %v2105
      %4398 = vmatmul.mubr.bf16.gmra.mrb[0].mxu0 %v2104
      %v4399 = vpop.f32.mrb[0].mxu0
      %v4400 = vadd.f32 %v4207, %v4399
      %v4401 = vpop.f32.mrb[0].mxu0
      %v4402 = vadd.f32 %v4209, %v4401
      %v4403 = vpop.f32.mrb[0].mxu0
      %v4404 = vadd.f32 %v4211, %v4403
      %v4405 = vpop.f32.mrb[0].mxu0
      %v4406 = vadd.f32 %v4213, %v4405
      %4407 = vmatprep.mubr.bf16.mxu0 %v2113
      %4408 = vmatmul.mubr.bf16.gmra.mrb[0].mxu0 %v2112
      %v4409 = vpop.f32.mrb[0].mxu0
      %v4410 = vadd.f32 %v4217, %v4409
      %v4411 = vpop.f32.mrb[0].mxu0
      %v4412 = vadd.f32 %v4219, %v4411
      %v4413 = vpop.f32.mrb[0].mxu0
      %v4414 = vadd.f32 %v4221, %v4413
      %v4415 = vpop.f32.mrb[0].mxu0
      %v4416 = vadd.f32 %v4223, %v4415
      %4417 = vmatprep.mubr.bf16.mxu0 %v2121
      %4418 = vmatmul.mubr.bf16.gmra.mrb[0].mxu0 %v2120
      %v4419 = vpop.f32.mrb[0].mxu0
      %v4420 = vadd.f32 %v4227, %v4419
      %v4421 = vpop.f32.mrb[0].mxu0
      %v4422 = vadd.f32 %v4229, %v4421
      %v4423 = vpop.f32.mrb[0].mxu0
      %v4424 = vadd.f32 %v4231, %v4423
      %v4425 = vpop.f32.mrb[0].mxu0
      %v4426 = vadd.f32 %v4233, %v4425
      %4427 = vmatprep.mubr.bf16.mxu0 %v2129
      %4428 = vmatmul.mubr.bf16.gmra.mrb[0].mxu0 %v2128
      %v4429 = vpop.f32.mrb[0].mxu0
      %v4430 = vadd.f32 %v4237, %v4429
      %v4431 = vpop.f32.mrb[0].mxu0
      %v4432 = vadd.f32 %v4239, %v4431
      %v4433 = vpop.f32.mrb[0].mxu0
      %v4434 = vadd.f32 %v4241, %v4433
      %v4435 = vpop.f32.mrb[0].mxu0
      %v4436 = vadd.f32 %v4243, %v4435
      %4437 = vmatprep.mubr.bf16.mxu0 %v2137
      %4438 = vmatmul.mubr.bf16.gmra.mrb[0].mxu0 %v2136
      %v4439 = vpop.f32.mrb[0].mxu0
      %v4440 = vadd.f32 %v4247, %v4439
      %v4441 = vpop.f32.mrb[0].mxu0
      %v4442 = vadd.f32 %v4249, %v4441
      %v4443 = vpop.f32.mrb[0].mxu0
      %v4444 = vadd.f32 %v4251, %v4443
      %v4445 = vpop.f32.mrb[0].mxu0
      %v4446 = vadd.f32 %v4253, %v4445
      %4447 = vmatprep.mubr.bf16.mxu0 %v2145
      %4448 = vmatmul.mubr.bf16.gmra.mrb[0].mxu0 %v2144
      %v4449 = vpop.f32.mrb[0].mxu0
      %v4450 = vadd.f32 %v4257, %v4449
      %v4451 = vpop.f32.mrb[0].mxu0
      %v4452 = vadd.f32 %v4259, %v4451
      %v4453 = vpop.f32.mrb[0].mxu0
      %v4454 = vadd.f32 %v4261, %v4453
      %v4455 = vpop.f32.mrb[0].mxu0
      %v4456 = vadd.f32 %v4263, %v4455
      %4457 = vmatprep.mubr.bf16.mxu0 %v2153
      %4458 = vmatmul.mubr.bf16.gmra.mrb[0].mxu0 %v2152
      %v4459 = vpop.f32.mrb[0].mxu0
      %v4460 = vadd.f32 %v4267, %v4459
      %v4461 = vpop.f32.mrb[0].mxu0
      %v4462 = vadd.f32 %v4269, %v4461
      %v4463 = vpop.f32.mrb[0].mxu0
      %v4464 = vadd.f32 %v4271, %v4463
      %v4465 = vpop.f32.mrb[0].mxu0
      %v4466 = vadd.f32 %v4273, %v4465
      %4467 = vmatprep.mubr.bf16.mxu0 %v2161
      %4468 = vmatmul.mubr.bf16.gmra.mrb[0].mxu0 %v2160
      %v4469 = vpop.f32.mrb[0].mxu0
      %v4470 = vadd.f32 %v4277, %v4469
      %v4471 = vpop.f32.mrb[0].mxu0
      %v4472 = vadd.f32 %v4279, %v4471
      %v4473 = vpop.f32.mrb[0].mxu0
      %v4474 = vadd.f32 %v4281, %v4473
      %v4475 = vpop.f32.mrb[0].mxu0
      %v4476 = vadd.f32 %v4283, %v4475
      %4477 = vmatprep.mubr.bf16.mxu0 %v2169
      %4478 = vmatmul.mubr.bf16.gmra.mrb[0].mxu0 %v2168
      %v4479 = vpop.f32.mrb[0].mxu0
      %v4480 = vadd.f32 %v4287, %v4479
      %v4481 = vpop.f32.mrb[0].mxu0
      %v4482 = vadd.f32 %v4289, %v4481
      %v4483 = vpop.f32.mrb[0].mxu0
      %v4484 = vadd.f32 %v4291, %v4483
      %v4485 = vpop.f32.mrb[0].mxu0
      %v4486 = vadd.f32 %v4293, %v4485
      %4487 = vmatprep.mubr.bf16.mxu0 %v2177
      %4488 = vmatmul.mubr.bf16.gmra.mrb[0].mxu0 %v2176
      %v4489 = vpop.f32.mrb[0].mxu0
      %v4490 = vadd.f32 %v4297, %v4489
      %v4491 = vpop.f32.mrb[0].mxu0
      %v4492 = vadd.f32 %v4299, %v4491
      %v4493 = vpop.f32.mrb[0].mxu0
      %v4494 = vadd.f32 %v4301, %v4493
      %v4495 = vpop.f32.mrb[0].mxu0
      %v4496 = vadd.f32 %v4303, %v4495
      %4497 = vmatprep.mubr.bf16.mxu0 %v2185
      %4498 = vmatmul.mubr.bf16.gmra.mrb[0].mxu0 %v2184
      %v4499 = vpop.f32.mrb[0].mxu0
      %v4500 = vadd.f32 %v4307, %v4499
      %v4501 = vpop.f32.mrb[0].mxu0
      %v4502 = vadd.f32 %v4309, %v4501
      %v4503 = vpop.f32.mrb[0].mxu0
      %v4504 = vadd.f32 %v4311, %v4503
      %v4505 = vpop.f32.mrb[0].mxu0
      %v4506 = vadd.f32 %v4313, %v4505
      %4507 = vmatprep.mubr.bf16.mxu0 %v2193
      %4508 = vmatmul.mubr.bf16.gmra.mrb[0].mxu0 %v2192
      %v4509 = vpop.f32.mrb[0].mxu0
      %v4510 = vadd.f32 %v4317, %v4509
      %v4511 = vpop.f32.mrb[0].mxu0
      %v4512 = vadd.f32 %v4319, %v4511
      %v4513 = vpop.f32.mrb[0].mxu0
      %v4514 = vadd.f32 %v4321, %v4513
      %v4515 = vpop.f32.mrb[0].mxu0
      %v4516 = vadd.f32 %v4323, %v4515
      %4517 = vmatprep.mubr.bf16.mxu0 %v2201
      %4518 = vmatmul.mubr.bf16.gmra.mrb[0].mxu0 %v2200
      %v4519 = vpop.f32.mrb[0].mxu0
      %v4520 = vadd.f32 %v4327, %v4519
      %v4521 = vpop.f32.mrb[0].mxu0
      %v4522 = vadd.f32 %v4329, %v4521
      %v4523 = vpop.f32.mrb[0].mxu0
      %v4524 = vadd.f32 %v4331, %v4523
      %v4525 = vpop.f32.mrb[0].mxu0
      %v4526 = vadd.f32 %v4333, %v4525
      %4527 = vmatprep.mubr.bf16.mxu0 %v2209
      %4528 = vmatmul.mubr.bf16.gmra.mrb[0].mxu0 %v2208
      %v4529 = vpop.f32.mrb[0].mxu0
      %v4530 = vadd.f32 %v4337, %v4529
      %v4531 = vpop.f32.mrb[0].mxu0
      %v4532 = vadd.f32 %v4339, %v4531
      %v4533 = vpop.f32.mrb[0].mxu0
      %v4534 = vadd.f32 %v4341, %v4533
      %v4535 = vpop.f32.mrb[0].mxu0
      %v4536 = vadd.f32 %v4343, %v4535
      %4537 = vmatprep.mubr.bf16.mxu0 %v2217
      %4538 = vmatmul.mubr.bf16.gmra.mrb[0].mxu0 %v2216
      %v4539 = vpop.f32.mrb[0].mxu0
      %v4540 = vadd.f32 %v4347, %v4539
      %v4541 = vpop.f32.mrb[0].mxu0
      %v4542 = vadd.f32 %v4349, %v4541
      %v4543 = vpop.f32.mrb[0].mxu0
      %v4544 = vadd.f32 %v4351, %v4543
      %v4545 = vpop.f32.mrb[0].mxu0
      %v4546 = vadd.f32 %v4353, %v4545
      %4547 = vdwg.mxu0
      %4548 = vmatprep.subr.bf16.mxu0 %v3267
      %4549 = vmatpush1.bf16.msra.mxu0 %v3266
      %4550 = vmatprep.subr.bf16.mxu0 %v3271
      %4551 = vmatpush1.bf16.msra.mxu0 %v3270
      %4552 = vmatprep.subr.bf16.mxu0 %v3275
      %4553 = vmatpush1.bf16.msra.mxu0 %v3274
      %4554 = vmatprep.subr.bf16.mxu0 %v3279
      %4555 = vmatpush1.bf16.msra.mxu0 %v3278
      %4556 = vmatprep.subr.bf16.mxu0 %v3283
      %4557 = vmatpush1.bf16.msra.mxu0 %v3282
      %4558 = vmatprep.subr.bf16.mxu0 %v3287
      %4559 = vmatpush1.bf16.msra.mxu0 %v3286
      %4560 = vmatprep.subr.bf16.mxu0 %v3291
      %4561 = vmatpush1.bf16.msra.mxu0 %v3290
      %4562 = vmatprep.subr.bf16.mxu0 %v3295
      %4563 = vmatpush1.bf16.msra.mxu0 %v3294
      %4564 = vmatprep.subr.bf16.mxu0 %v3299
      %4565 = vmatpush1.bf16.msra.mxu0 %v3298
      %4566 = vmatprep.subr.bf16.mxu0 %v3303
      %4567 = vmatpush1.bf16.msra.mxu0 %v3302
      %4568 = vmatprep.subr.bf16.mxu0 %v3307
      %4569 = vmatpush1.bf16.msra.mxu0 %v3306
      %4570 = vmatprep.subr.bf16.mxu0 %v3311
      %4571 = vmatpush1.bf16.msra.mxu0 %v3310
      %4572 = vmatprep.subr.bf16.mxu0 %v3315
      %4573 = vmatpush1.bf16.msra.mxu0 %v3314
      %4574 = vmatprep.subr.bf16.mxu0 %v3319
      %4575 = vmatpush1.bf16.msra.mxu0 %v3318
      %4576 = vmatprep.subr.bf16.mxu0 %v3323
      %4577 = vmatpush1.bf16.msra.mxu0 %v3322
      %4578 = vmatprep.subr.bf16.mxu0 %v3327
      %4579 = vmatpush1.bf16.msra.mxu0 %v3326
      %4580 = vmatprep.mubr.bf16.mxu0 %v2091
      %4581 = vmatmul.mubr.bf16.gmra.mrb[0].mxu0 %v2090
      %v4582 = vpop.f32.mrb[0].mxu0
      %v4583 = vadd.f32 %v2487, %v4582
      %v4584 = vpop.f32.mrb[0].mxu0
      %v4585 = vadd.f32 %v2491, %v4584
      %v4586 = vpop.f32.mrb[0].mxu0
      %v4587 = vadd.f32 %v2487, %v4586
      %v4588 = vpop.f32.mrb[0].mxu0
      %v4589 = vadd.f32 %v2491, %v4588
      %4590 = vmatprep.mubr.bf16.mxu0 %v2099
      %4591 = vmatmul.mubr.bf16.gmra.mrb[0].mxu0 %v2098
      %v4592 = vpop.f32.mrb[0].mxu0
      %v4593 = vadd.f32 %v2487, %v4592
      %v4594 = vpop.f32.mrb[0].mxu0
      %v4595 = vadd.f32 %v2491, %v4594
      %v4596 = vpop.f32.mrb[0].mxu0
      %v4597 = vadd.f32 %v2487, %v4596
      %v4598 = vpop.f32.mrb[0].mxu0
      %v4599 = vadd.f32 %v2491, %v4598
      %4600 = vmatprep.mubr.bf16.mxu0 %v2107
      %4601 = vmatmul.mubr.bf16.gmra.mrb[0].mxu0 %v2106
      %v4602 = vpop.f32.mrb[0].mxu0
      %v4603 = vadd.f32 %v2487, %v4602
      %v4604 = vpop.f32.mrb[0].mxu0
      %v4605 = vadd.f32 %v2491, %v4604
      %v4606 = vpop.f32.mrb[0].mxu0
      %v4607 = vadd.f32 %v2487, %v4606
      %v4608 = vpop.f32.mrb[0].mxu0
      %v4609 = vadd.f32 %v2491, %v4608
      %4610 = vmatprep.mubr.bf16.mxu0 %v2115
      %4611 = vmatmul.mubr.bf16.gmra.mrb[0].mxu0 %v2114
      %v4612 = vpop.f32.mrb[0].mxu0
      %v4613 = vadd.f32 %v2487, %v4612
      %v4614 = vpop.f32.mrb[0].mxu0
      %v4615 = vadd.f32 %v2491, %v4614
      %v4616 = vpop.f32.mrb[0].mxu0
      %v4617 = vadd.f32 %v2487, %v4616
      %v4618 = vpop.f32.mrb[0].mxu0
      %v4619 = vadd.f32 %v2491, %v4618
      %4620 = vmatprep.mubr.bf16.mxu0 %v2123
      %4621 = vmatmul.mubr.bf16.gmra.mrb[0].mxu0 %v2122
      %v4622 = vpop.f32.mrb[0].mxu0
      %v4623 = vadd.f32 %v2487, %v4622
      %v4624 = vpop.f32.mrb[0].mxu0
      %v4625 = vadd.f32 %v2491, %v4624
      %v4626 = vpop.f32.mrb[0].mxu0
      %v4627 = vadd.f32 %v2487, %v4626
      %v4628 = vpop.f32.mrb[0].mxu0
      %v4629 = vadd.f32 %v2491, %v4628
      %4630 = vmatprep.mubr.bf16.mxu0 %v2131
      %4631 = vmatmul.mubr.bf16.gmra.mrb[0].mxu0 %v2130
      %v4632 = vpop.f32.mrb[0].mxu0
      %v4633 = vadd.f32 %v2487, %v4632
      %v4634 = vpop.f32.mrb[0].mxu0
      %v4635 = vadd.f32 %v2491, %v4634
      %v4636 = vpop.f32.mrb[0].mxu0
      %v4637 = vadd.f32 %v2487, %v4636
      %v4638 = vpop.f32.mrb[0].mxu0
      %v4639 = vadd.f32 %v2491, %v4638
      %4640 = vmatprep.mubr.bf16.mxu0 %v2139
      %4641 = vmatmul.mubr.bf16.gmra.mrb[0].mxu0 %v2138
      %v4642 = vpop.f32.mrb[0].mxu0
      %v4643 = vadd.f32 %v2487, %v4642
      %v4644 = vpop.f32.mrb[0].mxu0
      %v4645 = vadd.f32 %v2491, %v4644
      %v4646 = vpop.f32.mrb[0].mxu0
      %v4647 = vadd.f32 %v2487, %v4646
      %v4648 = vpop.f32.mrb[0].mxu0
      %v4649 = vadd.f32 %v2491, %v4648
      %4650 = vmatprep.mubr.bf16.mxu0 %v2147
      %4651 = vmatmul.mubr.bf16.gmra.mrb[0].mxu0 %v2146
      %v4652 = vpop.f32.mrb[0].mxu0
      %v4653 = vadd.f32 %v2487, %v4652
      %v4654 = vpop.f32.mrb[0].mxu0
      %v4655 = vadd.f32 %v2491, %v4654
      %v4656 = vpop.f32.mrb[0].mxu0
      %v4657 = vadd.f32 %v2487, %v4656
      %v4658 = vpop.f32.mrb[0].mxu0
      %v4659 = vadd.f32 %v2491, %v4658
      %4660 = vmatprep.mubr.bf16.mxu0 %v2155
      %4661 = vmatmul.mubr.bf16.gmra.mrb[0].mxu0 %v2154
      %v4662 = vpop.f32.mrb[0].mxu0
      %v4663 = vadd.f32 %v2487, %v4662
      %v4664 = vpop.f32.mrb[0].mxu0
      %v4665 = vadd.f32 %v2491, %v4664
      %v4666 = vpop.f32.mrb[0].mxu0
      %v4667 = vadd.f32 %v2487, %v4666
      %v4668 = vpop.f32.mrb[0].mxu0
      %v4669 = vadd.f32 %v2491, %v4668
      %4670 = vmatprep.mubr.bf16.mxu0 %v2163
      %4671 = vmatmul.mubr.bf16.gmra.mrb[0].mxu0 %v2162
      %v4672 = vpop.f32.mrb[0].mxu0
      %v4673 = vadd.f32 %v2487, %v4672
      %v4674 = vpop.f32.mrb[0].mxu0
      %v4675 = vadd.f32 %v2491, %v4674
      %v4676 = vpop.f32.mrb[0].mxu0
      %v4677 = vadd.f32 %v2487, %v4676
      %v4678 = vpop.f32.mrb[0].mxu0
      %v4679 = vadd.f32 %v2491, %v4678
      %4680 = vmatprep.mubr.bf16.mxu0 %v2171
      %4681 = vmatmul.mubr.bf16.gmra.mrb[0].mxu0 %v2170
      %v4682 = vpop.f32.mrb[0].mxu0
      %v4683 = vadd.f32 %v2487, %v4682
      %v4684 = vpop.f32.mrb[0].mxu0
      %v4685 = vadd.f32 %v2491, %v4684
      %v4686 = vpop.f32.mrb[0].mxu0
      %v4687 = vadd.f32 %v2487, %v4686
      %v4688 = vpop.f32.mrb[0].mxu0
      %v4689 = vadd.f32 %v2491, %v4688
      %4690 = vmatprep.mubr.bf16.mxu0 %v2179
      %4691 = vmatmul.mubr.bf16.gmra.mrb[0].mxu0 %v2178
      %v4692 = vpop.f32.mrb[0].mxu0
      %v4693 = vadd.f32 %v2487, %v4692
      %v4694 = vpop.f32.mrb[0].mxu0
      %v4695 = vadd.f32 %v2491, %v4694
      %v4696 = vpop.f32.mrb[0].mxu0
      %v4697 = vadd.f32 %v2487, %v4696
      %v4698 = vpop.f32.mrb[0].mxu0
      %v4699 = vadd.f32 %v2491, %v4698
      %4700 = vmatprep.mubr.bf16.mxu0 %v2187
      %4701 = vmatmul.mubr.bf16.gmra.mrb[0].mxu0 %v2186
      %v4702 = vpop.f32.mrb[0].mxu0
      %v4703 = vadd.f32 %v2487, %v4702
      %v4704 = vpop.f32.mrb[0].mxu0
      %v4705 = vadd.f32 %v2491, %v4704
      %v4706 = vpop.f32.mrb[0].mxu0
      %v4707 = vadd.f32 %v2487, %v4706
      %v4708 = vpop.f32.mrb[0].mxu0
      %v4709 = vadd.f32 %v2491, %v4708
      %4710 = vmatprep.mubr.bf16.mxu0 %v2195
      %4711 = vmatmul.mubr.bf16.gmra.mrb[0].mxu0 %v2194
      %v4712 = vpop.f32.mrb[0].mxu0
      %v4713 = vadd.f32 %v2487, %v4712
      %v4714 = vpop.f32.mrb[0].mxu0
      %v4715 = vadd.f32 %v2491, %v4714
      %v4716 = vpop.f32.mrb[0].mxu0
      %v4717 = vadd.f32 %v2487, %v4716
      %v4718 = vpop.f32.mrb[0].mxu0
      %v4719 = vadd.f32 %v2491, %v4718
      %4720 = vmatprep.mubr.bf16.mxu0 %v2203
      %4721 = vmatmul.mubr.bf16.gmra.mrb[0].mxu0 %v2202
      %v4722 = vpop.f32.mrb[0].mxu0
      %v4723 = vadd.f32 %v2487, %v4722
      %v4724 = vpop.f32.mrb[0].mxu0
      %v4725 = vadd.f32 %v2491, %v4724
      %v4726 = vpop.f32.mrb[0].mxu0
      %v4727 = vadd.f32 %v2487, %v4726
      %v4728 = vpop.f32.mrb[0].mxu0
      %v4729 = vadd.f32 %v2491, %v4728
      %4730 = vmatprep.mubr.bf16.mxu0 %v2211
      %4731 = vmatmul.mubr.bf16.gmra.mrb[0].mxu0 %v2210
      %v4732 = vpop.f32.mrb[0].mxu0
      %v4733 = vadd.f32 %v2487, %v4732
      %v4734 = vpop.f32.mrb[0].mxu0
      %v4735 = vadd.f32 %v2491, %v4734
      %v4736 = vpop.f32.mrb[0].mxu0
      %v4737 = vadd.f32 %v2487, %v4736
      %v4738 = vpop.f32.mrb[0].mxu0
      %v4739 = vadd.f32 %v2491, %v4738
      %4740 = vdwg.mxu0
      %4741 = vmatprep.subr.bf16.mxu0 %v3331
      %4742 = vmatpush1.bf16.msra.mxu0 %v3330
      %4743 = vmatprep.subr.bf16.mxu0 %v3335
      %4744 = vmatpush1.bf16.msra.mxu0 %v3334
      %4745 = vmatprep.subr.bf16.mxu0 %v3339
      %4746 = vmatpush1.bf16.msra.mxu0 %v3338
      %4747 = vmatprep.subr.bf16.mxu0 %v3343
      %4748 = vmatpush1.bf16.msra.mxu0 %v3342
      %4749 = vmatprep.subr.bf16.mxu0 %v3347
      %4750 = vmatpush1.bf16.msra.mxu0 %v3346
      %4751 = vmatprep.subr.bf16.mxu0 %v3351
      %4752 = vmatpush1.bf16.msra.mxu0 %v3350
      %4753 = vmatprep.subr.bf16.mxu0 %v3355
      %4754 = vmatpush1.bf16.msra.mxu0 %v3354
      %4755 = vmatprep.subr.bf16.mxu0 %v3359
      %4756 = vmatpush1.bf16.msra.mxu0 %v3358
      %4757 = vmatprep.subr.bf16.mxu0 %v3363
      %4758 = vmatpush1.bf16.msra.mxu0 %v3362
      %4759 = vmatprep.subr.bf16.mxu0 %v3367
      %4760 = vmatpush1.bf16.msra.mxu0 %v3366
      %4761 = vmatprep.subr.bf16.mxu0 %v3371
      %4762 = vmatpush1.bf16.msra.mxu0 %v3370
      %4763 = vmatprep.subr.bf16.mxu0 %v3375
      %4764 = vmatpush1.bf16.msra.mxu0 %v3374
      %4765 = vmatprep.subr.bf16.mxu0 %v3379
      %4766 = vmatpush1.bf16.msra.mxu0 %v3378
      %4767 = vmatprep.subr.bf16.mxu0 %v3383
      %4768 = vmatpush1.bf16.msra.mxu0 %v3382
      %4769 = vmatprep.subr.bf16.mxu0 %v3387
      %4770 = vmatpush1.bf16.msra.mxu0 %v3386
      %4771 = vmatprep.subr.bf16.mxu0 %v3391
      %4772 = vmatpush1.bf16.msra.mxu0 %v3390
      %4773 = vmatprep.mubr.bf16.mxu0 %v2093
      %4774 = vmatmul.mubr.bf16.gmra.mrb[0].mxu0 %v2092
      %v4775 = vpop.f32.mrb[0].mxu0
      %v4776 = vadd.f32 %v4583, %v4775
      %v4777 = vpop.f32.mrb[0].mxu0
      %v4778 = vadd.f32 %v4585, %v4777
      %v4779 = vpop.f32.mrb[0].mxu0
      %v4780 = vadd.f32 %v4587, %v4779
      %v4781 = vpop.f32.mrb[0].mxu0
      %v4782 = vadd.f32 %v4589, %v4781
      %4783 = vmatprep.mubr.bf16.mxu0 %v2101
      %4784 = vmatmul.mubr.bf16.gmra.mrb[0].mxu0 %v2100
      %v4785 = vpop.f32.mrb[0].mxu0
      %v4786 = vadd.f32 %v4593, %v4785
      %v4787 = vpop.f32.mrb[0].mxu0
      %v4788 = vadd.f32 %v4595, %v4787
      %v4789 = vpop.f32.mrb[0].mxu0
      %v4790 = vadd.f32 %v4597, %v4789
      %v4791 = vpop.f32.mrb[0].mxu0
      %v4792 = vadd.f32 %v4599, %v4791
      %4793 = vmatprep.mubr.bf16.mxu0 %v2109
      %4794 = vmatmul.mubr.bf16.gmra.mrb[0].mxu0 %v2108
      %v4795 = vpop.f32.mrb[0].mxu0
      %v4796 = vadd.f32 %v4603, %v4795
      %v4797 = vpop.f32.mrb[0].mxu0
      %v4798 = vadd.f32 %v4605, %v4797
      %v4799 = vpop.f32.mrb[0].mxu0
      %v4800 = vadd.f32 %v4607, %v4799
      %v4801 = vpop.f32.mrb[0].mxu0
      %v4802 = vadd.f32 %v4609, %v4801
      %4803 = vmatprep.mubr.bf16.mxu0 %v2117
      %4804 = vmatmul.mubr.bf16.gmra.mrb[0].mxu0 %v2116
      %v4805 = vpop.f32.mrb[0].mxu0
      %v4806 = vadd.f32 %v4613, %v4805
      %v4807 = vpop.f32.mrb[0].mxu0
      %v4808 = vadd.f32 %v4615, %v4807
      %v4809 = vpop.f32.mrb[0].mxu0
      %v4810 = vadd.f32 %v4617, %v4809
      %v4811 = vpop.f32.mrb[0].mxu0
      %v4812 = vadd.f32 %v4619, %v4811
      %4813 = vmatprep.mubr.bf16.mxu0 %v2125
      %4814 = vmatmul.mubr.bf16.gmra.mrb[0].mxu0 %v2124
      %v4815 = vpop.f32.mrb[0].mxu0
      %v4816 = vadd.f32 %v4623, %v4815
      %v4817 = vpop.f32.mrb[0].mxu0
      %v4818 = vadd.f32 %v4625, %v4817
      %v4819 = vpop.f32.mrb[0].mxu0
      %v4820 = vadd.f32 %v4627, %v4819
      %v4821 = vpop.f32.mrb[0].mxu0
      %v4822 = vadd.f32 %v4629, %v4821
      %4823 = vmatprep.mubr.bf16.mxu0 %v2133
      %4824 = vmatmul.mubr.bf16.gmra.mrb[0].mxu0 %v2132
      %v4825 = vpop.f32.mrb[0].mxu0
      %v4826 = vadd.f32 %v4633, %v4825
      %v4827 = vpop.f32.mrb[0].mxu0
      %v4828 = vadd.f32 %v4635, %v4827
      %v4829 = vpop.f32.mrb[0].mxu0
      %v4830 = vadd.f32 %v4637, %v4829
      %v4831 = vpop.f32.mrb[0].mxu0
      %v4832 = vadd.f32 %v4639, %v4831
      %4833 = vmatprep.mubr.bf16.mxu0 %v2141
      %4834 = vmatmul.mubr.bf16.gmra.mrb[0].mxu0 %v2140
      %v4835 = vpop.f32.mrb[0].mxu0
      %v4836 = vadd.f32 %v4643, %v4835
      %v4837 = vpop.f32.mrb[0].mxu0
      %v4838 = vadd.f32 %v4645, %v4837
      %v4839 = vpop.f32.mrb[0].mxu0
      %v4840 = vadd.f32 %v4647, %v4839
      %v4841 = vpop.f32.mrb[0].mxu0
      %v4842 = vadd.f32 %v4649, %v4841
      %4843 = vmatprep.mubr.bf16.mxu0 %v2149
      %4844 = vmatmul.mubr.bf16.gmra.mrb[0].mxu0 %v2148
      %v4845 = vpop.f32.mrb[0].mxu0
      %v4846 = vadd.f32 %v4653, %v4845
      %v4847 = vpop.f32.mrb[0].mxu0
      %v4848 = vadd.f32 %v4655, %v4847
      %v4849 = vpop.f32.mrb[0].mxu0
      %v4850 = vadd.f32 %v4657, %v4849
      %v4851 = vpop.f32.mrb[0].mxu0
      %v4852 = vadd.f32 %v4659, %v4851
      %4853 = vmatprep.mubr.bf16.mxu0 %v2157
      %4854 = vmatmul.mubr.bf16.gmra.mrb[0].mxu0 %v2156
      %v4855 = vpop.f32.mrb[0].mxu0
      %v4856 = vadd.f32 %v4663, %v4855
      %v4857 = vpop.f32.mrb[0].mxu0
      %v4858 = vadd.f32 %v4665, %v4857
      %v4859 = vpop.f32.mrb[0].mxu0
      %v4860 = vadd.f32 %v4667, %v4859
      %v4861 = vpop.f32.mrb[0].mxu0
      %v4862 = vadd.f32 %v4669, %v4861
      %4863 = vmatprep.mubr.bf16.mxu0 %v2165
      %4864 = vmatmul.mubr.bf16.gmra.mrb[0].mxu0 %v2164
      %v4865 = vpop.f32.mrb[0].mxu0
      %v4866 = vadd.f32 %v4673, %v4865
      %v4867 = vpop.f32.mrb[0].mxu0
      %v4868 = vadd.f32 %v4675, %v4867
      %v4869 = vpop.f32.mrb[0].mxu0
      %v4870 = vadd.f32 %v4677, %v4869
      %v4871 = vpop.f32.mrb[0].mxu0
      %v4872 = vadd.f32 %v4679, %v4871
      %4873 = vmatprep.mubr.bf16.mxu0 %v2173
      %4874 = vmatmul.mubr.bf16.gmra.mrb[0].mxu0 %v2172
      %v4875 = vpop.f32.mrb[0].mxu0
      %v4876 = vadd.f32 %v4683, %v4875
      %v4877 = vpop.f32.mrb[0].mxu0
      %v4878 = vadd.f32 %v4685, %v4877
      %v4879 = vpop.f32.mrb[0].mxu0
      %v4880 = vadd.f32 %v4687, %v4879
      %v4881 = vpop.f32.mrb[0].mxu0
      %v4882 = vadd.f32 %v4689, %v4881
      %4883 = vmatprep.mubr.bf16.mxu0 %v2181
      %4884 = vmatmul.mubr.bf16.gmra.mrb[0].mxu0 %v2180
      %v4885 = vpop.f32.mrb[0].mxu0
      %v4886 = vadd.f32 %v4693, %v4885
      %v4887 = vpop.f32.mrb[0].mxu0
      %v4888 = vadd.f32 %v4695, %v4887
      %v4889 = vpop.f32.mrb[0].mxu0
      %v4890 = vadd.f32 %v4697, %v4889
      %v4891 = vpop.f32.mrb[0].mxu0
      %v4892 = vadd.f32 %v4699, %v4891
      %4893 = vmatprep.mubr.bf16.mxu0 %v2189
      %4894 = vmatmul.mubr.bf16.gmra.mrb[0].mxu0 %v2188
      %v4895 = vpop.f32.mrb[0].mxu0
      %v4896 = vadd.f32 %v4703, %v4895
      %v4897 = vpop.f32.mrb[0].mxu0
      %v4898 = vadd.f32 %v4705, %v4897
      %v4899 = vpop.f32.mrb[0].mxu0
      %v4900 = vadd.f32 %v4707, %v4899
      %v4901 = vpop.f32.mrb[0].mxu0
      %v4902 = vadd.f32 %v4709, %v4901
      %4903 = vmatprep.mubr.bf16.mxu0 %v2197
      %4904 = vmatmul.mubr.bf16.gmra.mrb[0].mxu0 %v2196
      %v4905 = vpop.f32.mrb[0].mxu0
      %v4906 = vadd.f32 %v4713, %v4905
      %v4907 = vpop.f32.mrb[0].mxu0
      %v4908 = vadd.f32 %v4715, %v4907
      %v4909 = vpop.f32.mrb[0].mxu0
      %v4910 = vadd.f32 %v4717, %v4909
      %v4911 = vpop.f32.mrb[0].mxu0
      %v4912 = vadd.f32 %v4719, %v4911
      %4913 = vmatprep.mubr.bf16.mxu0 %v2205
      %4914 = vmatmul.mubr.bf16.gmra.mrb[0].mxu0 %v2204
      %v4915 = vpop.f32.mrb[0].mxu0
      %v4916 = vadd.f32 %v4723, %v4915
      %v4917 = vpop.f32.mrb[0].mxu0
      %v4918 = vadd.f32 %v4725, %v4917
      %v4919 = vpop.f32.mrb[0].mxu0
      %v4920 = vadd.f32 %v4727, %v4919
      %v4921 = vpop.f32.mrb[0].mxu0
      %v4922 = vadd.f32 %v4729, %v4921
      %4923 = vmatprep.mubr.bf16.mxu0 %v2213
      %4924 = vmatmul.mubr.bf16.gmra.mrb[0].mxu0 %v2212
      %v4925 = vpop.f32.mrb[0].mxu0
      %v4926 = vadd.f32 %v4733, %v4925
      %v4927 = vpop.f32.mrb[0].mxu0
      %v4928 = vadd.f32 %v4735, %v4927
      %v4929 = vpop.f32.mrb[0].mxu0
      %v4930 = vadd.f32 %v4737, %v4929
      %v4931 = vpop.f32.mrb[0].mxu0
      %v4932 = vadd.f32 %v4739, %v4931
      %4933 = vdwg.mxu0
      %4934 = vmatprep.subr.bf16.mxu0 %v3395
      %4935 = vmatpush1.bf16.msra.mxu0 %v3394
      %4936 = vmatprep.subr.bf16.mxu0 %v3399
      %4937 = vmatpush1.bf16.msra.mxu0 %v3398
      %4938 = vmatprep.subr.bf16.mxu0 %v3403
      %4939 = vmatpush1.bf16.msra.mxu0 %v3402
      %4940 = vmatprep.subr.bf16.mxu0 %v3407
      %4941 = vmatpush1.bf16.msra.mxu0 %v3406
      %4942 = vmatprep.subr.bf16.mxu0 %v3411
      %4943 = vmatpush1.bf16.msra.mxu0 %v3410
      %4944 = vmatprep.subr.bf16.mxu0 %v3415
      %4945 = vmatpush1.bf16.msra.mxu0 %v3414
      %4946 = vmatprep.subr.bf16.mxu0 %v3419
      %4947 = vmatpush1.bf16.msra.mxu0 %v3418
      %4948 = vmatprep.subr.bf16.mxu0 %v3423
      %4949 = vmatpush1.bf16.msra.mxu0 %v3422
      %4950 = vmatprep.subr.bf16.mxu0 %v3427
      %4951 = vmatpush1.bf16.msra.mxu0 %v3426
      %4952 = vmatprep.subr.bf16.mxu0 %v3431
      %4953 = vmatpush1.bf16.msra.mxu0 %v3430
      %4954 = vmatprep.subr.bf16.mxu0 %v3435
      %4955 = vmatpush1.bf16.msra.mxu0 %v3434
      %4956 = vmatprep.subr.bf16.mxu0 %v3439
      %4957 = vmatpush1.bf16.msra.mxu0 %v3438
      %4958 = vmatprep.subr.bf16.mxu0 %v3443
      %4959 = vmatpush1.bf16.msra.mxu0 %v3442
      %4960 = vmatprep.subr.bf16.mxu0 %v3447
      %4961 = vmatpush1.bf16.msra.mxu0 %v3446
      %4962 = vmatprep.subr.bf16.mxu0 %v3451
      %4963 = vmatpush1.bf16.msra.mxu0 %v3450
      %4964 = vmatprep.subr.bf16.mxu0 %v3455
      %4965 = vmatpush1.bf16.msra.mxu0 %v3454
      %4966 = vmatprep.mubr.bf16.mxu0 %v2095
      %4967 = vmatmul.mubr.bf16.gmra.mrb[0].mxu0 %v2094
      %v4968 = vpop.f32.mrb[0].mxu0
      %v4969 = vadd.f32 %v4776, %v4968
      %v4970 = vpop.f32.mrb[0].mxu0
      %v4971 = vadd.f32 %v4778, %v4970
      %v4972 = vpop.f32.mrb[0].mxu0
      %v4973 = vadd.f32 %v4780, %v4972
      %v4974 = vpop.f32.mrb[0].mxu0
      %v4975 = vadd.f32 %v4782, %v4974
      %4976 = vmatprep.mubr.bf16.mxu0 %v2103
      %4977 = vmatmul.mubr.bf16.gmra.mrb[0].mxu0 %v2102
      %v4978 = vpop.f32.mrb[0].mxu0
      %v4979 = vadd.f32 %v4786, %v4978
      %v4980 = vpop.f32.mrb[0].mxu0
      %v4981 = vadd.f32 %v4788, %v4980
      %v4982 = vpop.f32.mrb[0].mxu0
      %v4983 = vadd.f32 %v4790, %v4982
      %v4984 = vpop.f32.mrb[0].mxu0
      %v4985 = vadd.f32 %v4792, %v4984
      %4986 = vmatprep.mubr.bf16.mxu0 %v2111
      %4987 = vmatmul.mubr.bf16.gmra.mrb[0].mxu0 %v2110
      %v4988 = vpop.f32.mrb[0].mxu0
      %v4989 = vadd.f32 %v4796, %v4988
      %v4990 = vpop.f32.mrb[0].mxu0
      %v4991 = vadd.f32 %v4798, %v4990
      %v4992 = vpop.f32.mrb[0].mxu0
      %v4993 = vadd.f32 %v4800, %v4992
      %v4994 = vpop.f32.mrb[0].mxu0
      %v4995 = vadd.f32 %v4802, %v4994
      %4996 = vmatprep.mubr.bf16.mxu0 %v2119
      %4997 = vmatmul.mubr.bf16.gmra.mrb[0].mxu0 %v2118
      %v4998 = vpop.f32.mrb[0].mxu0
      %v4999 = vadd.f32 %v4806, %v4998
      %v5000 = vpop.f32.mrb[0].mxu0
      %v5001 = vadd.f32 %v4808, %v5000
      %v5002 = vpop.f32.mrb[0].mxu0
      %v5003 = vadd.f32 %v4810, %v5002
      %v5004 = vpop.f32.mrb[0].mxu0
      %v5005 = vadd.f32 %v4812, %v5004
      %5006 = vmatprep.mubr.bf16.mxu0 %v2127
      %5007 = vmatmul.mubr.bf16.gmra.mrb[0].mxu0 %v2126
      %v5008 = vpop.f32.mrb[0].mxu0
      %v5009 = vadd.f32 %v4816, %v5008
      %v5010 = vpop.f32.mrb[0].mxu0
      %v5011 = vadd.f32 %v4818, %v5010
      %v5012 = vpop.f32.mrb[0].mxu0
      %v5013 = vadd.f32 %v4820, %v5012
      %v5014 = vpop.f32.mrb[0].mxu0
      %v5015 = vadd.f32 %v4822, %v5014
      %5016 = vmatprep.mubr.bf16.mxu0 %v2135
      %5017 = vmatmul.mubr.bf16.gmra.mrb[0].mxu0 %v2134
      %v5018 = vpop.f32.mrb[0].mxu0
      %v5019 = vadd.f32 %v4826, %v5018
      %v5020 = vpop.f32.mrb[0].mxu0
      %v5021 = vadd.f32 %v4828, %v5020
      %v5022 = vpop.f32.mrb[0].mxu0
      %v5023 = vadd.f32 %v4830, %v5022
      %v5024 = vpop.f32.mrb[0].mxu0
      %v5025 = vadd.f32 %v4832, %v5024
      %5026 = vmatprep.mubr.bf16.mxu0 %v2143
      %5027 = vmatmul.mubr.bf16.gmra.mrb[0].mxu0 %v2142
      %v5028 = vpop.f32.mrb[0].mxu0
      %v5029 = vadd.f32 %v4836, %v5028
      %v5030 = vpop.f32.mrb[0].mxu0
      %v5031 = vadd.f32 %v4838, %v5030
      %v5032 = vpop.f32.mrb[0].mxu0
      %v5033 = vadd.f32 %v4840, %v5032
      %v5034 = vpop.f32.mrb[0].mxu0
      %v5035 = vadd.f32 %v4842, %v5034
      %5036 = vmatprep.mubr.bf16.mxu0 %v2151
      %5037 = vmatmul.mubr.bf16.gmra.mrb[0].mxu0 %v2150
      %v5038 = vpop.f32.mrb[0].mxu0
      %v5039 = vadd.f32 %v4846, %v5038
      %v5040 = vpop.f32.mrb[0].mxu0
      %v5041 = vadd.f32 %v4848, %v5040
      %v5042 = vpop.f32.mrb[0].mxu0
      %v5043 = vadd.f32 %v4850, %v5042
      %v5044 = vpop.f32.mrb[0].mxu0
      %v5045 = vadd.f32 %v4852, %v5044
      %5046 = vmatprep.mubr.bf16.mxu0 %v2159
      %5047 = vmatmul.mubr.bf16.gmra.mrb[0].mxu0 %v2158
      %v5048 = vpop.f32.mrb[0].mxu0
      %v5049 = vadd.f32 %v4856, %v5048
      %v5050 = vpop.f32.mrb[0].mxu0
      %v5051 = vadd.f32 %v4858, %v5050
      %v5052 = vpop.f32.mrb[0].mxu0
      %v5053 = vadd.f32 %v4860, %v5052
      %v5054 = vpop.f32.mrb[0].mxu0
      %v5055 = vadd.f32 %v4862, %v5054
      %5056 = vmatprep.mubr.bf16.mxu0 %v2167
      %5057 = vmatmul.mubr.bf16.gmra.mrb[0].mxu0 %v2166
      %v5058 = vpop.f32.mrb[0].mxu0
      %v5059 = vadd.f32 %v4866, %v5058
      %v5060 = vpop.f32.mrb[0].mxu0
      %v5061 = vadd.f32 %v4868, %v5060
      %v5062 = vpop.f32.mrb[0].mxu0
      %v5063 = vadd.f32 %v4870, %v5062
      %v5064 = vpop.f32.mrb[0].mxu0
      %v5065 = vadd.f32 %v4872, %v5064
      %5066 = vmatprep.mubr.bf16.mxu0 %v2175
      %5067 = vmatmul.mubr.bf16.gmra.mrb[0].mxu0 %v2174
      %v5068 = vpop.f32.mrb[0].mxu0
      %v5069 = vadd.f32 %v4876, %v5068
      %v5070 = vpop.f32.mrb[0].mxu0
      %v5071 = vadd.f32 %v4878, %v5070
      %v5072 = vpop.f32.mrb[0].mxu0
      %v5073 = vadd.f32 %v4880, %v5072
      %v5074 = vpop.f32.mrb[0].mxu0
      %v5075 = vadd.f32 %v4882, %v5074
      %5076 = vmatprep.mubr.bf16.mxu0 %v2183
      %5077 = vmatmul.mubr.bf16.gmra.mrb[0].mxu0 %v2182
      %v5078 = vpop.f32.mrb[0].mxu0
      %v5079 = vadd.f32 %v4886, %v5078
      %v5080 = vpop.f32.mrb[0].mxu0
      %v5081 = vadd.f32 %v4888, %v5080
      %v5082 = vpop.f32.mrb[0].mxu0
      %v5083 = vadd.f32 %v4890, %v5082
      %v5084 = vpop.f32.mrb[0].mxu0
      %v5085 = vadd.f32 %v4892, %v5084
      %5086 = vmatprep.mubr.bf16.mxu0 %v2191
      %5087 = vmatmul.mubr.bf16.gmra.mrb[0].mxu0 %v2190
      %v5088 = vpop.f32.mrb[0].mxu0
      %v5089 = vadd.f32 %v4896, %v5088
      %v5090 = vpop.f32.mrb[0].mxu0
      %v5091 = vadd.f32 %v4898, %v5090
      %v5092 = vpop.f32.mrb[0].mxu0
      %v5093 = vadd.f32 %v4900, %v5092
      %v5094 = vpop.f32.mrb[0].mxu0
      %v5095 = vadd.f32 %v4902, %v5094
      %5096 = vmatprep.mubr.bf16.mxu0 %v2199
      %5097 = vmatmul.mubr.bf16.gmra.mrb[0].mxu0 %v2198
      %v5098 = vpop.f32.mrb[0].mxu0
      %v5099 = vadd.f32 %v4906, %v5098
      %v5100 = vpop.f32.mrb[0].mxu0
      %v5101 = vadd.f32 %v4908, %v5100
      %v5102 = vpop.f32.mrb[0].mxu0
      %v5103 = vadd.f32 %v4910, %v5102
      %v5104 = vpop.f32.mrb[0].mxu0
      %v5105 = vadd.f32 %v4912, %v5104
      %5106 = vmatprep.mubr.bf16.mxu0 %v2207
      %5107 = vmatmul.mubr.bf16.gmra.mrb[0].mxu0 %v2206
      %v5108 = vpop.f32.mrb[0].mxu0
      %v5109 = vadd.f32 %v4916, %v5108
      %v5110 = vpop.f32.mrb[0].mxu0
      %v5111 = vadd.f32 %v4918, %v5110
      %v5112 = vpop.f32.mrb[0].mxu0
      %v5113 = vadd.f32 %v4920, %v5112
      %v5114 = vpop.f32.mrb[0].mxu0
      %v5115 = vadd.f32 %v4922, %v5114
      %5116 = vmatprep.mubr.bf16.mxu0 %v2215
      %5117 = vmatmul.mubr.bf16.gmra.mrb[0].mxu0 %v2214
      %v5118 = vpop.f32.mrb[0].mxu0
      %v5119 = vadd.f32 %v4926, %v5118
      %v5120 = vpop.f32.mrb[0].mxu0
      %v5121 = vadd.f32 %v4928, %v5120
      %v5122 = vpop.f32.mrb[0].mxu0
      %v5123 = vadd.f32 %v4930, %v5122
      %v5124 = vpop.f32.mrb[0].mxu0
      %v5125 = vadd.f32 %v4932, %v5124
      %5126 = vdwg.mxu0
      %5127 = vmatprep.subr.bf16.mxu0 %v3459
      %5128 = vmatpush1.bf16.msra.mxu0 %v3458
      %5129 = vmatprep.subr.bf16.mxu0 %v3463
      %5130 = vmatpush1.bf16.msra.mxu0 %v3462
      %5131 = vmatprep.subr.bf16.mxu0 %v3467
      %5132 = vmatpush1.bf16.msra.mxu0 %v3466
      %5133 = vmatprep.subr.bf16.mxu0 %v3471
      %5134 = vmatpush1.bf16.msra.mxu0 %v3470
      %5135 = vmatprep.subr.bf16.mxu0 %v3475
      %5136 = vmatpush1.bf16.msra.mxu0 %v3474
      %5137 = vmatprep.subr.bf16.mxu0 %v3479
      %5138 = vmatpush1.bf16.msra.mxu0 %v3478
      %5139 = vmatprep.subr.bf16.mxu0 %v3483
      %5140 = vmatpush1.bf16.msra.mxu0 %v3482
      %5141 = vmatprep.subr.bf16.mxu0 %v3487
      %5142 = vmatpush1.bf16.msra.mxu0 %v3486
      %5143 = vmatprep.subr.bf16.mxu0 %v3491
      %5144 = vmatpush1.bf16.msra.mxu0 %v3490
      %5145 = vmatprep.subr.bf16.mxu0 %v3495
      %5146 = vmatpush1.bf16.msra.mxu0 %v3494
      %5147 = vmatprep.subr.bf16.mxu0 %v3499
      %5148 = vmatpush1.bf16.msra.mxu0 %v3498
      %5149 = vmatprep.subr.bf16.mxu0 %v3503
      %5150 = vmatpush1.bf16.msra.mxu0 %v3502
      %5151 = vmatprep.subr.bf16.mxu0 %v3507
      %5152 = vmatpush1.bf16.msra.mxu0 %v3506
      %5153 = vmatprep.subr.bf16.mxu0 %v3511
      %5154 = vmatpush1.bf16.msra.mxu0 %v3510
      %5155 = vmatprep.subr.bf16.mxu0 %v3515
      %5156 = vmatpush1.bf16.msra.mxu0 %v3514
      %5157 = vmatprep.subr.bf16.mxu0 %v3519
      %5158 = vmatpush1.bf16.msra.mxu0 %v3518
      %5159 = vmatprep.mubr.bf16.mxu0 %v2097
      %5160 = vmatmul.mubr.bf16.gmra.mrb[0].mxu0 %v2096
      %v5161 = vpop.f32.mrb[0].mxu0
      %v5162 = vadd.f32 %v4969, %v5161
      %v5163 = vpop.f32.mrb[0].mxu0
      %v5164 = vadd.f32 %v4971, %v5163
      %v5165 = vpop.f32.mrb[0].mxu0
      %v5166 = vadd.f32 %v4973, %v5165
      %v5167 = vpop.f32.mrb[0].mxu0
      %v5168 = vadd.f32 %v4975, %v5167
      %5169 = vmatprep.mubr.bf16.mxu0 %v2105
      %5170 = vmatmul.mubr.bf16.gmra.mrb[0].mxu0 %v2104
      %v5171 = vpop.f32.mrb[0].mxu0
      %v5172 = vadd.f32 %v4979, %v5171
      %v5173 = vpop.f32.mrb[0].mxu0
      %v5174 = vadd.f32 %v4981, %v5173
      %v5175 = vpop.f32.mrb[0].mxu0
      %v5176 = vadd.f32 %v4983, %v5175
      %v5177 = vpop.f32.mrb[0].mxu0
      %v5178 = vadd.f32 %v4985, %v5177
      %5179 = vmatprep.mubr.bf16.mxu0 %v2113
      %5180 = vmatmul.mubr.bf16.gmra.mrb[0].mxu0 %v2112
      %v5181 = vpop.f32.mrb[0].mxu0
      %v5182 = vadd.f32 %v4989, %v5181
      %v5183 = vpop.f32.mrb[0].mxu0
      %v5184 = vadd.f32 %v4991, %v5183
      %v5185 = vpop.f32.mrb[0].mxu0
      %v5186 = vadd.f32 %v4993, %v5185
      %v5187 = vpop.f32.mrb[0].mxu0
      %v5188 = vadd.f32 %v4995, %v5187
      %5189 = vmatprep.mubr.bf16.mxu0 %v2121
      %5190 = vmatmul.mubr.bf16.gmra.mrb[0].mxu0 %v2120
      %v5191 = vpop.f32.mrb[0].mxu0
      %v5192 = vadd.f32 %v4999, %v5191
      %v5193 = vpop.f32.mrb[0].mxu0
      %v5194 = vadd.f32 %v5001, %v5193
      %v5195 = vpop.f32.mrb[0].mxu0
      %v5196 = vadd.f32 %v5003, %v5195
      %v5197 = vpop.f32.mrb[0].mxu0
      %v5198 = vadd.f32 %v5005, %v5197
      %5199 = vmatprep.mubr.bf16.mxu0 %v2129
      %5200 = vmatmul.mubr.bf16.gmra.mrb[0].mxu0 %v2128
      %v5201 = vpop.f32.mrb[0].mxu0
      %v5202 = vadd.f32 %v5009, %v5201
      %v5203 = vpop.f32.mrb[0].mxu0
      %v5204 = vadd.f32 %v5011, %v5203
      %v5205 = vpop.f32.mrb[0].mxu0
      %v5206 = vadd.f32 %v5013, %v5205
      %v5207 = vpop.f32.mrb[0].mxu0
      %v5208 = vadd.f32 %v5015, %v5207
      %5209 = vmatprep.mubr.bf16.mxu0 %v2137
      %5210 = vmatmul.mubr.bf16.gmra.mrb[0].mxu0 %v2136
      %v5211 = vpop.f32.mrb[0].mxu0
      %v5212 = vadd.f32 %v5019, %v5211
      %v5213 = vpop.f32.mrb[0].mxu0
      %v5214 = vadd.f32 %v5021, %v5213
      %v5215 = vpop.f32.mrb[0].mxu0
      %v5216 = vadd.f32 %v5023, %v5215
      %v5217 = vpop.f32.mrb[0].mxu0
      %v5218 = vadd.f32 %v5025, %v5217
      %5219 = vmatprep.mubr.bf16.mxu0 %v2145
      %5220 = vmatmul.mubr.bf16.gmra.mrb[0].mxu0 %v2144
      %v5221 = vpop.f32.mrb[0].mxu0
      %v5222 = vadd.f32 %v5029, %v5221
      %v5223 = vpop.f32.mrb[0].mxu0
      %v5224 = vadd.f32 %v5031, %v5223
      %v5225 = vpop.f32.mrb[0].mxu0
      %v5226 = vadd.f32 %v5033, %v5225
      %v5227 = vpop.f32.mrb[0].mxu0
      %v5228 = vadd.f32 %v5035, %v5227
      %5229 = vmatprep.mubr.bf16.mxu0 %v2153
      %5230 = vmatmul.mubr.bf16.gmra.mrb[0].mxu0 %v2152
      %v5231 = vpop.f32.mrb[0].mxu0
      %v5232 = vadd.f32 %v5039, %v5231
      %v5233 = vpop.f32.mrb[0].mxu0
      %v5234 = vadd.f32 %v5041, %v5233
      %v5235 = vpop.f32.mrb[0].mxu0
      %v5236 = vadd.f32 %v5043, %v5235
      %v5237 = vpop.f32.mrb[0].mxu0
      %v5238 = vadd.f32 %v5045, %v5237
      %5239 = vmatprep.mubr.bf16.mxu0 %v2161
      %5240 = vmatmul.mubr.bf16.gmra.mrb[0].mxu0 %v2160
      %v5241 = vpop.f32.mrb[0].mxu0
      %v5242 = vadd.f32 %v5049, %v5241
      %v5243 = vpop.f32.mrb[0].mxu0
      %v5244 = vadd.f32 %v5051, %v5243
      %v5245 = vpop.f32.mrb[0].mxu0
      %v5246 = vadd.f32 %v5053, %v5245
      %v5247 = vpop.f32.mrb[0].mxu0
      %v5248 = vadd.f32 %v5055, %v5247
      %5249 = vmatprep.mubr.bf16.mxu0 %v2169
      %5250 = vmatmul.mubr.bf16.gmra.mrb[0].mxu0 %v2168
      %v5251 = vpop.f32.mrb[0].mxu0
      %v5252 = vadd.f32 %v5059, %v5251
      %v5253 = vpop.f32.mrb[0].mxu0
      %v5254 = vadd.f32 %v5061, %v5253
      %v5255 = vpop.f32.mrb[0].mxu0
      %v5256 = vadd.f32 %v5063, %v5255
      %v5257 = vpop.f32.mrb[0].mxu0
      %v5258 = vadd.f32 %v5065, %v5257
      %5259 = vmatprep.mubr.bf16.mxu0 %v2177
      %5260 = vmatmul.mubr.bf16.gmra.mrb[0].mxu0 %v2176
      %v5261 = vpop.f32.mrb[0].mxu0
      %v5262 = vadd.f32 %v5069, %v5261
      %v5263 = vpop.f32.mrb[0].mxu0
      %v5264 = vadd.f32 %v5071, %v5263
      %v5265 = vpop.f32.mrb[0].mxu0
      %v5266 = vadd.f32 %v5073, %v5265
      %v5267 = vpop.f32.mrb[0].mxu0
      %v5268 = vadd.f32 %v5075, %v5267
      %5269 = vmatprep.mubr.bf16.mxu0 %v2185
      %5270 = vmatmul.mubr.bf16.gmra.mrb[0].mxu0 %v2184
      %v5271 = vpop.f32.mrb[0].mxu0
      %v5272 = vadd.f32 %v5079, %v5271
      %v5273 = vpop.f32.mrb[0].mxu0
      %v5274 = vadd.f32 %v5081, %v5273
      %v5275 = vpop.f32.mrb[0].mxu0
      %v5276 = vadd.f32 %v5083, %v5275
      %v5277 = vpop.f32.mrb[0].mxu0
      %v5278 = vadd.f32 %v5085, %v5277
      %5279 = vmatprep.mubr.bf16.mxu0 %v2193
      %5280 = vmatmul.mubr.bf16.gmra.mrb[0].mxu0 %v2192
      %v5281 = vpop.f32.mrb[0].mxu0
      %v5282 = vadd.f32 %v5089, %v5281
      %v5283 = vpop.f32.mrb[0].mxu0
      %v5284 = vadd.f32 %v5091, %v5283
      %v5285 = vpop.f32.mrb[0].mxu0
      %v5286 = vadd.f32 %v5093, %v5285
      %v5287 = vpop.f32.mrb[0].mxu0
      %v5288 = vadd.f32 %v5095, %v5287
      %5289 = vmatprep.mubr.bf16.mxu0 %v2201
      %5290 = vmatmul.mubr.bf16.gmra.mrb[0].mxu0 %v2200
      %v5291 = vpop.f32.mrb[0].mxu0
      %v5292 = vadd.f32 %v5099, %v5291
      %v5293 = vpop.f32.mrb[0].mxu0
      %v5294 = vadd.f32 %v5101, %v5293
      %v5295 = vpop.f32.mrb[0].mxu0
      %v5296 = vadd.f32 %v5103, %v5295
      %v5297 = vpop.f32.mrb[0].mxu0
      %v5298 = vadd.f32 %v5105, %v5297
      %5299 = vmatprep.mubr.bf16.mxu0 %v2209
      %5300 = vmatmul.mubr.bf16.gmra.mrb[0].mxu0 %v2208
      %v5301 = vpop.f32.mrb[0].mxu0
      %v5302 = vadd.f32 %v5109, %v5301
      %v5303 = vpop.f32.mrb[0].mxu0
      %v5304 = vadd.f32 %v5111, %v5303
      %v5305 = vpop.f32.mrb[0].mxu0
      %v5306 = vadd.f32 %v5113, %v5305
      %v5307 = vpop.f32.mrb[0].mxu0
      %v5308 = vadd.f32 %v5115, %v5307
      %5309 = vmatprep.mubr.bf16.mxu0 %v2217
      %5310 = vmatmul.mubr.bf16.gmra.mrb[0].mxu0 %v2216
      %v5311 = vpop.f32.mrb[0].mxu0
      %v5312 = vadd.f32 %v5119, %v5311
      %v5313 = vpop.f32.mrb[0].mxu0
      %v5314 = vadd.f32 %v5121, %v5313
      %v5315 = vpop.f32.mrb[0].mxu0
      %v5316 = vadd.f32 %v5123, %v5315
      %v5317 = vpop.f32.mrb[0].mxu0
      %v5318 = vadd.f32 %v5125, %v5317
      %5319 = vdwg.mxu0
      %v5320 = vmax.f32 %v4390, 0.0
      %v5321 = vmax.f32 %v4392, 0.0
      %v5322 = vmax.f32 %v5162, 0.0
      %v5323 = vmax.f32 %v5164, 0.0
      %v5324 = vmax.f32 %v4394, 0.0
      %v5325 = vmax.f32 %v4396, 0.0
      %v5326 = vmax.f32 %v5166, 0.0
      %v5327 = vmax.f32 %v5168, 0.0
      %v5328 = vmax.f32 %v4400, 0.0
      %v5329 = vmax.f32 %v4402, 0.0
      %v5330 = vmax.f32 %v5172, 0.0
      %v5331 = vmax.f32 %v5174, 0.0
      %v5332 = vmax.f32 %v4404, 0.0
      %v5333 = vmax.f32 %v4406, 0.0
      %v5334 = vmax.f32 %v5176, 0.0
      %v5335 = vmax.f32 %v5178, 0.0
      %v5336 = vmax.f32 %v4410, 0.0
      %v5337 = vmax.f32 %v4412, 0.0
      %v5338 = vmax.f32 %v5182, 0.0
      %v5339 = vmax.f32 %v5184, 0.0
      %v5340 = vmax.f32 %v4414, 0.0
      %v5341 = vmax.f32 %v4416, 0.0
      %v5342 = vmax.f32 %v5186, 0.0
      %v5343 = vmax.f32 %v5188, 0.0
      %v5344 = vmax.f32 %v4420, 0.0
      %v5345 = vmax.f32 %v4422, 0.0
      %v5346 = vmax.f32 %v5192, 0.0
      %v5347 = vmax.f32 %v5194, 0.0
      %v5348 = vmax.f32 %v4424, 0.0
      %v5349 = vmax.f32 %v4426, 0.0
      %v5350 = vmax.f32 %v5196, 0.0
      %v5351 = vmax.f32 %v5198, 0.0
      %v5352 = vmax.f32 %v4430, 0.0
      %v5353 = vmax.f32 %v4432, 0.0
      %v5354 = vmax.f32 %v5202, 0.0
      %v5355 = vmax.f32 %v5204, 0.0
      %v5356 = vmax.f32 %v4434, 0.0
      %v5357 = vmax.f32 %v4436, 0.0
      %v5358 = vmax.f32 %v5206, 0.0
      %v5359 = vmax.f32 %v5208, 0.0
      %v5360 = vmax.f32 %v4440, 0.0
      %v5361 = vmax.f32 %v4442, 0.0
      %v5362 = vmax.f32 %v5212, 0.0
      %v5363 = vmax.f32 %v5214, 0.0
      %v5364 = vmax.f32 %v4444, 0.0
      %v5365 = vmax.f32 %v4446, 0.0
      %v5366 = vmax.f32 %v5216, 0.0
      %v5367 = vmax.f32 %v5218, 0.0
      %v5368 = vmax.f32 %v4450, 0.0
      %v5369 = vmax.f32 %v4452, 0.0
      %v5370 = vmax.f32 %v5222, 0.0
      %v5371 = vmax.f32 %v5224, 0.0
      %v5372 = vmax.f32 %v4454, 0.0
      %v5373 = vmax.f32 %v4456, 0.0
      %v5374 = vmax.f32 %v5226, 0.0
      %v5375 = vmax.f32 %v5228, 0.0
      %v5376 = vmax.f32 %v4460, 0.0
      %v5377 = vmax.f32 %v4462, 0.0
      %v5378 = vmax.f32 %v5232, 0.0
      %v5379 = vmax.f32 %v5234, 0.0
      %v5380 = vmax.f32 %v4464, 0.0
      %v5381 = vmax.f32 %v4466, 0.0
      %v5382 = vmax.f32 %v5236, 0.0
      %v5383 = vmax.f32 %v5238, 0.0
      %v5384 = vmax.f32 %v4470, 0.0
      %v5385 = vmax.f32 %v4472, 0.0
      %v5386 = vmax.f32 %v5242, 0.0
      %v5387 = vmax.f32 %v5244, 0.0
      %v5388 = vmax.f32 %v4474, 0.0
      %v5389 = vmax.f32 %v4476, 0.0
      %v5390 = vmax.f32 %v5246, 0.0
      %v5391 = vmax.f32 %v5248, 0.0
      %v5392 = vmax.f32 %v4480, 0.0
      %v5393 = vmax.f32 %v4482, 0.0
      %v5394 = vmax.f32 %v5252, 0.0
      %v5395 = vmax.f32 %v5254, 0.0
      %v5396 = vmax.f32 %v4484, 0.0
      %v5397 = vmax.f32 %v4486, 0.0
      %v5398 = vmax.f32 %v5256, 0.0
      %v5399 = vmax.f32 %v5258, 0.0
      %v5400 = vmax.f32 %v4490, 0.0
      %v5401 = vmax.f32 %v4492, 0.0
      %v5402 = vmax.f32 %v5262, 0.0
      %v5403 = vmax.f32 %v5264, 0.0
      %v5404 = vmax.f32 %v4494, 0.0
      %v5405 = vmax.f32 %v4496, 0.0
      %v5406 = vmax.f32 %v5266, 0.0
      %v5407 = vmax.f32 %v5268, 0.0
      %v5408 = vmax.f32 %v4500, 0.0
      %v5409 = vmax.f32 %v4502, 0.0
      %v5410 = vmax.f32 %v5272, 0.0
      %v5411 = vmax.f32 %v5274, 0.0
      %v5412 = vmax.f32 %v4504, 0.0
      %v5413 = vmax.f32 %v4506, 0.0
      %v5414 = vmax.f32 %v5276, 0.0
      %v5415 = vmax.f32 %v5278, 0.0
      %v5416 = vmax.f32 %v4510, 0.0
      %v5417 = vmax.f32 %v4512, 0.0
      %v5418 = vmax.f32 %v5282, 0.0
      %v5419 = vmax.f32 %v5284, 0.0
      %v5420 = vmax.f32 %v4514, 0.0
      %v5421 = vmax.f32 %v4516, 0.0
      %v5422 = vmax.f32 %v5286, 0.0
      %v5423 = vmax.f32 %v5288, 0.0
      %v5424 = vmax.f32 %v4520, 0.0
      %v5425 = vmax.f32 %v4522, 0.0
      %v5426 = vmax.f32 %v5292, 0.0
      %v5427 = vmax.f32 %v5294, 0.0
      %v5428 = vmax.f32 %v4524, 0.0
      %v5429 = vmax.f32 %v4526, 0.0
      %v5430 = vmax.f32 %v5296, 0.0
      %v5431 = vmax.f32 %v5298, 0.0
      %v5432 = vmax.f32 %v4530, 0.0
      %v5433 = vmax.f32 %v4532, 0.0
      %v5434 = vmax.f32 %v5302, 0.0
      %v5435 = vmax.f32 %v5304, 0.0
      %v5436 = vmax.f32 %v4534, 0.0
      %v5437 = vmax.f32 %v4536, 0.0
      %v5438 = vmax.f32 %v5306, 0.0
      %v5439 = vmax.f32 %v5308, 0.0
      %v5440 = vmax.f32 %v4540, 0.0
      %v5441 = vmax.f32 %v4542, 0.0
      %v5442 = vmax.f32 %v5312, 0.0
      %v5443 = vmax.f32 %v5314, 0.0
      %v5444 = vmax.f32 %v4544, 0.0
      %v5445 = vmax.f32 %v4546, 0.0
      %v5446 = vmax.f32 %v5316, 0.0
      %v5447 = vmax.f32 %v5318, 0.0
      %v5448 = vpack.c.bf16 %v5324, %v5320
      %v5449 = vpack.c.bf16 %v5325, %v5321
      %v5450 = vpack.c.bf16 %v5326, %v5322
      %v5451 = vpack.c.bf16 %v5327, %v5323
      %v5452 = vpack.c.bf16 %v5332, %v5328
      %v5453 = vpack.c.bf16 %v5333, %v5329
      %v5454 = vpack.c.bf16 %v5334, %v5330
      %v5455 = vpack.c.bf16 %v5335, %v5331
      %v5456 = vpack.c.bf16 %v5340, %v5336
      %v5457 = vpack.c.bf16 %v5341, %v5337
      %v5458 = vpack.c.bf16 %v5342, %v5338
      %v5459 = vpack.c.bf16 %v5343, %v5339
      %v5460 = vpack.c.bf16 %v5348, %v5344
      %v5461 = vpack.c.bf16 %v5349, %v5345
      %v5462 = vpack.c.bf16 %v5350, %v5346
      %v5463 = vpack.c.bf16 %v5351, %v5347
      %v5464 = vpack.c.bf16 %v5356, %v5352
      %v5465 = vpack.c.bf16 %v5357, %v5353
      %v5466 = vpack.c.bf16 %v5358, %v5354
      %v5467 = vpack.c.bf16 %v5359, %v5355
      %v5468 = vpack.c.bf16 %v5364, %v5360
      %v5469 = vpack.c.bf16 %v5365, %v5361
      %v5470 = vpack.c.bf16 %v5366, %v5362
      %v5471 = vpack.c.bf16 %v5367, %v5363
      %v5472 = vpack.c.bf16 %v5372, %v5368
      %v5473 = vpack.c.bf16 %v5373, %v5369
      %v5474 = vpack.c.bf16 %v5374, %v5370
      %v5475 = vpack.c.bf16 %v5375, %v5371
      %v5476 = vpack.c.bf16 %v5380, %v5376
      %v5477 = vpack.c.bf16 %v5381, %v5377
      %v5478 = vpack.c.bf16 %v5382, %v5378
      %v5479 = vpack.c.bf16 %v5383, %v5379
      %v5480 = vpack.c.bf16 %v5388, %v5384
      %v5481 = vpack.c.bf16 %v5389, %v5385
      %v5482 = vpack.c.bf16 %v5390, %v5386
      %v5483 = vpack.c.bf16 %v5391, %v5387
      %v5484 = vpack.c.bf16 %v5396, %v5392
      %v5485 = vpack.c.bf16 %v5397, %v5393
      %v5486 = vpack.c.bf16 %v5398, %v5394
      %v5487 = vpack.c.bf16 %v5399, %v5395
      %v5488 = vpack.c.bf16 %v5404, %v5400
      %v5489 = vpack.c.bf16 %v5405, %v5401
      %v5490 = vpack.c.bf16 %v5406, %v5402
      %v5491 = vpack.c.bf16 %v5407, %v5403
      %v5492 = vpack.c.bf16 %v5412, %v5408
      %v5493 = vpack.c.bf16 %v5413, %v5409
      %v5494 = vpack.c.bf16 %v5414, %v5410
      %v5495 = vpack.c.bf16 %v5415, %v5411
      %v5496 = vpack.c.bf16 %v5420, %v5416
      %v5497 = vpack.c.bf16 %v5421, %v5417
      %v5498 = vpack.c.bf16 %v5422, %v5418
      %v5499 = vpack.c.bf16 %v5423, %v5419
      %v5500 = vpack.c.bf16 %v5428, %v5424
      %v5501 = vpack.c.bf16 %v5429, %v5425
      %v5502 = vpack.c.bf16 %v5430, %v5426
      %v5503 = vpack.c.bf16 %v5431, %v5427
      %v5504 = vpack.c.bf16 %v5436, %v5432
      %v5505 = vpack.c.bf16 %v5437, %v5433
      %v5506 = vpack.c.bf16 %v5438, %v5434
      %v5507 = vpack.c.bf16 %v5439, %v5435
      %v5508 = vpack.c.bf16 %v5444, %v5440
      %v5509 = vpack.c.bf16 %v5445, %v5441
      %v5510 = vpack.c.bf16 %v5446, %v5442
      %v5511 = vpack.c.bf16 %v5447, %v5443
      %v5512 = vld [vmem:[%s6] sm:$0xff]
      %v5513 = vld [vmem:[%s6 + $0x8] sm:$0xff]
      %v5514 = vld [vmem:[%s6 + $0x10] sm:$0xff]
      %v5515 = vld [vmem:[%s6 + $0x18] sm:$0xff]
      %v5516 = vld [vmem:[%s6 + $0x20] sm:$0xff]
      %v5517 = vld [vmem:[%s6 + $0x28] sm:$0xff]
      %v5518 = vld [vmem:[%s6 + $0x30] sm:$0xff]
      %v5519 = vld [vmem:[%s6 + $0x38] sm:$0xff]
      %v5520 = vld [vmem:[%s6 + $0x40] sm:$0xff]
      %v5521 = vld [vmem:[%s6 + $0x48] sm:$0xff]
      %v5522 = vld [vmem:[%s6 + $0x50] sm:$0xff]
      %v5523 = vld [vmem:[%s6 + $0x58] sm:$0xff]
      %v5524 = vld [vmem:[%s6 + $0x60] sm:$0xff]
      %v5525 = vld [vmem:[%s6 + $0x68] sm:$0xff]
      %v5526 = vld [vmem:[%s6 + $0x70] sm:$0xff]
      %v5527 = vld [vmem:[%s6 + $0x78] sm:$0xff]
      %v5528 = vld [vmem:[%s6 + $0x80] sm:$0xff]
      %v5529 = vld [vmem:[%s6 + $0x88] sm:$0xff]
      %v5530 = vld [vmem:[%s6 + $0x90] sm:$0xff]
      %v5531 = vld [vmem:[%s6 + $0x98] sm:$0xff]
      %v5532 = vld [vmem:[%s6 + $0xa0] sm:$0xff]
      %v5533 = vld [vmem:[%s6 + $0xa8] sm:$0xff]
      %v5534 = vld [vmem:[%s6 + $0xb0] sm:$0xff]
      %v5535 = vld [vmem:[%s6 + $0xb8] sm:$0xff]
      %v5536 = vld [vmem:[%s6 + $0xc0] sm:$0xff]
      %v5537 = vld [vmem:[%s6 + $0xc8] sm:$0xff]
      %v5538 = vld [vmem:[%s6 + $0xd0] sm:$0xff]
      %v5539 = vld [vmem:[%s6 + $0xd8] sm:$0xff]
      %v5540 = vld [vmem:[%s6 + $0xe0] sm:$0xff]
      %v5541 = vld [vmem:[%s6 + $0xe8] sm:$0xff]
      %v5542 = vld [vmem:[%s6 + $0xf0] sm:$0xff]
      %v5543 = vld [vmem:[%s6 + $0xf8] sm:$0xff]
      %v5544 = vld [vmem:[%s6 + $0x100] sm:$0xff]
      %v5545 = vld [vmem:[%s6 + $0x108] sm:$0xff]
      %v5546 = vld [vmem:[%s6 + $0x110] sm:$0xff]
      %v5547 = vld [vmem:[%s6 + $0x118] sm:$0xff]
      %v5548 = vld [vmem:[%s6 + $0x120] sm:$0xff]
      %v5549 = vld [vmem:[%s6 + $0x128] sm:$0xff]
      %v5550 = vld [vmem:[%s6 + $0x130] sm:$0xff]
      %v5551 = vld [vmem:[%s6 + $0x138] sm:$0xff]
      %v5552 = vld [vmem:[%s6 + $0x140] sm:$0xff]
      %v5553 = vld [vmem:[%s6 + $0x148] sm:$0xff]
      %v5554 = vld [vmem:[%s6 + $0x150] sm:$0xff]
      %v5555 = vld [vmem:[%s6 + $0x158] sm:$0xff]
      %v5556 = vld [vmem:[%s6 + $0x160] sm:$0xff]
      %v5557 = vld [vmem:[%s6 + $0x168] sm:$0xff]
      %v5558 = vld [vmem:[%s6 + $0x170] sm:$0xff]
      %v5559 = vld [vmem:[%s6 + $0x178] sm:$0xff]
      %v5560 = vld [vmem:[%s6 + $0x180] sm:$0xff]
      %v5561 = vld [vmem:[%s6 + $0x188] sm:$0xff]
      %v5562 = vld [vmem:[%s6 + $0x190] sm:$0xff]
      %v5563 = vld [vmem:[%s6 + $0x198] sm:$0xff]
      %v5564 = vld [vmem:[%s6 + $0x1a0] sm:$0xff]
      %v5565 = vld [vmem:[%s6 + $0x1a8] sm:$0xff]
      %v5566 = vld [vmem:[%s6 + $0x1b0] sm:$0xff]
      %v5567 = vld [vmem:[%s6 + $0x1b8] sm:$0xff]
      %v5568 = vld [vmem:[%s6 + $0x1c0] sm:$0xff]
      %v5569 = vld [vmem:[%s6 + $0x1c8] sm:$0xff]
      %v5570 = vld [vmem:[%s6 + $0x1d0] sm:$0xff]
      %v5571 = vld [vmem:[%s6 + $0x1d8] sm:$0xff]
      %v5572 = vld [vmem:[%s6 + $0x1e0] sm:$0xff]
      %v5573 = vld [vmem:[%s6 + $0x1e8] sm:$0xff]
      %v5574 = vld [vmem:[%s6 + $0x1f0] sm:$0xff]
      %v5575 = vld [vmem:[%s6 + $0x1f8] sm:$0xff]
      %v5576 = vld [vmem:[%s7] sm:$0x3]
      %v5578 = vlaneseq
      %v5579 = vshrl.u32 %v5578, 7
      %v5580 = vsub.s32 0, %v5579
      %v5581 = vrot.slane %v5576, %v5580
      %v5582 = vlaneseq
      %v5583 = vshrl.u32 %v5582, 7
      %v5584 = vsub.s32 1, %v5583
      %v5585 = vrot.slane %v5576, %v5584
      %v5652 = vunpack.c.l.b16 %v5512
      %v5653 = vunpack.c.h.b16 %v5512
      %v5654 = vunpack.c.l.b16 %v5513
      %v5655 = vunpack.c.h.b16 %v5513
      %v5656 = vunpack.c.l.b16 %v5514
      %v5657 = vunpack.c.h.b16 %v5514
      %v5658 = vunpack.c.l.b16 %v5515
      %v5659 = vunpack.c.h.b16 %v5515
      %v5660 = vunpack.c.l.b16 %v5516
      %v5661 = vunpack.c.h.b16 %v5516
      %v5662 = vunpack.c.l.b16 %v5517
      %v5663 = vunpack.c.h.b16 %v5517
      %v5664 = vunpack.c.l.b16 %v5518
      %v5665 = vunpack.c.h.b16 %v5518
      %v5666 = vunpack.c.l.b16 %v5519
      %v5667 = vunpack.c.h.b16 %v5519
      %v5668 = vunpack.c.l.b16 %v5520
      %v5669 = vunpack.c.h.b16 %v5520
      %v5670 = vunpack.c.l.b16 %v5521
      %v5671 = vunpack.c.h.b16 %v5521
      %v5672 = vunpack.c.l.b16 %v5522
      %v5673 = vunpack.c.h.b16 %v5522
      %v5674 = vunpack.c.l.b16 %v5523
      %v5675 = vunpack.c.h.b16 %v5523
      %v5676 = vunpack.c.l.b16 %v5524
      %v5677 = vunpack.c.h.b16 %v5524
      %v5678 = vunpack.c.l.b16 %v5525
      %v5679 = vunpack.c.h.b16 %v5525
      %v5680 = vunpack.c.l.b16 %v5526
      %v5681 = vunpack.c.h.b16 %v5526
      %v5682 = vunpack.c.l.b16 %v5527
      %v5683 = vunpack.c.h.b16 %v5527
      %v5684 = vunpack.c.l.b16 %v5528
      %v5685 = vunpack.c.h.b16 %v5528
      %v5686 = vunpack.c.l.b16 %v5529
      %v5687 = vunpack.c.h.b16 %v5529
      %v5688 = vunpack.c.l.b16 %v5530
      %v5689 = vunpack.c.h.b16 %v5530
      %v5690 = vunpack.c.l.b16 %v5531
      %v5691 = vunpack.c.h.b16 %v5531
      %v5692 = vunpack.c.l.b16 %v5532
      %v5693 = vunpack.c.h.b16 %v5532
      %v5694 = vunpack.c.l.b16 %v5533
      %v5695 = vunpack.c.h.b16 %v5533
      %v5696 = vunpack.c.l.b16 %v5534
      %v5697 = vunpack.c.h.b16 %v5534
      %v5698 = vunpack.c.l.b16 %v5535
      %v5699 = vunpack.c.h.b16 %v5535
      %v5700 = vunpack.c.l.b16 %v5536
      %v5701 = vunpack.c.h.b16 %v5536
      %v5702 = vunpack.c.l.b16 %v5537
      %v5703 = vunpack.c.h.b16 %v5537
      %v5704 = vunpack.c.l.b16 %v5538
      %v5705 = vunpack.c.h.b16 %v5538
      %v5706 = vunpack.c.l.b16 %v5539
      %v5707 = vunpack.c.h.b16 %v5539
      %v5708 = vunpack.c.l.b16 %v5540
      %v5709 = vunpack.c.h.b16 %v5540
      %v5710 = vunpack.c.l.b16 %v5541
      %v5711 = vunpack.c.h.b16 %v5541
      %v5712 = vunpack.c.l.b16 %v5542
      %v5713 = vunpack.c.h.b16 %v5542
      %v5714 = vunpack.c.l.b16 %v5543
      %v5715 = vunpack.c.h.b16 %v5543
      %v5716 = vunpack.c.l.b16 %v5544
      %v5717 = vunpack.c.h.b16 %v5544
      %v5718 = vunpack.c.l.b16 %v5545
      %v5719 = vunpack.c.h.b16 %v5545
      %v5720 = vunpack.c.l.b16 %v5546
      %v5721 = vunpack.c.h.b16 %v5546
      %v5722 = vunpack.c.l.b16 %v5547
      %v5723 = vunpack.c.h.b16 %v5547
      %v5724 = vunpack.c.l.b16 %v5548
      %v5725 = vunpack.c.h.b16 %v5548
      %v5726 = vunpack.c.l.b16 %v5549
      %v5727 = vunpack.c.h.b16 %v5549
      %v5728 = vunpack.c.l.b16 %v5550
      %v5729 = vunpack.c.h.b16 %v5550
      %v5730 = vunpack.c.l.b16 %v5551
      %v5731 = vunpack.c.h.b16 %v5551
      %v5732 = vunpack.c.l.b16 %v5552
      %v5733 = vunpack.c.h.b16 %v5552
      %v5734 = vunpack.c.l.b16 %v5553
      %v5735 = vunpack.c.h.b16 %v5553
      %v5736 = vunpack.c.l.b16 %v5554
      %v5737 = vunpack.c.h.b16 %v5554
      %v5738 = vunpack.c.l.b16 %v5555
      %v5739 = vunpack.c.h.b16 %v5555
      %v5740 = vunpack.c.l.b16 %v5556
      %v5741 = vunpack.c.h.b16 %v5556
      %v5742 = vunpack.c.l.b16 %v5557
      %v5743 = vunpack.c.h.b16 %v5557
      %v5744 = vunpack.c.l.b16 %v5558
      %v5745 = vunpack.c.h.b16 %v5558
      %v5746 = vunpack.c.l.b16 %v5559
      %v5747 = vunpack.c.h.b16 %v5559
      %v5748 = vunpack.c.l.b16 %v5560
      %v5749 = vunpack.c.h.b16 %v5560
      %v5750 = vunpack.c.l.b16 %v5561
      %v5751 = vunpack.c.h.b16 %v5561
      %v5752 = vunpack.c.l.b16 %v5562
      %v5753 = vunpack.c.h.b16 %v5562
      %v5754 = vunpack.c.l.b16 %v5563
      %v5755 = vunpack.c.h.b16 %v5563
      %v5756 = vunpack.c.l.b16 %v5564
      %v5757 = vunpack.c.h.b16 %v5564
      %v5758 = vunpack.c.l.b16 %v5565
      %v5759 = vunpack.c.h.b16 %v5565
      %v5760 = vunpack.c.l.b16 %v5566
      %v5761 = vunpack.c.h.b16 %v5566
      %v5762 = vunpack.c.l.b16 %v5567
      %v5763 = vunpack.c.h.b16 %v5567
      %v5764 = vunpack.c.l.b16 %v5568
      %v5765 = vunpack.c.h.b16 %v5568
      %v5766 = vunpack.c.l.b16 %v5569
      %v5767 = vunpack.c.h.b16 %v5569
      %v5768 = vunpack.c.l.b16 %v5570
      %v5769 = vunpack.c.h.b16 %v5570
      %v5770 = vunpack.c.l.b16 %v5571
      %v5771 = vunpack.c.h.b16 %v5571
      %v5772 = vunpack.c.l.b16 %v5572
      %v5773 = vunpack.c.h.b16 %v5572
      %v5774 = vunpack.c.l.b16 %v5573
      %v5775 = vunpack.c.h.b16 %v5573
      %v5776 = vunpack.c.l.b16 %v5574
      %v5777 = vunpack.c.h.b16 %v5574
      %v5778 = vunpack.c.l.b16 %v5575
      %v5779 = vunpack.c.h.b16 %v5575
      %v5780 = vpack.c.b16 %v5654, %v5652
      %v5781 = vpack.c.b16 %v5655, %v5653
      %v5782 = vpack.c.b16 %v5658, %v5656
      %v5783 = vpack.c.b16 %v5659, %v5657
      %v5784 = vpack.c.b16 %v5662, %v5660
      %v5785 = vpack.c.b16 %v5663, %v5661
      %v5786 = vpack.c.b16 %v5666, %v5664
      %v5787 = vpack.c.b16 %v5667, %v5665
      %v5788 = vpack.c.b16 %v5670, %v5668
      %v5789 = vpack.c.b16 %v5671, %v5669
      %v5790 = vpack.c.b16 %v5674, %v5672
      %v5791 = vpack.c.b16 %v5675, %v5673
      %v5792 = vpack.c.b16 %v5678, %v5676
      %v5793 = vpack.c.b16 %v5679, %v5677
      %v5794 = vpack.c.b16 %v5682, %v5680
      %v5795 = vpack.c.b16 %v5683, %v5681
      %v5796 = vpack.c.b16 %v5686, %v5684
      %v5797 = vpack.c.b16 %v5687, %v5685
      %v5798 = vpack.c.b16 %v5690, %v5688
      %v5799 = vpack.c.b16 %v5691, %v5689
      %v5800 = vpack.c.b16 %v5694, %v5692
      %v5801 = vpack.c.b16 %v5695, %v5693
      %v5802 = vpack.c.b16 %v5698, %v5696
      %v5803 = vpack.c.b16 %v5699, %v5697
      %v5804 = vpack.c.b16 %v5702, %v5700
      %v5805 = vpack.c.b16 %v5703, %v5701
      %v5806 = vpack.c.b16 %v5706, %v5704
      %v5807 = vpack.c.b16 %v5707, %v5705
      %v5808 = vpack.c.b16 %v5710, %v5708
      %v5809 = vpack.c.b16 %v5711, %v5709
      %v5810 = vpack.c.b16 %v5714, %v5712
      %v5811 = vpack.c.b16 %v5715, %v5713
      %v5812 = vpack.c.b16 %v5718, %v5716
      %v5813 = vpack.c.b16 %v5719, %v5717
      %v5814 = vpack.c.b16 %v5722, %v5720
      %v5815 = vpack.c.b16 %v5723, %v5721
      %v5816 = vpack.c.b16 %v5726, %v5724
      %v5817 = vpack.c.b16 %v5727, %v5725
      %v5818 = vpack.c.b16 %v5730, %v5728
      %v5819 = vpack.c.b16 %v5731, %v5729
      %v5820 = vpack.c.b16 %v5734, %v5732
      %v5821 = vpack.c.b16 %v5735, %v5733
      %v5822 = vpack.c.b16 %v5738, %v5736
      %v5823 = vpack.c.b16 %v5739, %v5737
      %v5824 = vpack.c.b16 %v5742, %v5740
      %v5825 = vpack.c.b16 %v5743, %v5741
      %v5826 = vpack.c.b16 %v5746, %v5744
      %v5827 = vpack.c.b16 %v5747, %v5745
      %v5828 = vpack.c.b16 %v5750, %v5748
      %v5829 = vpack.c.b16 %v5751, %v5749
      %v5830 = vpack.c.b16 %v5754, %v5752
      %v5831 = vpack.c.b16 %v5755, %v5753
      %v5832 = vpack.c.b16 %v5758, %v5756
      %v5833 = vpack.c.b16 %v5759, %v5757
      %v5834 = vpack.c.b16 %v5762, %v5760
      %v5835 = vpack.c.b16 %v5763, %v5761
      %v5836 = vpack.c.b16 %v5766, %v5764
      %v5837 = vpack.c.b16 %v5767, %v5765
      %v5838 = vpack.c.b16 %v5770, %v5768
      %v5839 = vpack.c.b16 %v5771, %v5769
      %v5840 = vpack.c.b16 %v5774, %v5772
      %v5841 = vpack.c.b16 %v5775, %v5773
      %v5842 = vpack.c.b16 %v5778, %v5776
      %v5843 = vpack.c.b16 %v5779, %v5777
      %5908 = vmatprep.subr.bf16.mxu0 %v5781
      %5909 = vmatpush1.bf16.msra.mxu0 %v5780
      %5910 = vmatprep.subr.bf16.mxu0 %v5783
      %5911 = vmatpush1.bf16.msra.mxu0 %v5782
      %5912 = vmatprep.subr.bf16.mxu0 %v5785
      %5913 = vmatpush1.bf16.msra.mxu0 %v5784
      %5914 = vmatprep.subr.bf16.mxu0 %v5787
      %5915 = vmatpush1.bf16.msra.mxu0 %v5786
      %5916 = vmatprep.subr.bf16.mxu0 %v5789
      %5917 = vmatpush1.bf16.msra.mxu0 %v5788
      %5918 = vmatprep.subr.bf16.mxu0 %v5791
      %5919 = vmatpush1.bf16.msra.mxu0 %v5790
      %5920 = vmatprep.subr.bf16.mxu0 %v5793
      %5921 = vmatpush1.bf16.msra.mxu0 %v5792
      %5922 = vmatprep.subr.bf16.mxu0 %v5795
      %5923 = vmatpush1.bf16.msra.mxu0 %v5794
      %5924 = vmatprep.subr.bf16.mxu0 %v5797
      %5925 = vmatpush1.bf16.msra.mxu0 %v5796
      %5926 = vmatprep.subr.bf16.mxu0 %v5799
      %5927 = vmatpush1.bf16.msra.mxu0 %v5798
      %5928 = vmatprep.subr.bf16.mxu0 %v5801
      %5929 = vmatpush1.bf16.msra.mxu0 %v5800
      %5930 = vmatprep.subr.bf16.mxu0 %v5803
      %5931 = vmatpush1.bf16.msra.mxu0 %v5802
      %5932 = vmatprep.subr.bf16.mxu0 %v5805
      %5933 = vmatpush1.bf16.msra.mxu0 %v5804
      %5934 = vmatprep.subr.bf16.mxu0 %v5807
      %5935 = vmatpush1.bf16.msra.mxu0 %v5806
      %5936 = vmatprep.subr.bf16.mxu0 %v5809
      %5937 = vmatpush1.bf16.msra.mxu0 %v5808
      %5938 = vmatprep.subr.bf16.mxu0 %v5811
      %5939 = vmatpush1.bf16.msra.mxu0 %v5810
      %5940 = vmatprep.mubr.bf16.mxu0 %v5449
      %5941 = vmatmul.mubr.bf16.gmra.mrb[0].mxu0 %v5448
      %v5942 = vpop.f32.mrb[0].mxu0
      %v5943 = vadd.f32 %v5581, %v5942
      %v5944 = vpop.f32.mrb[0].mxu0
      %v5945 = vadd.f32 %v5585, %v5944
      %v5946 = vpop.f32.mrb[0].mxu0
      %v5947 = vadd.f32 %v5581, %v5946
      %v5948 = vpop.f32.mrb[0].mxu0
      %v5949 = vadd.f32 %v5585, %v5948
      %5950 = vmatprep.mubr.bf16.mxu0 %v5453
      %5951 = vmatmul.mubr.bf16.gmra.mrb[0].mxu0 %v5452
      %v5952 = vpop.f32.mrb[0].mxu0
      %v5953 = vadd.f32 %v5581, %v5952
      %v5954 = vpop.f32.mrb[0].mxu0
      %v5955 = vadd.f32 %v5585, %v5954
      %v5956 = vpop.f32.mrb[0].mxu0
      %v5957 = vadd.f32 %v5581, %v5956
      %v5958 = vpop.f32.mrb[0].mxu0
      %v5959 = vadd.f32 %v5585, %v5958
      %5960 = vmatprep.mubr.bf16.mxu0 %v5457
      %5961 = vmatmul.mubr.bf16.gmra.mrb[0].mxu0 %v5456
      %v5962 = vpop.f32.mrb[0].mxu0
      %v5963 = vadd.f32 %v5581, %v5962
      %v5964 = vpop.f32.mrb[0].mxu0
      %v5965 = vadd.f32 %v5585, %v5964
      %v5966 = vpop.f32.mrb[0].mxu0
      %v5967 = vadd.f32 %v5581, %v5966
      %v5968 = vpop.f32.mrb[0].mxu0
      %v5969 = vadd.f32 %v5585, %v5968
      %5970 = vmatprep.mubr.bf16.mxu0 %v5461
      %5971 = vmatmul.mubr.bf16.gmra.mrb[0].mxu0 %v5460
      %v5972 = vpop.f32.mrb[0].mxu0
      %v5973 = vadd.f32 %v5581, %v5972
      %v5974 = vpop.f32.mrb[0].mxu0
      %v5975 = vadd.f32 %v5585, %v5974
      %v5976 = vpop.f32.mrb[0].mxu0
      %v5977 = vadd.f32 %v5581, %v5976
      %v5978 = vpop.f32.mrb[0].mxu0
      %v5979 = vadd.f32 %v5585, %v5978
      %5980 = vmatprep.mubr.bf16.mxu0 %v5465
      %5981 = vmatmul.mubr.bf16.gmra.mrb[0].mxu0 %v5464
      %v5982 = vpop.f32.mrb[0].mxu0
      %v5983 = vadd.f32 %v5581, %v5982
      %v5984 = vpop.f32.mrb[0].mxu0
      %v5985 = vadd.f32 %v5585, %v5984
      %v5986 = vpop.f32.mrb[0].mxu0
      %v5987 = vadd.f32 %v5581, %v5986
      %v5988 = vpop.f32.mrb[0].mxu0
      %v5989 = vadd.f32 %v5585, %v5988
      %5990 = vmatprep.mubr.bf16.mxu0 %v5469
      %5991 = vmatmul.mubr.bf16.gmra.mrb[0].mxu0 %v5468
      %v5992 = vpop.f32.mrb[0].mxu0
      %v5993 = vadd.f32 %v5581, %v5992
      %v5994 = vpop.f32.mrb[0].mxu0
      %v5995 = vadd.f32 %v5585, %v5994
      %v5996 = vpop.f32.mrb[0].mxu0
      %v5997 = vadd.f32 %v5581, %v5996
      %v5998 = vpop.f32.mrb[0].mxu0
      %v5999 = vadd.f32 %v5585, %v5998
      %6000 = vmatprep.mubr.bf16.mxu0 %v5473
      %6001 = vmatmul.mubr.bf16.gmra.mrb[0].mxu0 %v5472
      %v6002 = vpop.f32.mrb[0].mxu0
      %v6003 = vadd.f32 %v5581, %v6002
      %v6004 = vpop.f32.mrb[0].mxu0
      %v6005 = vadd.f32 %v5585, %v6004
      %v6006 = vpop.f32.mrb[0].mxu0
      %v6007 = vadd.f32 %v5581, %v6006
      %v6008 = vpop.f32.mrb[0].mxu0
      %v6009 = vadd.f32 %v5585, %v6008
      %6010 = vmatprep.mubr.bf16.mxu0 %v5477
      %6011 = vmatmul.mubr.bf16.gmra.mrb[0].mxu0 %v5476
      %v6012 = vpop.f32.mrb[0].mxu0
      %v6013 = vadd.f32 %v5581, %v6012
      %v6014 = vpop.f32.mrb[0].mxu0
      %v6015 = vadd.f32 %v5585, %v6014
      %v6016 = vpop.f32.mrb[0].mxu0
      %v6017 = vadd.f32 %v5581, %v6016
      %v6018 = vpop.f32.mrb[0].mxu0
      %v6019 = vadd.f32 %v5585, %v6018
      %6020 = vmatprep.mubr.bf16.mxu0 %v5481
      %6021 = vmatmul.mubr.bf16.gmra.mrb[0].mxu0 %v5480
      %v6022 = vpop.f32.mrb[0].mxu0
      %v6023 = vadd.f32 %v5581, %v6022
      %v6024 = vpop.f32.mrb[0].mxu0
      %v6025 = vadd.f32 %v5585, %v6024
      %v6026 = vpop.f32.mrb[0].mxu0
      %v6027 = vadd.f32 %v5581, %v6026
      %v6028 = vpop.f32.mrb[0].mxu0
      %v6029 = vadd.f32 %v5585, %v6028
      %6030 = vmatprep.mubr.bf16.mxu0 %v5485
      %6031 = vmatmul.mubr.bf16.gmra.mrb[0].mxu0 %v5484
      %v6032 = vpop.f32.mrb[0].mxu0
      %v6033 = vadd.f32 %v5581, %v6032
      %v6034 = vpop.f32.mrb[0].mxu0
      %v6035 = vadd.f32 %v5585, %v6034
      %v6036 = vpop.f32.mrb[0].mxu0
      %v6037 = vadd.f32 %v5581, %v6036
      %v6038 = vpop.f32.mrb[0].mxu0
      %v6039 = vadd.f32 %v5585, %v6038
      %6040 = vmatprep.mubr.bf16.mxu0 %v5489
      %6041 = vmatmul.mubr.bf16.gmra.mrb[0].mxu0 %v5488
      %v6042 = vpop.f32.mrb[0].mxu0
      %v6043 = vadd.f32 %v5581, %v6042
      %v6044 = vpop.f32.mrb[0].mxu0
      %v6045 = vadd.f32 %v5585, %v6044
      %v6046 = vpop.f32.mrb[0].mxu0
      %v6047 = vadd.f32 %v5581, %v6046
      %v6048 = vpop.f32.mrb[0].mxu0
      %v6049 = vadd.f32 %v5585, %v6048
      %6050 = vmatprep.mubr.bf16.mxu0 %v5493
      %6051 = vmatmul.mubr.bf16.gmra.mrb[0].mxu0 %v5492
      %v6052 = vpop.f32.mrb[0].mxu0
      %v6053 = vadd.f32 %v5581, %v6052
      %v6054 = vpop.f32.mrb[0].mxu0
      %v6055 = vadd.f32 %v5585, %v6054
      %v6056 = vpop.f32.mrb[0].mxu0
      %v6057 = vadd.f32 %v5581, %v6056
      %v6058 = vpop.f32.mrb[0].mxu0
      %v6059 = vadd.f32 %v5585, %v6058
      %6060 = vmatprep.mubr.bf16.mxu0 %v5497
      %6061 = vmatmul.mubr.bf16.gmra.mrb[0].mxu0 %v5496
      %v6062 = vpop.f32.mrb[0].mxu0
      %v6063 = vadd.f32 %v5581, %v6062
      %v6064 = vpop.f32.mrb[0].mxu0
      %v6065 = vadd.f32 %v5585, %v6064
      %v6066 = vpop.f32.mrb[0].mxu0
      %v6067 = vadd.f32 %v5581, %v6066
      %v6068 = vpop.f32.mrb[0].mxu0
      %v6069 = vadd.f32 %v5585, %v6068
      %6070 = vmatprep.mubr.bf16.mxu0 %v5501
      %6071 = vmatmul.mubr.bf16.gmra.mrb[0].mxu0 %v5500
      %v6072 = vpop.f32.mrb[0].mxu0
      %v6073 = vadd.f32 %v5581, %v6072
      %v6074 = vpop.f32.mrb[0].mxu0
      %v6075 = vadd.f32 %v5585, %v6074
      %v6076 = vpop.f32.mrb[0].mxu0
      %v6077 = vadd.f32 %v5581, %v6076
      %v6078 = vpop.f32.mrb[0].mxu0
      %v6079 = vadd.f32 %v5585, %v6078
      %6080 = vmatprep.mubr.bf16.mxu0 %v5505
      %6081 = vmatmul.mubr.bf16.gmra.mrb[0].mxu0 %v5504
      %v6082 = vpop.f32.mrb[0].mxu0
      %v6083 = vadd.f32 %v5581, %v6082
      %v6084 = vpop.f32.mrb[0].mxu0
      %v6085 = vadd.f32 %v5585, %v6084
      %v6086 = vpop.f32.mrb[0].mxu0
      %v6087 = vadd.f32 %v5581, %v6086
      %v6088 = vpop.f32.mrb[0].mxu0
      %v6089 = vadd.f32 %v5585, %v6088
      %6090 = vmatprep.mubr.bf16.mxu0 %v5509
      %6091 = vmatmul.mubr.bf16.gmra.mrb[0].mxu0 %v5508
      %v6092 = vpop.f32.mrb[0].mxu0
      %v6093 = vadd.f32 %v5581, %v6092
      %v6094 = vpop.f32.mrb[0].mxu0
      %v6095 = vadd.f32 %v5585, %v6094
      %v6096 = vpop.f32.mrb[0].mxu0
      %v6097 = vadd.f32 %v5581, %v6096
      %v6098 = vpop.f32.mrb[0].mxu0
      %v6099 = vadd.f32 %v5585, %v6098
      %6100 = vdwg.mxu0
      %6101 = vmatprep.subr.bf16.mxu0 %v5813
      %6102 = vmatpush1.bf16.msra.mxu0 %v5812
      %6103 = vmatprep.subr.bf16.mxu0 %v5815
      %6104 = vmatpush1.bf16.msra.mxu0 %v5814
      %6105 = vmatprep.subr.bf16.mxu0 %v5817
      %6106 = vmatpush1.bf16.msra.mxu0 %v5816
      %6107 = vmatprep.subr.bf16.mxu0 %v5819
      %6108 = vmatpush1.bf16.msra.mxu0 %v5818
      %6109 = vmatprep.subr.bf16.mxu0 %v5821
      %6110 = vmatpush1.bf16.msra.mxu0 %v5820
      %6111 = vmatprep.subr.bf16.mxu0 %v5823
      %6112 = vmatpush1.bf16.msra.mxu0 %v5822
      %6113 = vmatprep.subr.bf16.mxu0 %v5825
      %6114 = vmatpush1.bf16.msra.mxu0 %v5824
      %6115 = vmatprep.subr.bf16.mxu0 %v5827
      %6116 = vmatpush1.bf16.msra.mxu0 %v5826
      %6117 = vmatprep.subr.bf16.mxu0 %v5829
      %6118 = vmatpush1.bf16.msra.mxu0 %v5828
      %6119 = vmatprep.subr.bf16.mxu0 %v5831
      %6120 = vmatpush1.bf16.msra.mxu0 %v5830
      %6121 = vmatprep.subr.bf16.mxu0 %v5833
      %6122 = vmatpush1.bf16.msra.mxu0 %v5832
      %6123 = vmatprep.subr.bf16.mxu0 %v5835
      %6124 = vmatpush1.bf16.msra.mxu0 %v5834
      %6125 = vmatprep.subr.bf16.mxu0 %v5837
      %6126 = vmatpush1.bf16.msra.mxu0 %v5836
      %6127 = vmatprep.subr.bf16.mxu0 %v5839
      %6128 = vmatpush1.bf16.msra.mxu0 %v5838
      %6129 = vmatprep.subr.bf16.mxu0 %v5841
      %6130 = vmatpush1.bf16.msra.mxu0 %v5840
      %6131 = vmatprep.subr.bf16.mxu0 %v5843
      %6132 = vmatpush1.bf16.msra.mxu0 %v5842
      %6133 = vmatprep.mubr.bf16.mxu0 %v5451
      %6134 = vmatmul.mubr.bf16.gmra.mrb[0].mxu0 %v5450
      %v6135 = vpop.f32.mrb[0].mxu0
      %v6136 = vadd.f32 %v5943, %v6135
      %v6137 = vpop.f32.mrb[0].mxu0
      %v6138 = vadd.f32 %v5945, %v6137
      %v6139 = vpop.f32.mrb[0].mxu0
      %v6140 = vadd.f32 %v5947, %v6139
      %v6141 = vpop.f32.mrb[0].mxu0
      %v6142 = vadd.f32 %v5949, %v6141
      %6143 = vmatprep.mubr.bf16.mxu0 %v5455
      %6144 = vmatmul.mubr.bf16.gmra.mrb[0].mxu0 %v5454
      %v6145 = vpop.f32.mrb[0].mxu0
      %v6146 = vadd.f32 %v5953, %v6145
      %v6147 = vpop.f32.mrb[0].mxu0
      %v6148 = vadd.f32 %v5955, %v6147
      %v6149 = vpop.f32.mrb[0].mxu0
      %v6150 = vadd.f32 %v5957, %v6149
      %v6151 = vpop.f32.mrb[0].mxu0
      %v6152 = vadd.f32 %v5959, %v6151
      %6153 = vmatprep.mubr.bf16.mxu0 %v5459
      %6154 = vmatmul.mubr.bf16.gmra.mrb[0].mxu0 %v5458
      %v6155 = vpop.f32.mrb[0].mxu0
      %v6156 = vadd.f32 %v5963, %v6155
      %v6157 = vpop.f32.mrb[0].mxu0
      %v6158 = vadd.f32 %v5965, %v6157
      %v6159 = vpop.f32.mrb[0].mxu0
      %v6160 = vadd.f32 %v5967, %v6159
      %v6161 = vpop.f32.mrb[0].mxu0
      %v6162 = vadd.f32 %v5969, %v6161
      %6163 = vmatprep.mubr.bf16.mxu0 %v5463
      %6164 = vmatmul.mubr.bf16.gmra.mrb[0].mxu0 %v5462
      %v6165 = vpop.f32.mrb[0].mxu0
      %v6166 = vadd.f32 %v5973, %v6165
      %v6167 = vpop.f32.mrb[0].mxu0
      %v6168 = vadd.f32 %v5975, %v6167
      %v6169 = vpop.f32.mrb[0].mxu0
      %v6170 = vadd.f32 %v5977, %v6169
      %v6171 = vpop.f32.mrb[0].mxu0
      %v6172 = vadd.f32 %v5979, %v6171
      %6173 = vmatprep.mubr.bf16.mxu0 %v5467
      %6174 = vmatmul.mubr.bf16.gmra.mrb[0].mxu0 %v5466
      %v6175 = vpop.f32.mrb[0].mxu0
      %v6176 = vadd.f32 %v5983, %v6175
      %v6177 = vpop.f32.mrb[0].mxu0
      %v6178 = vadd.f32 %v5985, %v6177
      %v6179 = vpop.f32.mrb[0].mxu0
      %v6180 = vadd.f32 %v5987, %v6179
      %v6181 = vpop.f32.mrb[0].mxu0
      %v6182 = vadd.f32 %v5989, %v6181
      %6183 = vmatprep.mubr.bf16.mxu0 %v5471
      %6184 = vmatmul.mubr.bf16.gmra.mrb[0].mxu0 %v5470
      %v6185 = vpop.f32.mrb[0].mxu0
      %v6186 = vadd.f32 %v5993, %v6185
      %v6187 = vpop.f32.mrb[0].mxu0
      %v6188 = vadd.f32 %v5995, %v6187
      %v6189 = vpop.f32.mrb[0].mxu0
      %v6190 = vadd.f32 %v5997, %v6189
      %v6191 = vpop.f32.mrb[0].mxu0
      %v6192 = vadd.f32 %v5999, %v6191
      %6193 = vmatprep.mubr.bf16.mxu0 %v5475
      %6194 = vmatmul.mubr.bf16.gmra.mrb[0].mxu0 %v5474
      %v6195 = vpop.f32.mrb[0].mxu0
      %v6196 = vadd.f32 %v6003, %v6195
      %v6197 = vpop.f32.mrb[0].mxu0
      %v6198 = vadd.f32 %v6005, %v6197
      %v6199 = vpop.f32.mrb[0].mxu0
      %v6200 = vadd.f32 %v6007, %v6199
      %v6201 = vpop.f32.mrb[0].mxu0
      %v6202 = vadd.f32 %v6009, %v6201
      %6203 = vmatprep.mubr.bf16.mxu0 %v5479
      %6204 = vmatmul.mubr.bf16.gmra.mrb[0].mxu0 %v5478
      %v6205 = vpop.f32.mrb[0].mxu0
      %v6206 = vadd.f32 %v6013, %v6205
      %v6207 = vpop.f32.mrb[0].mxu0
      %v6208 = vadd.f32 %v6015, %v6207
      %v6209 = vpop.f32.mrb[0].mxu0
      %v6210 = vadd.f32 %v6017, %v6209
      %v6211 = vpop.f32.mrb[0].mxu0
      %v6212 = vadd.f32 %v6019, %v6211
      %6213 = vmatprep.mubr.bf16.mxu0 %v5483
      %6214 = vmatmul.mubr.bf16.gmra.mrb[0].mxu0 %v5482
      %v6215 = vpop.f32.mrb[0].mxu0
      %v6216 = vadd.f32 %v6023, %v6215
      %v6217 = vpop.f32.mrb[0].mxu0
      %v6218 = vadd.f32 %v6025, %v6217
      %v6219 = vpop.f32.mrb[0].mxu0
      %v6220 = vadd.f32 %v6027, %v6219
      %v6221 = vpop.f32.mrb[0].mxu0
      %v6222 = vadd.f32 %v6029, %v6221
      %6223 = vmatprep.mubr.bf16.mxu0 %v5487
      %6224 = vmatmul.mubr.bf16.gmra.mrb[0].mxu0 %v5486
      %v6225 = vpop.f32.mrb[0].mxu0
      %v6226 = vadd.f32 %v6033, %v6225
      %v6227 = vpop.f32.mrb[0].mxu0
      %v6228 = vadd.f32 %v6035, %v6227
      %v6229 = vpop.f32.mrb[0].mxu0
      %v6230 = vadd.f32 %v6037, %v6229
      %v6231 = vpop.f32.mrb[0].mxu0
      %v6232 = vadd.f32 %v6039, %v6231
      %6233 = vmatprep.mubr.bf16.mxu0 %v5491
      %6234 = vmatmul.mubr.bf16.gmra.mrb[0].mxu0 %v5490
      %v6235 = vpop.f32.mrb[0].mxu0
      %v6236 = vadd.f32 %v6043, %v6235
      %v6237 = vpop.f32.mrb[0].mxu0
      %v6238 = vadd.f32 %v6045, %v6237
      %v6239 = vpop.f32.mrb[0].mxu0
      %v6240 = vadd.f32 %v6047, %v6239
      %v6241 = vpop.f32.mrb[0].mxu0
      %v6242 = vadd.f32 %v6049, %v6241
      %6243 = vmatprep.mubr.bf16.mxu0 %v5495
      %6244 = vmatmul.mubr.bf16.gmra.mrb[0].mxu0 %v5494
      %v6245 = vpop.f32.mrb[0].mxu0
      %v6246 = vadd.f32 %v6053, %v6245
      %v6247 = vpop.f32.mrb[0].mxu0
      %v6248 = vadd.f32 %v6055, %v6247
      %v6249 = vpop.f32.mrb[0].mxu0
      %v6250 = vadd.f32 %v6057, %v6249
      %v6251 = vpop.f32.mrb[0].mxu0
      %v6252 = vadd.f32 %v6059, %v6251
      %6253 = vmatprep.mubr.bf16.mxu0 %v5499
      %6254 = vmatmul.mubr.bf16.gmra.mrb[0].mxu0 %v5498
      %v6255 = vpop.f32.mrb[0].mxu0
      %v6256 = vadd.f32 %v6063, %v6255
      %v6257 = vpop.f32.mrb[0].mxu0
      %v6258 = vadd.f32 %v6065, %v6257
      %v6259 = vpop.f32.mrb[0].mxu0
      %v6260 = vadd.f32 %v6067, %v6259
      %v6261 = vpop.f32.mrb[0].mxu0
      %v6262 = vadd.f32 %v6069, %v6261
      %6263 = vmatprep.mubr.bf16.mxu0 %v5503
      %6264 = vmatmul.mubr.bf16.gmra.mrb[0].mxu0 %v5502
      %v6265 = vpop.f32.mrb[0].mxu0
      %v6266 = vadd.f32 %v6073, %v6265
      %v6267 = vpop.f32.mrb[0].mxu0
      %v6268 = vadd.f32 %v6075, %v6267
      %v6269 = vpop.f32.mrb[0].mxu0
      %v6270 = vadd.f32 %v6077, %v6269
      %v6271 = vpop.f32.mrb[0].mxu0
      %v6272 = vadd.f32 %v6079, %v6271
      %6273 = vmatprep.mubr.bf16.mxu0 %v5507
      %6274 = vmatmul.mubr.bf16.gmra.mrb[0].mxu0 %v5506
      %v6275 = vpop.f32.mrb[0].mxu0
      %v6276 = vadd.f32 %v6083, %v6275
      %v6277 = vpop.f32.mrb[0].mxu0
      %v6278 = vadd.f32 %v6085, %v6277
      %v6279 = vpop.f32.mrb[0].mxu0
      %v6280 = vadd.f32 %v6087, %v6279
      %v6281 = vpop.f32.mrb[0].mxu0
      %v6282 = vadd.f32 %v6089, %v6281
      %6283 = vmatprep.mubr.bf16.mxu0 %v5511
      %6284 = vmatmul.mubr.bf16.gmra.mrb[0].mxu0 %v5510
      %v6285 = vpop.f32.mrb[0].mxu0
      %v6286 = vadd.f32 %v6093, %v6285
      %v6287 = vpop.f32.mrb[0].mxu0
      %v6288 = vadd.f32 %v6095, %v6287
      %v6289 = vpop.f32.mrb[0].mxu0
      %v6290 = vadd.f32 %v6097, %v6289
      %v6291 = vpop.f32.mrb[0].mxu0
      %v6292 = vadd.f32 %v6099, %v6291
      %6293 = vdwg.mxu0
      %v6294 = vmax.f32 %v6136, 0.0
      %v6295 = vmax.f32 %v6138, 0.0
      %v6296 = vmax.f32 %v6140, 0.0
      %v6297 = vmax.f32 %v6142, 0.0
      %v6298 = vmax.f32 %v6146, 0.0
      %v6299 = vmax.f32 %v6148, 0.0
      %v6300 = vmax.f32 %v6150, 0.0
      %v6301 = vmax.f32 %v6152, 0.0
      %v6302 = vmax.f32 %v6156, 0.0
      %v6303 = vmax.f32 %v6158, 0.0
      %v6304 = vmax.f32 %v6160, 0.0
      %v6305 = vmax.f32 %v6162, 0.0
      %v6306 = vmax.f32 %v6166, 0.0
      %v6307 = vmax.f32 %v6168, 0.0
      %v6308 = vmax.f32 %v6170, 0.0
      %v6309 = vmax.f32 %v6172, 0.0
      %v6310 = vmax.f32 %v6176, 0.0
      %v6311 = vmax.f32 %v6178, 0.0
      %v6312 = vmax.f32 %v6180, 0.0
      %v6313 = vmax.f32 %v6182, 0.0
      %v6314 = vmax.f32 %v6186, 0.0
      %v6315 = vmax.f32 %v6188, 0.0
      %v6316 = vmax.f32 %v6190, 0.0
      %v6317 = vmax.f32 %v6192, 0.0
      %v6318 = vmax.f32 %v6196, 0.0
      %v6319 = vmax.f32 %v6198, 0.0
      %v6320 = vmax.f32 %v6200, 0.0
      %v6321 = vmax.f32 %v6202, 0.0
      %v6322 = vmax.f32 %v6206, 0.0
      %v6323 = vmax.f32 %v6208, 0.0
      %v6324 = vmax.f32 %v6210, 0.0
      %v6325 = vmax.f32 %v6212, 0.0
      %v6326 = vmax.f32 %v6216, 0.0
      %v6327 = vmax.f32 %v6218, 0.0
      %v6328 = vmax.f32 %v6220, 0.0
      %v6329 = vmax.f32 %v6222, 0.0
      %v6330 = vmax.f32 %v6226, 0.0
      %v6331 = vmax.f32 %v6228, 0.0
      %v6332 = vmax.f32 %v6230, 0.0
      %v6333 = vmax.f32 %v6232, 0.0
      %v6334 = vmax.f32 %v6236, 0.0
      %v6335 = vmax.f32 %v6238, 0.0
      %v6336 = vmax.f32 %v6240, 0.0
      %v6337 = vmax.f32 %v6242, 0.0
      %v6338 = vmax.f32 %v6246, 0.0
      %v6339 = vmax.f32 %v6248, 0.0
      %v6340 = vmax.f32 %v6250, 0.0
      %v6341 = vmax.f32 %v6252, 0.0
      %v6342 = vmax.f32 %v6256, 0.0
      %v6343 = vmax.f32 %v6258, 0.0
      %v6344 = vmax.f32 %v6260, 0.0
      %v6345 = vmax.f32 %v6262, 0.0
      %v6346 = vmax.f32 %v6266, 0.0
      %v6347 = vmax.f32 %v6268, 0.0
      %v6348 = vmax.f32 %v6270, 0.0
      %v6349 = vmax.f32 %v6272, 0.0
      %v6350 = vmax.f32 %v6276, 0.0
      %v6351 = vmax.f32 %v6278, 0.0
      %v6352 = vmax.f32 %v6280, 0.0
      %v6353 = vmax.f32 %v6282, 0.0
      %v6354 = vmax.f32 %v6286, 0.0
      %v6355 = vmax.f32 %v6288, 0.0
      %v6356 = vmax.f32 %v6290, 0.0
      %v6357 = vmax.f32 %v6292, 0.0
      %v6358 = vld [vmem:[%s8] sm:$0x3]
      %v6360 = vlaneseq
      %v6361 = vshrl.u32 %v6360, 7
      %v6362 = vsub.s32 0, %v6361
      %v6363 = vrot.slane %v6358, %v6362
      %v6364 = vlaneseq
      %v6365 = vshrl.u32 %v6364, 7
      %v6366 = vsub.s32 1, %v6365
      %v6367 = vrot.slane %v6358, %v6366
      %v6370 = vmul.f32 %v6294, %v6363
      %v6371 = vmul.f32 %v6295, %v6367
      %v6372 = vmul.f32 %v6296, %v6363
      %v6373 = vmul.f32 %v6297, %v6367
      %v6374 = vmul.f32 %v6298, %v6363
      %v6375 = vmul.f32 %v6299, %v6367
      %v6376 = vmul.f32 %v6300, %v6363
      %v6377 = vmul.f32 %v6301, %v6367
      %v6378 = vmul.f32 %v6302, %v6363
      %v6379 = vmul.f32 %v6303, %v6367
      %v6380 = vmul.f32 %v6304, %v6363
      %v6381 = vmul.f32 %v6305, %v6367
      %v6382 = vmul.f32 %v6306, %v6363
      %v6383 = vmul.f32 %v6307, %v6367
      %v6384 = vmul.f32 %v6308, %v6363
      %v6385 = vmul.f32 %v6309, %v6367
      %v6386 = vmul.f32 %v6310, %v6363
      %v6387 = vmul.f32 %v6311, %v6367
      %v6388 = vmul.f32 %v6312, %v6363
      %v6389 = vmul.f32 %v6313, %v6367
      %v6390 = vmul.f32 %v6314, %v6363
      %v6391 = vmul.f32 %v6315, %v6367
      %v6392 = vmul.f32 %v6316, %v6363
      %v6393 = vmul.f32 %v6317, %v6367
      %v6394 = vmul.f32 %v6318, %v6363
      %v6395 = vmul.f32 %v6319, %v6367
      %v6396 = vmul.f32 %v6320, %v6363
      %v6397 = vmul.f32 %v6321, %v6367
      %v6398 = vmul.f32 %v6322, %v6363
      %v6399 = vmul.f32 %v6323, %v6367
      %v6400 = vmul.f32 %v6324, %v6363
      %v6401 = vmul.f32 %v6325, %v6367
      %v6402 = vmul.f32 %v6326, %v6363
      %v6403 = vmul.f32 %v6327, %v6367
      %v6404 = vmul.f32 %v6328, %v6363
      %v6405 = vmul.f32 %v6329, %v6367
      %v6406 = vmul.f32 %v6330, %v6363
      %v6407 = vmul.f32 %v6331, %v6367
      %v6408 = vmul.f32 %v6332, %v6363
      %v6409 = vmul.f32 %v6333, %v6367
      %v6410 = vmul.f32 %v6334, %v6363
      %v6411 = vmul.f32 %v6335, %v6367
      %v6412 = vmul.f32 %v6336, %v6363
      %v6413 = vmul.f32 %v6337, %v6367
      %v6414 = vmul.f32 %v6338, %v6363
      %v6415 = vmul.f32 %v6339, %v6367
      %v6416 = vmul.f32 %v6340, %v6363
      %v6417 = vmul.f32 %v6341, %v6367
      %v6418 = vmul.f32 %v6342, %v6363
      %v6419 = vmul.f32 %v6343, %v6367
      %v6420 = vmul.f32 %v6344, %v6363
      %v6421 = vmul.f32 %v6345, %v6367
      %v6422 = vmul.f32 %v6346, %v6363
      %v6423 = vmul.f32 %v6347, %v6367
      %v6424 = vmul.f32 %v6348, %v6363
      %v6425 = vmul.f32 %v6349, %v6367
      %v6426 = vmul.f32 %v6350, %v6363
      %v6427 = vmul.f32 %v6351, %v6367
      %v6428 = vmul.f32 %v6352, %v6363
      %v6429 = vmul.f32 %v6353, %v6367
      %v6430 = vmul.f32 %v6354, %v6363
      %v6431 = vmul.f32 %v6355, %v6367
      %v6432 = vmul.f32 %v6356, %v6363
      %v6433 = vmul.f32 %v6357, %v6367
      %v6434 = vadd.f32 %v6370, %v6371
      %6435 = vadd.xlane.f32.xlu0 %v6434
      %v6436 = vpop.xlane.xlu0 %6435
      %v6437 = vadd.f32 %v6372, %v6373
      %6438 = vadd.xlane.f32.xlu0 %v6437
      %v6439 = vpop.xlane.xlu0 %6438
      %v6440 = vadd.f32 %v6374, %v6375
      %6441 = vadd.xlane.f32.xlu0 %v6440
      %v6442 = vpop.xlane.xlu0 %6441
      %v6443 = vadd.f32 %v6376, %v6377
      %6444 = vadd.xlane.f32.xlu0 %v6443
      %v6445 = vpop.xlane.xlu0 %6444
      %v6446 = vadd.f32 %v6378, %v6379
      %6447 = vadd.xlane.f32.xlu0 %v6446
      %v6448 = vpop.xlane.xlu0 %6447
      %v6449 = vadd.f32 %v6380, %v6381
      %6450 = vadd.xlane.f32.xlu0 %v6449
      %v6451 = vpop.xlane.xlu0 %6450
      %v6452 = vadd.f32 %v6382, %v6383
      %6453 = vadd.xlane.f32.xlu0 %v6452
      %v6454 = vpop.xlane.xlu0 %6453
      %v6455 = vadd.f32 %v6384, %v6385
      %6456 = vadd.xlane.f32.xlu0 %v6455
      %v6457 = vpop.xlane.xlu0 %6456
      %v6458 = vadd.f32 %v6386, %v6387
      %6459 = vadd.xlane.f32.xlu0 %v6458
      %v6460 = vpop.xlane.xlu0 %6459
      %v6461 = vadd.f32 %v6388, %v6389
      %6462 = vadd.xlane.f32.xlu0 %v6461
      %v6463 = vpop.xlane.xlu0 %6462
      %v6464 = vadd.f32 %v6390, %v6391
      %6465 = vadd.xlane.f32.xlu0 %v6464
      %v6466 = vpop.xlane.xlu0 %6465
      %v6467 = vadd.f32 %v6392, %v6393
      %6468 = vadd.xlane.f32.xlu0 %v6467
      %v6469 = vpop.xlane.xlu0 %6468
      %v6470 = vadd.f32 %v6394, %v6395
      %6471 = vadd.xlane.f32.xlu0 %v6470
      %v6472 = vpop.xlane.xlu0 %6471
      %v6473 = vadd.f32 %v6396, %v6397
      %6474 = vadd.xlane.f32.xlu0 %v6473
      %v6475 = vpop.xlane.xlu0 %6474
      %v6476 = vadd.f32 %v6398, %v6399
      %6477 = vadd.xlane.f32.xlu0 %v6476
      %v6478 = vpop.xlane.xlu0 %6477
      %v6479 = vadd.f32 %v6400, %v6401
      %6480 = vadd.xlane.f32.xlu0 %v6479
      %v6481 = vpop.xlane.xlu0 %6480
      %v6482 = vadd.f32 %v6402, %v6403
      %6483 = vadd.xlane.f32.xlu0 %v6482
      %v6484 = vpop.xlane.xlu0 %6483
      %v6485 = vadd.f32 %v6404, %v6405
      %6486 = vadd.xlane.f32.xlu0 %v6485
      %v6487 = vpop.xlane.xlu0 %6486
      %v6488 = vadd.f32 %v6406, %v6407
      %6489 = vadd.xlane.f32.xlu0 %v6488
      %v6490 = vpop.xlane.xlu0 %6489
      %v6491 = vadd.f32 %v6408, %v6409
      %6492 = vadd.xlane.f32.xlu0 %v6491
      %v6493 = vpop.xlane.xlu0 %6492
      %v6494 = vadd.f32 %v6410, %v6411
      %6495 = vadd.xlane.f32.xlu0 %v6494
      %v6496 = vpop.xlane.xlu0 %6495
      %v6497 = vadd.f32 %v6412, %v6413
      %6498 = vadd.xlane.f32.xlu0 %v6497
      %v6499 = vpop.xlane.xlu0 %6498
      %v6500 = vadd.f32 %v6414, %v6415
      %6501 = vadd.xlane.f32.xlu0 %v6500
      %v6502 = vpop.xlane.xlu0 %6501
      %v6503 = vadd.f32 %v6416, %v6417
      %6504 = vadd.xlane.f32.xlu0 %v6503
      %v6505 = vpop.xlane.xlu0 %6504
      %v6506 = vadd.f32 %v6418, %v6419
      %6507 = vadd.xlane.f32.xlu0 %v6506
      %v6508 = vpop.xlane.xlu0 %6507
      %v6509 = vadd.f32 %v6420, %v6421
      %6510 = vadd.xlane.f32.xlu0 %v6509
      %v6511 = vpop.xlane.xlu0 %6510
      %v6512 = vadd.f32 %v6422, %v6423
      %6513 = vadd.xlane.f32.xlu0 %v6512
      %v6514 = vpop.xlane.xlu0 %6513
      %v6515 = vadd.f32 %v6424, %v6425
      %6516 = vadd.xlane.f32.xlu0 %v6515
      %v6517 = vpop.xlane.xlu0 %6516
      %v6518 = vadd.f32 %v6426, %v6427
      %6519 = vadd.xlane.f32.xlu0 %v6518
      %v6520 = vpop.xlane.xlu0 %6519
      %v6521 = vadd.f32 %v6428, %v6429
      %6522 = vadd.xlane.f32.xlu0 %v6521
      %v6523 = vpop.xlane.xlu0 %6522
      %v6524 = vadd.f32 %v6430, %v6431
      %6525 = vadd.xlane.f32.xlu0 %v6524
      %v6526 = vpop.xlane.xlu0 %6525
      %v6527 = vadd.f32 %v6432, %v6433
      %6528 = vadd.xlane.f32.xlu0 %v6527
      %v6529 = vpop.xlane.xlu0 %6528
      %v6530 = vld [vmem:[%s353] sm:$0xff]
      %v6531 = vld [vmem:[%s353 + $0x8] sm:$0xff]
      %v6532 = vld [vmem:[%s353 + $0x10] sm:$0xff]
      %v6533 = vld [vmem:[%s353 + $0x18] sm:$0xff]
      %v6534 = vld [vmem:[%s353 + $0x20] sm:$0xff]
      %v6535 = vld [vmem:[%s353 + $0x28] sm:$0xff]
      %v6536 = vld [vmem:[%s353 + $0x30] sm:$0xff]
      %v6537 = vld [vmem:[%s353 + $0x38] sm:$0xff]
      %v6538 = vld [vmem:[%s353 + $0x40] sm:$0xff]
      %v6539 = vld [vmem:[%s353 + $0x48] sm:$0xff]
      %v6540 = vld [vmem:[%s353 + $0x50] sm:$0xff]
      %v6541 = vld [vmem:[%s353 + $0x58] sm:$0xff]
      %v6542 = vld [vmem:[%s353 + $0x60] sm:$0xff]
      %v6543 = vld [vmem:[%s353 + $0x68] sm:$0xff]
      %v6544 = vld [vmem:[%s353 + $0x70] sm:$0xff]
      %v6545 = vld [vmem:[%s353 + $0x78] sm:$0xff]
      %v6546 = vld [vmem:[%s353 + $0x80] sm:$0xff]
      %v6547 = vld [vmem:[%s353 + $0x88] sm:$0xff]
      %v6548 = vld [vmem:[%s353 + $0x90] sm:$0xff]
      %v6549 = vld [vmem:[%s353 + $0x98] sm:$0xff]
      %v6550 = vld [vmem:[%s353 + $0xa0] sm:$0xff]
      %v6551 = vld [vmem:[%s353 + $0xa8] sm:$0xff]
      %v6552 = vld [vmem:[%s353 + $0xb0] sm:$0xff]
      %v6553 = vld [vmem:[%s353 + $0xb8] sm:$0xff]
      %v6554 = vld [vmem:[%s353 + $0xc0] sm:$0xff]
      %v6555 = vld [vmem:[%s353 + $0xc8] sm:$0xff]
      %v6556 = vld [vmem:[%s353 + $0xd0] sm:$0xff]
      %v6557 = vld [vmem:[%s353 + $0xd8] sm:$0xff]
      %v6558 = vld [vmem:[%s353 + $0xe0] sm:$0xff]
      %v6559 = vld [vmem:[%s353 + $0xe8] sm:$0xff]
      %v6560 = vld [vmem:[%s353 + $0xf0] sm:$0xff]
      %v6561 = vld [vmem:[%s353 + $0xf8] sm:$0xff]
      %v6562 = vadd.f32 %v6436, %v6530
      %v6563 = vadd.f32 %v6439, %v6531
      %v6564 = vadd.f32 %v6442, %v6532
      %v6565 = vadd.f32 %v6445, %v6533
      %v6566 = vadd.f32 %v6448, %v6534
      %v6567 = vadd.f32 %v6451, %v6535
      %v6568 = vadd.f32 %v6454, %v6536
      %v6569 = vadd.f32 %v6457, %v6537
      %v6570 = vadd.f32 %v6460, %v6538
      %v6571 = vadd.f32 %v6463, %v6539
      %v6572 = vadd.f32 %v6466, %v6540
      %v6573 = vadd.f32 %v6469, %v6541
      %v6574 = vadd.f32 %v6472, %v6542
      %v6575 = vadd.f32 %v6475, %v6543
      %v6576 = vadd.f32 %v6478, %v6544
      %v6577 = vadd.f32 %v6481, %v6545
      %v6578 = vadd.f32 %v6484, %v6546
      %v6579 = vadd.f32 %v6487, %v6547
      %v6580 = vadd.f32 %v6490, %v6548
      %v6581 = vadd.f32 %v6493, %v6549
      %v6582 = vadd.f32 %v6496, %v6550
      %v6583 = vadd.f32 %v6499, %v6551
      %v6584 = vadd.f32 %v6502, %v6552
      %v6585 = vadd.f32 %v6505, %v6553
      %v6586 = vadd.f32 %v6508, %v6554
      %v6587 = vadd.f32 %v6511, %v6555
      %v6588 = vadd.f32 %v6514, %v6556
      %v6589 = vadd.f32 %v6517, %v6557
      %v6590 = vadd.f32 %v6520, %v6558
      %v6591 = vadd.f32 %v6523, %v6559
      %v6592 = vadd.f32 %v6526, %v6560
      %v6593 = vadd.f32 %v6529, %v6561
      %v6594 = vxor.u32 %v6562, 2147483648
      %v6595 = vxor.u32 %v6563, 2147483648
      %v6596 = vxor.u32 %v6564, 2147483648
      %v6597 = vxor.u32 %v6565, 2147483648
      %v6598 = vxor.u32 %v6566, 2147483648
      %v6599 = vxor.u32 %v6567, 2147483648
      %v6600 = vxor.u32 %v6568, 2147483648
      %v6601 = vxor.u32 %v6569, 2147483648
      %v6602 = vxor.u32 %v6570, 2147483648
      %v6603 = vxor.u32 %v6571, 2147483648
      %v6604 = vxor.u32 %v6572, 2147483648
      %v6605 = vxor.u32 %v6573, 2147483648
      %v6606 = vxor.u32 %v6574, 2147483648
      %v6607 = vxor.u32 %v6575, 2147483648
      %v6608 = vxor.u32 %v6576, 2147483648
      %v6609 = vxor.u32 %v6577, 2147483648
      %v6610 = vxor.u32 %v6578, 2147483648
      %v6611 = vxor.u32 %v6579, 2147483648
      %v6612 = vxor.u32 %v6580, 2147483648
      %v6613 = vxor.u32 %v6581, 2147483648
      %v6614 = vxor.u32 %v6582, 2147483648
      %v6615 = vxor.u32 %v6583, 2147483648
      %v6616 = vxor.u32 %v6584, 2147483648
      %v6617 = vxor.u32 %v6585, 2147483648
      %v6618 = vxor.u32 %v6586, 2147483648
      %v6619 = vxor.u32 %v6587, 2147483648
      %v6620 = vxor.u32 %v6588, 2147483648
      %v6621 = vxor.u32 %v6589, 2147483648
      %v6622 = vxor.u32 %v6590, 2147483648
      %v6623 = vxor.u32 %v6591, 2147483648
      %v6624 = vxor.u32 %v6592, 2147483648
      %v6625 = vxor.u32 %v6593, 2147483648
      %v6626 = vmul.f32 %v6594, 1.442695
      %v6627 = vpow.pop %v6626
      %v6628 = vmul.f32 %v6595, 1.442695
      %v6629 = vpow.pop %v6628
      %v6630 = vmul.f32 %v6596, 1.442695
      %v6631 = vpow.pop %v6630
      %v6632 = vmul.f32 %v6597, 1.442695
      %v6633 = vpow.pop %v6632
      %v6634 = vmul.f32 %v6598, 1.442695
      %v6635 = vpow.pop %v6634
      %v6636 = vmul.f32 %v6599, 1.442695
      %v6637 = vpow.pop %v6636
      %v6638 = vmul.f32 %v6600, 1.442695
      %v6639 = vpow.pop %v6638
      %v6640 = vmul.f32 %v6601, 1.442695
      %v6641 = vpow.pop %v6640
      %v6642 = vmul.f32 %v6602, 1.442695
      %v6643 = vpow.pop %v6642
      %v6644 = vmul.f32 %v6603, 1.442695
      %v6645 = vpow.pop %v6644
      %v6646 = vmul.f32 %v6604, 1.442695
      %v6647 = vpow.pop %v6646
      %v6648 = vmul.f32 %v6605, 1.442695
      %v6649 = vpow.pop %v6648
      %v6650 = vmul.f32 %v6606, 1.442695
      %v6651 = vpow.pop %v6650
      %v6652 = vmul.f32 %v6607, 1.442695
      %v6653 = vpow.pop %v6652
      %v6654 = vmul.f32 %v6608, 1.442695
      %v6655 = vpow.pop %v6654
      %v6656 = vmul.f32 %v6609, 1.442695
      %v6657 = vpow.pop %v6656
      %v6658 = vmul.f32 %v6610, 1.442695
      %v6659 = vpow.pop %v6658
      %v6660 = vmul.f32 %v6611, 1.442695
      %v6661 = vpow.pop %v6660
      %v6662 = vmul.f32 %v6612, 1.442695
      %v6663 = vpow.pop %v6662
      %v6664 = vmul.f32 %v6613, 1.442695
      %v6665 = vpow.pop %v6664
      %v6666 = vmul.f32 %v6614, 1.442695
      %v6667 = vpow.pop %v6666
      %v6668 = vmul.f32 %v6615, 1.442695
      %v6669 = vpow.pop %v6668
      %v6670 = vmul.f32 %v6616, 1.442695
      %v6671 = vpow.pop %v6670
      %v6672 = vmul.f32 %v6617, 1.442695
      %v6673 = vpow.pop %v6672
      %v6674 = vmul.f32 %v6618, 1.442695
      %v6675 = vpow.pop %v6674
      %v6676 = vmul.f32 %v6619, 1.442695
      %v6677 = vpow.pop %v6676
      %v6678 = vmul.f32 %v6620, 1.442695
      %v6679 = vpow.pop %v6678
      %v6680 = vmul.f32 %v6621, 1.442695
      %v6681 = vpow.pop %v6680
      %v6682 = vmul.f32 %v6622, 1.442695
      %v6683 = vpow.pop %v6682
      %v6684 = vmul.f32 %v6623, 1.442695
      %v6685 = vpow.pop %v6684
      %v6686 = vmul.f32 %v6624, 1.442695
      %v6687 = vpow.pop %v6686
      %v6688 = vmul.f32 %v6625, 1.442695
      %v6689 = vpow.pop %v6688
      %v6690 = vadd.f32 %v6627, 1.0
      %v6691 = vadd.f32 %v6629, 1.0
      %v6692 = vadd.f32 %v6631, 1.0
      %v6693 = vadd.f32 %v6633, 1.0
      %v6694 = vadd.f32 %v6635, 1.0
      %v6695 = vadd.f32 %v6637, 1.0
      %v6696 = vadd.f32 %v6639, 1.0
      %v6697 = vadd.f32 %v6641, 1.0
      %v6698 = vadd.f32 %v6643, 1.0
      %v6699 = vadd.f32 %v6645, 1.0
      %v6700 = vadd.f32 %v6647, 1.0
      %v6701 = vadd.f32 %v6649, 1.0
      %v6702 = vadd.f32 %v6651, 1.0
      %v6703 = vadd.f32 %v6653, 1.0
      %v6704 = vadd.f32 %v6655, 1.0
      %v6705 = vadd.f32 %v6657, 1.0
      %v6706 = vadd.f32 %v6659, 1.0
      %v6707 = vadd.f32 %v6661, 1.0
      %v6708 = vadd.f32 %v6663, 1.0
      %v6709 = vadd.f32 %v6665, 1.0
      %v6710 = vadd.f32 %v6667, 1.0
      %v6711 = vadd.f32 %v6669, 1.0
      %v6712 = vadd.f32 %v6671, 1.0
      %v6713 = vadd.f32 %v6673, 1.0
      %v6714 = vadd.f32 %v6675, 1.0
      %v6715 = vadd.f32 %v6677, 1.0
      %v6716 = vadd.f32 %v6679, 1.0
      %v6717 = vadd.f32 %v6681, 1.0
      %v6718 = vadd.f32 %v6683, 1.0
      %v6719 = vadd.f32 %v6685, 1.0
      %v6720 = vadd.f32 %v6687, 1.0
      %v6721 = vadd.f32 %v6689, 1.0
      %v6722 = vrcp.pop %v6690
      %v6723 = vmul.f32 1.0, %v6722
      %v6724 = vrcp.pop %v6691
      %v6725 = vmul.f32 1.0, %v6724
      %v6726 = vrcp.pop %v6692
      %v6727 = vmul.f32 1.0, %v6726
      %v6728 = vrcp.pop %v6693
      %v6729 = vmul.f32 1.0, %v6728
      %v6730 = vrcp.pop %v6694
      %v6731 = vmul.f32 1.0, %v6730
      %v6732 = vrcp.pop %v6695
      %v6733 = vmul.f32 1.0, %v6732
      %v6734 = vrcp.pop %v6696
      %v6735 = vmul.f32 1.0, %v6734
      %v6736 = vrcp.pop %v6697
      %v6737 = vmul.f32 1.0, %v6736
      %v6738 = vrcp.pop %v6698
      %v6739 = vmul.f32 1.0, %v6738
      %v6740 = vrcp.pop %v6699
      %v6741 = vmul.f32 1.0, %v6740
      %v6742 = vrcp.pop %v6700
      %v6743 = vmul.f32 1.0, %v6742
      %v6744 = vrcp.pop %v6701
      %v6745 = vmul.f32 1.0, %v6744
      %v6746 = vrcp.pop %v6702
      %v6747 = vmul.f32 1.0, %v6746
      %v6748 = vrcp.pop %v6703
      %v6749 = vmul.f32 1.0, %v6748
      %v6750 = vrcp.pop %v6704
      %v6751 = vmul.f32 1.0, %v6750
      %v6752 = vrcp.pop %v6705
      %v6753 = vmul.f32 1.0, %v6752
      %v6754 = vrcp.pop %v6706
      %v6755 = vmul.f32 1.0, %v6754
      %v6756 = vrcp.pop %v6707
      %v6757 = vmul.f32 1.0, %v6756
      %v6758 = vrcp.pop %v6708
      %v6759 = vmul.f32 1.0, %v6758
      %v6760 = vrcp.pop %v6709
      %v6761 = vmul.f32 1.0, %v6760
      %v6762 = vrcp.pop %v6710
      %v6763 = vmul.f32 1.0, %v6762
      %v6764 = vrcp.pop %v6711
      %v6765 = vmul.f32 1.0, %v6764
      %v6766 = vrcp.pop %v6712
      %v6767 = vmul.f32 1.0, %v6766
      %v6768 = vrcp.pop %v6713
      %v6769 = vmul.f32 1.0, %v6768
      %v6770 = vrcp.pop %v6714
      %v6771 = vmul.f32 1.0, %v6770
      %v6772 = vrcp.pop %v6715
      %v6773 = vmul.f32 1.0, %v6772
      %v6774 = vrcp.pop %v6716
      %v6775 = vmul.f32 1.0, %v6774
      %v6776 = vrcp.pop %v6717
      %v6777 = vmul.f32 1.0, %v6776
      %v6778 = vrcp.pop %v6718
      %v6779 = vmul.f32 1.0, %v6778
      %v6780 = vrcp.pop %v6719
      %v6781 = vmul.f32 1.0, %v6780
      %v6782 = vrcp.pop %v6720
      %v6783 = vmul.f32 1.0, %v6782
      %v6784 = vrcp.pop %v6721
      %v6785 = vmul.f32 1.0, %v6784
      %vm6786 = vcmask 7168
      %6787 = vst.msk [vmem:[%s359] sm:$0xff] %vm6786, %v6723
      %6788 = vst.msk [vmem:[%s359 + $0x8] sm:$0xff] %vm6786, %v6725
      %6789 = vst.msk [vmem:[%s359 + $0x10] sm:$0xff] %vm6786, %v6727
      %6790 = vst.msk [vmem:[%s359 + $0x18] sm:$0xff] %vm6786, %v6729
      %6791 = vst.msk [vmem:[%s359 + $0x20] sm:$0xff] %vm6786, %v6731
      %6792 = vst.msk [vmem:[%s359 + $0x28] sm:$0xff] %vm6786, %v6733
      %6793 = vst.msk [vmem:[%s359 + $0x30] sm:$0xff] %vm6786, %v6735
      %6794 = vst.msk [vmem:[%s359 + $0x38] sm:$0xff] %vm6786, %v6737
      %6795 = vst.msk [vmem:[%s359 + $0x40] sm:$0xff] %vm6786, %v6739
      %6796 = vst.msk [vmem:[%s359 + $0x48] sm:$0xff] %vm6786, %v6741
      %6797 = vst.msk [vmem:[%s359 + $0x50] sm:$0xff] %vm6786, %v6743
      %6798 = vst.msk [vmem:[%s359 + $0x58] sm:$0xff] %vm6786, %v6745
      %6799 = vst.msk [vmem:[%s359 + $0x60] sm:$0xff] %vm6786, %v6747
      %6800 = vst.msk [vmem:[%s359 + $0x68] sm:$0xff] %vm6786, %v6749
      %6801 = vst.msk [vmem:[%s359 + $0x70] sm:$0xff] %vm6786, %v6751
      %6802 = vst.msk [vmem:[%s359 + $0x78] sm:$0xff] %vm6786, %v6753
      %6803 = vst.msk [vmem:[%s359 + $0x80] sm:$0xff] %vm6786, %v6755
      %6804 = vst.msk [vmem:[%s359 + $0x88] sm:$0xff] %vm6786, %v6757
      %6805 = vst.msk [vmem:[%s359 + $0x90] sm:$0xff] %vm6786, %v6759
      %6806 = vst.msk [vmem:[%s359 + $0x98] sm:$0xff] %vm6786, %v6761
      %6807 = vst.msk [vmem:[%s359 + $0xa0] sm:$0xff] %vm6786, %v6763
      %6808 = vst.msk [vmem:[%s359 + $0xa8] sm:$0xff] %vm6786, %v6765
      %6809 = vst.msk [vmem:[%s359 + $0xb0] sm:$0xff] %vm6786, %v6767
      %6810 = vst.msk [vmem:[%s359 + $0xb8] sm:$0xff] %vm6786, %v6769
      %6811 = vst.msk [vmem:[%s359 + $0xc0] sm:$0xff] %vm6786, %v6771
      %6812 = vst.msk [vmem:[%s359 + $0xc8] sm:$0xff] %vm6786, %v6773
      %6813 = vst.msk [vmem:[%s359 + $0xd0] sm:$0xff] %vm6786, %v6775
      %6814 = vst.msk [vmem:[%s359 + $0xd8] sm:$0xff] %vm6786, %v6777
      %6815 = vst.msk [vmem:[%s359 + $0xe0] sm:$0xff] %vm6786, %v6779
      %6816 = vst.msk [vmem:[%s359 + $0xe8] sm:$0xff] %vm6786, %v6781
      %6817 = vst.msk [vmem:[%s359 + $0xf0] sm:$0xff] %vm6786, %v6783
      %6818 = vst.msk [vmem:[%s359 + $0xf8] sm:$0xff] %vm6786, %v6785
      %s6819 = smul.u32 32, %s20
      %p6820 = scmp.lt.s32.totalorder %s6819, 63
      %s6821 = scalar_select %p6820, %s6819, 63
      %s6822 = smul.addr %s6821, 8
      %s6823 = scalar_lea.vmem %s9, %s6822
      // Predicated region
      $region57: #{wide_deep_forward.1} parent=55 // pred_check
        %p6824 = pneg %p237
      $region58: #{wide_deep_forward.1} parent=55 // pred_check_branch
        %6826 = sbr.rel (%p6824) target = $region60
      $region59: #{wide_deep_forward.1} parent=55 // pred_region
        %s6827 = smul.u32 32, %s20
      $region60: #{wide_deep_forward.1} parent=55 // pred_fallthru
        _
    $region56: #{wide_deep_forward.1} parent=5 // pred_fallthru
      _
    %p6828 = scmp.le.s32.totalorder 2, %s15
    // Predicated region
    $region61: #{wide_deep_forward.1} parent=5 // pred_check
      %p6829 = pneg %p6828
    $region62: #{wide_deep_forward.1} parent=5 // pred_check_branch
      %6831 = sbr.rel (%p6829) target = $region64
    $region63: #{wide_deep_forward.1} parent=5 // pred_region
      %s6832 = ssub.s32 %s15, 2
      // Predicated region
      $region65: #{wide_deep_forward.1} parent=63 // pred_check
        %p6833 = pneg %p243
      $region66: #{wide_deep_forward.1} parent=63 // pred_check_branch
        %6835 = sbr.rel (%p6833) target = $region68
      $region67: #{wide_deep_forward.1} parent=63 // pred_region
        %s6836 = smul.u32 32, %s21
        %p6837 = scmp.lt.s32.totalorder %s6836, 63
        %s6838 = scalar_select %p6837, %s6836, 63
        %s6839 = smul.addr %s6838, 8
        %s6840 = scalar_lea.vmem %s9, %s6839
      $region68: #{wide_deep_forward.1} parent=63 // pred_fallthru
        _
    $region64: #{wide_deep_forward.1} parent=5 // pred_fallthru
      _
  $region6: #{wide_deep_forward.1} parent=0 // loop_footer
    %s19 = sadd.s32 1, %s15
  $region7: #{wide_deep_forward.1} parent=0 // loop_footer_branch
    %14 = sbr.rel target = $region3
  $region8: #{wide_deep_forward.1} parent=0 // loop_exit
    _

</llo_original>
